<compile_context>
chip_gen: v7x
topology: tpu7x:2x2x1
jax: 0.10.0
libtpu: 0.0.40
codegen_flags: <defaults>
</compile_context>

<pallas_src>
import numpy as np
import jax
import jax.numpy as jnp
from jax.experimental import pallas as pl
from jax.experimental.pallas import tpu as pltpu


VMEM_LIMIT_BYTES = 32 * 1024 * 1024     # safe on v5e/v6e/v7x, leaves headroom
_ACC_BYTES_TARGET = 2 * 1024 * 1024     # target size of the conv f32 accumulator tile


def _round_up(x, m):
    return ((x + m - 1) // m) * m


# ----------------------------------------------------------------------------
# Weight preparation (glue, plain JAX): matches normalize() + gain scaling.
# norm = eps + ||w_o||_2 * sqrt(1 / fan_in);  w = w / norm * (gain / sqrt(fan_in))
# ----------------------------------------------------------------------------
def prep_weight(weight, gain=1.0, eps=1e-4):
    # TODO(synk): the training-time in-place `self.weight.copy_(normalize(w))`
    # is a parameter-update side effect with no impact on this forward's
    # output, so it is omitted.
    w = weight.astype(jnp.float32)
    reduce_dims = tuple(range(1, w.ndim))
    fan_in = int(np.prod(w.shape[1:]))
    norm = jnp.sqrt(jnp.sum(w * w, axis=reduce_dims, keepdims=True))
    norm = eps + norm * np.sqrt(1.0 / fan_in)
    w = w / norm
    w = w * (gain / np.sqrt(fan_in))
    return w


# ----------------------------------------------------------------------------
# Pallas kernels (hot path)
# ----------------------------------------------------------------------------
def _linear_kernel(x_ref, w_ref, o_ref, acc_ref):
    # x_ref: (tm, tk), w_ref: (tn, tk), o_ref: (tm, tn), acc_ref: (tm, tn) f32
    @pl.when(pl.program_id(2) == 0)
    def _():
        acc_ref[...] = jnp.zeros_like(acc_ref)

    acc_ref[...] += jax.lax.dot_general(
        x_ref[...], w_ref[...],
        dimension_numbers=(((1,), (1,)), ((), ())),   # x_tile @ w_tile.T
        preferred_element_type=jnp.float32)

    @pl.when(pl.program_id(2) == pl.num_programs(2) - 1)
    def _():
        o_ref[...] = acc_ref[...].astype(o_ref.dtype)


def _conv2d_kernel(x_ref, w_ref, o_ref, acc_ref):
    # x_ref  : (1, Hp, Wp, Cin)   full padded NHWC image for batch n (resident)
    # w_ref  : (KH, KW, Cin, tCout)
    # o_ref  : (1, tHo, Wo, tCout)
    # acc_ref: (tHo * Wo, tCout) f32 scratch
    tHo, Wo, tCout = o_ref.shape[1], o_ref.shape[2], o_ref.shape[3]
    KH, KW, Cin, _ = w_ref.shape

    row0 = pl.multiple_of(pl.program_id(1) * tHo, tHo)
    acc_ref[...] = jnp.zeros_like(acc_ref)
    for kh in range(KH):            # static loops: unrolled at trace time
        for kw in range(KW):
            xs = x_ref[0, pl.ds(row0 + kh, tHo), pl.ds(kw, Wo), :]
            acc_ref[...] += jnp.dot(
                xs.reshape(tHo * Wo, Cin), w_ref[kh, kw],
                preferred_element_type=jnp.float32)
            # TODO(synk): for small-Cin layers, fold the KH*KW taps into the
            # contraction (im2col-style weight layout) to raise MXU K-utilization.
    o_ref[0] = acc_ref[...].reshape(tHo, Wo, tCout).astype(o_ref.dtype)


# ----------------------------------------------------------------------------
# Wrappers
# ----------------------------------------------------------------------------
def _pallas_linear(x, w):
    # x: (..., K), w: (O, K)  ->  x @ w.T
    lead = x.shape[:-1]
    M = int(np.prod(lead)) if lead else 1
    K = x.shape[-1]
    O = w.shape[0]

    tm = min(256, _round_up(M, 8))
    tn = min(256, _round_up(O, 128))
    tk = min(512, _round_up(K, 128))
    Mp, Op, Kp = _round_up(M, tm), _round_up(O, tn), _round_up(K, tk)

    x2 = x.reshape(M, K)
    if (Mp, Kp) != (M, K):
        x2 = jnp.pad(x2, ((0, Mp - M), (0, Kp - K)))      # zero K-pad is exact
    wp = w
    if (Op, Kp) != (O, K):
        wp = jnp.pad(w, ((0, Op - O), (0, Kp - K)))

    out = pl.pallas_call(
        _linear_kernel,
        out_shape=jax.ShapeDtypeStruct((Mp, Op), x.dtype),
        grid_spec=pltpu.PrefetchScalarGridSpec(
            num_scalar_prefetch=0,
            grid=(Mp // tm, Op // tn, Kp // tk),
            in_specs=[pl.BlockSpec((tm, tk), lambda i, j, k: (i, k)),
                      pl.BlockSpec((tn, tk), lambda i, j, k: (j, k))],
            out_specs=pl.BlockSpec((tm, tn), lambda i, j, k: (i, j)),
            scratch_shapes=[pltpu.VMEM((tm, tn), jnp.float32)]),
        compiler_params=pltpu.CompilerParams(
            dimension_semantics=("parallel", "parallel", "arbitrary"),
            vmem_limit_bytes=VMEM_LIMIT_BYTES),
    )(x2, wp)
    return out[:M, :O].reshape(*lead, O)


def _pallas_conv2d_same(x, w):
    # x: (N, Cin, H, W) NCHW;  w: (Cout, Cin, KH, KW) OIHW
    N, Cin, H, W = x.shape
    Cout, _, KH, KW = w.shape
    p = KW // 2                  # torch: padding=(w.shape[-1] // 2,) -> both dims
    Ho = H + 2 * p - KH + 1
    Wo = W + 2 * p - KW + 1
    Wp = W + 2 * p

    # ---- tile selection -----------------------------------------------------
    CoutP = _round_up(Cout, 128)                    # lane-dense output last dim
    tCo = 256 if CoutP % 256 == 0 else 128          # fill 256-wide MXU on v6e/v7x
    max_rows = max(8, (_ACC_BYTES_TARGET // (Wo * tCo * 4)) // 8 * 8)
    tHo = Ho if Ho <= max_rows else max_rows
    HoP = _round_up(Ho, tHo)
    Hp = HoP + KH - 1                               # padded input rows needed

    # ---- layout & zero padding (NCHW -> NHWC, halo, Cout pad) ---------------
    # TODO(synk): the zero halo could be applied inside the kernel (index-map
    # clamping / masking) to avoid this extra HBM pass over the activation.
    x_nhwc = jnp.transpose(x, (0, 2, 3, 1))
    x_pad = jnp.pad(x_nhwc, ((0, 0), (p, p + (HoP - Ho)), (p, p), (0, 0)))
    w_t = jnp.transpose(w, (2, 3, 1, 0))            # (KH, KW, Cin, Cout)
    if CoutP != Cout:
        w_t = jnp.pad(w_t, ((0, 0), (0, 0), (0, 0), (0, CoutP - Cout)))

    out = pl.pallas_call(
        _conv2d_kernel,
        out_shape=jax.ShapeDtypeStruct((N, HoP, Wo, CoutP), x.dtype),
        grid_spec=pltpu.PrefetchScalarGridSpec(
            num_scalar_prefetch=0,
            grid=(N, HoP // tHo, CoutP // tCo),
            in_specs=[
                # Whole padded image: block index depends only on n, so it is
                # fetched once per batch element and stays resident across h/co.
                pl.BlockSpec((1, Hp, Wp, Cin), lambda n, h, c: (n, 0, 0, 0)),
                pl.BlockSpec((KH, KW, Cin, tCo), lambda n, h, c: (0, 0, 0, c)),
            ],
            out_specs=pl.BlockSpec((1, tHo, Wo, tCo),
                                   lambda n, h, c: (n, h, 0, c)),
            scratch_shapes=[pltpu.VMEM((tHo * Wo, tCo), jnp.float32)]),
        compiler_params=pltpu.CompilerParams(
            dimension_semantics=("parallel", "parallel", "parallel"),
            vmem_limit_bytes=VMEM_LIMIT_BYTES),
    )(x_pad, w_t)

    out = out[:, :Ho, :, :Cout]
    return jnp.transpose(out, (0, 3, 1, 2))         # back to NCHW


def mp_conv_forward(x, weight, gain=1.0):
    """MPConv.forward: normalized-weight linear (2-D weight) or same-padded conv (4-D)."""
    w = prep_weight(weight, gain).astype(x.dtype)
    if w.ndim == 2:
        return _pallas_linear(x, w)
    assert w.ndim == 4
    return _pallas_conv2d_same(x, w)


# ----------------------------------------------------------------------------
# Demo / correctness check
# ----------------------------------------------------------------------------
if __name__ == "__main__":
    key = jax.random.PRNGKey(0)
    k1, k2, k3, k4 = jax.random.split(key, 4)

    # ---- 4-D (conv) case: x NCHW = (2, 4, 16, 16), weight (8, 4, 3, 3)
    N, Cin, H, W, Cout, K = 2, 4, 16, 16, 8, 3
    x = jax.random.normal(k1, (N, Cin, H, W), jnp.float32)
    w = jax.random.normal(k2, (Cout, Cin, K, K), jnp.float32)

    y = jax.block_until_ready(mp_conv_forward(x, w, gain=1.0))

    w_ref = prep_weight(w, 1.0).astype(x.dtype)
    y_ref = jax.lax.conv_general_dilated(
        x, w_ref, window_strides=(1, 1), padding=[(K // 2, K // 2)] * 2,
        dimension_numbers=("NCHW", "OIHW", "NCHW"))
    np.testing.assert_allclose(np.asarray(y), np.asarray(y_ref),
                               rtol=2e-5, atol=2e-5)

    # ---- 2-D (linear) case: x (2, 32), weight (16, 32)
    x2 = jax.random.normal(k3, (2, 32), jnp.float32)
    w2 = jax.random.normal(k4, (16, 32), jnp.float32)
    y2 = jax.block_until_ready(mp_conv_forward(x2, w2, gain=1.0))
    w2_ref = prep_weight(w2, 1.0).astype(x2.dtype)
    np.testing.assert_allclose(np.asarray(y2), np.asarray(x2 @ w2_ref.T),
                               rtol=2e-5, atol=2e-5)

    print("KERNEL_OK")
</pallas_src>

<mosaic_0001>
module attributes {stable_mosaic.version = 11 : i64} {
  func.func @_conv2d_kernel(%arg0: i32, %arg1: i32, %arg2: i32, %arg3: memref<1x18x18x4xf32, #tpu.memory_space<vmem>>, %arg4: memref<3x3x4x128xf32, #tpu.memory_space<vmem>>, %arg5: memref<1x16x16x128xf32, #tpu.memory_space<vmem>>, %arg6: memref<256x128xf32, #tpu.memory_space<vmem>>) attributes {dimension_semantics = [#tpu.dimension_semantics<parallel>, #tpu.dimension_semantics<parallel>, #tpu.dimension_semantics<parallel>], iteration_bounds = array<i64: 2, 1, 1>, scalar_prefetch = 0 : i64, scratch_operands = 1 : i64, tpu.core_type = #tpu.core_type<tc>, window_params = [{transform_indices = @transform_0, window_bounds = array<i64: 1, 18, 18, 4>}, {transform_indices = @transform_1, window_bounds = array<i64: 3, 3, 4, 128>}, {transform_indices = @transform_2, window_bounds = array<i64: 1, 16, 16, 128>}]} {
    %c16_i32 = arith.constant 16 : i32
    %0 = arith.muli %arg1, %c16_i32 : i32
    %1 = tpu.assume_multiple %0, 16 : i32
    %cst = arith.constant 0.000000e+00 : f32
    %2 = vector.broadcast %cst : f32 to vector<256x128xf32>
    %c0 = arith.constant 0 : index
    %c0_0 = arith.constant 0 : index
    %3 = vector.load %arg6[%c0, %c0_0] : memref<256x128xf32, #tpu.memory_space<vmem>>, vector<256x128xf32>
    tpu.vector_store %arg6[%c0, %c0_0], %2 {strides = array<i32>} : memref<256x128xf32, #tpu.memory_space<vmem>>, vector<256x128xf32>,
    %c0_i32 = arith.constant 0 : i32
    %4 = arith.addi %1, %c0_i32 : i32
    %c0_1 = arith.constant 0 : index
    %5 = arith.index_cast %4 : i32 to index
    %c0_2 = arith.constant 0 : index
    %c0_3 = arith.constant 0 : index
    %6 = vector.load %arg3[%c0_1, %5, %c0_2, %c0_3] : memref<1x18x18x4xf32, #tpu.memory_space<vmem>>, vector<1x16x16x4xf32>
    %7 = vector.shape_cast %6 : vector<1x16x16x4xf32> to vector<16x16x4xf32>
    %c0_4 = arith.constant 0 : index
    %c0_5 = arith.constant 0 : index
    %8 = vector.load %arg6[%c0_4, %c0_5] : memref<256x128xf32, #tpu.memory_space<vmem>>, vector<256x128xf32>
    %9 = vector.shape_cast %7 : vector<16x16x4xf32> to vector<256x4xf32>
    %c0_6 = arith.constant 0 : index
    %c0_7 = arith.constant 0 : index
    %c0_8 = arith.constant 0 : index
    %c0_9 = arith.constant 0 : index
    %10 = vector.load %arg4[%c0_6, %c0_7, %c0_8, %c0_9] : memref<3x3x4x128xf32, #tpu.memory_space<vmem>>, vector<1x1x4x128xf32>
    %11 = vector.shape_cast %10 : vector<1x1x4x128xf32> to vector<4x128xf32>
    %cst_10 = arith.constant dense<0.000000e+00> : vector<256x128xf32>
    %12 = tpu.matmul %9, %11, %cst_10 {dimension_numbers = #tpu.dot_dimension_numbers<[1], [0], [0], [1], [0, 0, 1, 1], [], []>} : vector<256x4xf32>, vector<4x128xf32>, vector<256x128xf32> -> vector<256x128xf32>
    %13 = arith.addf %8, %12 : vector<256x128xf32>
    %c0_11 = arith.constant 0 : index
    %c0_12 = arith.constant 0 : index
    %14 = vector.load %arg6[%c0_11, %c0_12] : memref<256x128xf32, #tpu.memory_space<vmem>>, vector<256x128xf32>
    tpu.vector_store %arg6[%c0_11, %c0_12], %13 {strides = array<i32>} : memref<256x128xf32, #tpu.memory_space<vmem>>, vector<256x128xf32>,
    %c0_i32_13 = arith.constant 0 : i32
    %15 = arith.addi %1, %c0_i32_13 : i32
    %c0_14 = arith.constant 0 : index
    %16 = arith.index_cast %15 : i32 to index
    %c1 = arith.constant 1 : index
    %c0_15 = arith.constant 0 : index
    %17 = vector.load %arg3[%c0_14, %16, %c1, %c0_15] : memref<1x18x18x4xf32, #tpu.memory_space<vmem>>, vector<1x16x16x4xf32>
    %18 = vector.shape_cast %17 : vector<1x16x16x4xf32> to vector<16x16x4xf32>
    %c0_16 = arith.constant 0 : index
    %c0_17 = arith.constant 0 : index
    %19 = vector.load %arg6[%c0_16, %c0_17] : memref<256x128xf32, #tpu.memory_space<vmem>>, vector<256x128xf32>
    %20 = vector.shape_cast %18 : vector<16x16x4xf32> to vector<256x4xf32>
    %c0_18 = arith.constant 0 : index
    %c1_19 = arith.constant 1 : index
    %c0_20 = arith.constant 0 : index
    %c0_21 = arith.constant 0 : index
    %21 = vector.load %arg4[%c0_18, %c1_19, %c0_20, %c0_21] : memref<3x3x4x128xf32, #tpu.memory_space<vmem>>, vector<1x1x4x128xf32>
    %22 = vector.shape_cast %21 : vector<1x1x4x128xf32> to vector<4x128xf32>
    %cst_22 = arith.constant dense<0.000000e+00> : vector<256x128xf32>
    %23 = tpu.matmul %20, %22, %cst_22 {dimension_numbers = #tpu.dot_dimension_numbers<[1], [0], [0], [1], [0, 0, 1, 1], [], []>} : vector<256x4xf32>, vector<4x128xf32>, vector<256x128xf32> -> vector<256x128xf32>
    %24 = arith.addf %19, %23 : vector<256x128xf32>
    %c0_23 = arith.constant 0 : index
    %c0_24 = arith.constant 0 : index
    %25 = vector.load %arg6[%c0_23, %c0_24] : memref<256x128xf32, #tpu.memory_space<vmem>>, vector<256x128xf32>
    tpu.vector_store %arg6[%c0_23, %c0_24], %24 {strides = array<i32>} : memref<256x128xf32, #tpu.memory_space<vmem>>, vector<256x128xf32>,
    %c0_i32_25 = arith.constant 0 : i32
    %26 = arith.addi %1, %c0_i32_25 : i32
    %c0_26 = arith.constant 0 : index
    %27 = arith.index_cast %26 : i32 to index
    %c2 = arith.constant 2 : index
    %c0_27 = arith.constant 0 : index
    %28 = vector.load %arg3[%c0_26, %27, %c2, %c0_27] : memref<1x18x18x4xf32, #tpu.memory_space<vmem>>, vector<1x16x16x4xf32>
    %29 = vector.shape_cast %28 : vector<1x16x16x4xf32> to vector<16x16x4xf32>
    %c0_28 = arith.constant 0 : index
    %c0_29 = arith.constant 0 : index
    %30 = vector.load %arg6[%c0_28, %c0_29] : memref<256x128xf32, #tpu.memory_space<vmem>>, vector<256x128xf32>
    %31 = vector.shape_cast %29 : vector<16x16x4xf32> to vector<256x4xf32>
    %c0_30 = arith.constant 0 : index
    %c2_31 = arith.constant 2 : index
    %c0_32 = arith.constant 0 : index
    %c0_33 = arith.constant 0 : index
    %32 = vector.load %arg4[%c0_30, %c2_31, %c0_32, %c0_33] : memref<3x3x4x128xf32, #tpu.memory_space<vmem>>, vector<1x1x4x128xf32>
    %33 = vector.shape_cast %32 : vector<1x1x4x128xf32> to vector<4x128xf32>
    %cst_34 = arith.constant dense<0.000000e+00> : vector<256x128xf32>
    %34 = tpu.matmul %31, %33, %cst_34 {dimension_numbers = #tpu.dot_dimension_numbers<[1], [0], [0], [1], [0, 0, 1, 1], [], []>} : vector<256x4xf32>, vector<4x128xf32>, vector<256x128xf32> -> vector<256x128xf32>
    %35 = arith.addf %30, %34 : vector<256x128xf32>
    %c0_35 = arith.constant 0 : index
    %c0_36 = arith.constant 0 : index
    %36 = vector.load %arg6[%c0_35, %c0_36] : memref<256x128xf32, #tpu.memory_space<vmem>>, vector<256x128xf32>
    tpu.vector_store %arg6[%c0_35, %c0_36], %35 {strides = array<i32>} : memref<256x128xf32, #tpu.memory_space<vmem>>, vector<256x128xf32>,
    %c1_i32 = arith.constant 1 : i32
    %37 = arith.addi %1, %c1_i32 : i32
    %c0_37 = arith.constant 0 : index
    %38 = arith.index_cast %37 : i32 to index
    %c0_38 = arith.constant 0 : index
    %c0_39 = arith.constant 0 : index
    %39 = vector.load %arg3[%c0_37, %38, %c0_38, %c0_39] : memref<1x18x18x4xf32, #tpu.memory_space<vmem>>, vector<1x16x16x4xf32>
    %40 = vector.shape_cast %39 : vector<1x16x16x4xf32> to vector<16x16x4xf32>
    %c0_40 = arith.constant 0 : index
    %c0_41 = arith.constant 0 : index
    %41 = vector.load %arg6[%c0_40, %c0_41] : memref<256x128xf32, #tpu.memory_space<vmem>>, vector<256x128xf32>
    %42 = vector.shape_cast %40 : vector<16x16x4xf32> to vector<256x4xf32>
    %c1_42 = arith.constant 1 : index
    %c0_43 = arith.constant 0 : index
    %c0_44 = arith.constant 0 : index
    %c0_45 = arith.constant 0 : index
    %43 = vector.load %arg4[%c1_42, %c0_43, %c0_44, %c0_45] : memref<3x3x4x128xf32, #tpu.memory_space<vmem>>, vector<1x1x4x128xf32>
    %44 = vector.shape_cast %43 : vector<1x1x4x128xf32> to vector<4x128xf32>
    %cst_46 = arith.constant dense<0.000000e+00> : vector<256x128xf32>
    %45 = tpu.matmul %42, %44, %cst_46 {dimension_numbers = #tpu.dot_dimension_numbers<[1], [0], [0], [1], [0, 0, 1, 1], [], []>} : vector<256x4xf32>, vector<4x128xf32>, vector<256x128xf32> -> vector<256x128xf32>
    %46 = arith.addf %41, %45 : vector<256x128xf32>
    %c0_47 = arith.constant 0 : index
    %c0_48 = arith.constant 0 : index
    %47 = vector.load %arg6[%c0_47, %c0_48] : memref<256x128xf32, #tpu.memory_space<vmem>>, vector<256x128xf32>
    tpu.vector_store %arg6[%c0_47, %c0_48], %46 {strides = array<i32>} : memref<256x128xf32, #tpu.memory_space<vmem>>, vector<256x128xf32>,
    %c1_i32_49 = arith.constant 1 : i32
    %48 = arith.addi %1, %c1_i32_49 : i32
    %c0_50 = arith.constant 0 : index
    %49 = arith.index_cast %48 : i32 to index
    %c1_51 = arith.constant 1 : index
    %c0_52 = arith.constant 0 : index
    %50 = vector.load %arg3[%c0_50, %49, %c1_51, %c0_52] : memref<1x18x18x4xf32, #tpu.memory_space<vmem>>, vector<1x16x16x4xf32>
    %51 = vector.shape_cast %50 : vector<1x16x16x4xf32> to vector<16x16x4xf32>
    %c0_53 = arith.constant 0 : index
    %c0_54 = arith.constant 0 : index
    %52 = vector.load %arg6[%c0_53, %c0_54] : memref<256x128xf32, #tpu.memory_space<vmem>>, vector<256x128xf32>
    %53 = vector.shape_cast %51 : vector<16x16x4xf32> to vector<256x4xf32>
    %c1_55 = arith.constant 1 : index
    %c1_56 = arith.constant 1 : index
    %c0_57 = arith.constant 0 : index
    %c0_58 = arith.constant 0 : index
    %54 = vector.load %arg4[%c1_55, %c1_56, %c0_57, %c0_58] : memref<3x3x4x128xf32, #tpu.memory_space<vmem>>, vector<1x1x4x128xf32>
    %55 = vector.shape_cast %54 : vector<1x1x4x128xf32> to vector<4x128xf32>
    %cst_59 = arith.constant dense<0.000000e+00> : vector<256x128xf32>
    %56 = tpu.matmul %53, %55, %cst_59 {dimension_numbers = #tpu.dot_dimension_numbers<[1], [0], [0], [1], [0, 0, 1, 1], [], []>} : vector<256x4xf32>, vector<4x128xf32>, vector<256x128xf32> -> vector<256x128xf32>
    %57 = arith.addf %52, %56 : vector<256x128xf32>
    %c0_60 = arith.constant 0 : index
    %c0_61 = arith.constant 0 : index
    %58 = vector.load %arg6[%c0_60, %c0_61] : memref<256x128xf32, #tpu.memory_space<vmem>>, vector<256x128xf32>
    tpu.vector_store %arg6[%c0_60, %c0_61], %57 {strides = array<i32>} : memref<256x128xf32, #tpu.memory_space<vmem>>, vector<256x128xf32>,
    %c1_i32_62 = arith.constant 1 : i32
    %59 = arith.addi %1, %c1_i32_62 : i32
    %c0_63 = arith.constant 0 : index
    %60 = arith.index_cast %59 : i32 to index
    %c2_64 = arith.constant 2 : index
    %c0_65 = arith.constant 0 : index
    %61 = vector.load %arg3[%c0_63, %60, %c2_64, %c0_65] : memref<1x18x18x4xf32, #tpu.memory_space<vmem>>, vector<1x16x16x4xf32>
    %62 = vector.shape_cast %61 : vector<1x16x16x4xf32> to vector<16x16x4xf32>
    %c0_66 = arith.constant 0 : index
    %c0_67 = arith.constant 0 : index
    %63 = vector.load %arg6[%c0_66, %c0_67] : memref<256x128xf32, #tpu.memory_space<vmem>>, vector<256x128xf32>
    %64 = vector.shape_cast %62 : vector<16x16x4xf32> to vector<256x4xf32>
    %c1_68 = arith.constant 1 : index
    %c2_69 = arith.constant 2 : index
    %c0_70 = arith.constant 0 : index
    %c0_71 = arith.constant 0 : index
    %65 = vector.load %arg4[%c1_68, %c2_69, %c0_70, %c0_71] : memref<3x3x4x128xf32, #tpu.memory_space<vmem>>, vector<1x1x4x128xf32>
    %66 = vector.shape_cast %65 : vector<1x1x4x128xf32> to vector<4x128xf32>
    %cst_72 = arith.constant dense<0.000000e+00> : vector<256x128xf32>
    %67 = tpu.matmul %64, %66, %cst_72 {dimension_numbers = #tpu.dot_dimension_numbers<[1], [0], [0], [1], [0, 0, 1, 1], [], []>} : vector<256x4xf32>, vector<4x128xf32>, vector<256x128xf32> -> vector<256x128xf32>
    %68 = arith.addf %63, %67 : vector<256x128xf32>
    %c0_73 = arith.constant 0 : index
    %c0_74 = arith.constant 0 : index
    %69 = vector.load %arg6[%c0_73, %c0_74] : memref<256x128xf32, #tpu.memory_space<vmem>>, vector<256x128xf32>
    tpu.vector_store %arg6[%c0_73, %c0_74], %68 {strides = array<i32>} : memref<256x128xf32, #tpu.memory_space<vmem>>, vector<256x128xf32>,
    %c2_i32 = arith.constant 2 : i32
    %70 = arith.addi %1, %c2_i32 : i32
    %c0_75 = arith.constant 0 : index
    %71 = arith.index_cast %70 : i32 to index
    %c0_76 = arith.constant 0 : index
    %c0_77 = arith.constant 0 : index
    %72 = vector.load %arg3[%c0_75, %71, %c0_76, %c0_77] : memref<1x18x18x4xf32, #tpu.memory_space<vmem>>, vector<1x16x16x4xf32>
    %73 = vector.shape_cast %72 : vector<1x16x16x4xf32> to vector<16x16x4xf32>
    %c0_78 = arith.constant 0 : index
    %c0_79 = arith.constant 0 : index
    %74 = vector.load %arg6[%c0_78, %c0_79] : memref<256x128xf32, #tpu.memory_space<vmem>>, vector<256x128xf32>
    %75 = vector.shape_cast %73 : vector<16x16x4xf32> to vector<256x4xf32>
    %c2_80 = arith.constant 2 : index
    %c0_81 = arith.constant 0 : index
    %c0_82 = arith.constant 0 : index
    %c0_83 = arith.constant 0 : index
    %76 = vector.load %arg4[%c2_80, %c0_81, %c0_82, %c0_83] : memref<3x3x4x128xf32, #tpu.memory_space<vmem>>, vector<1x1x4x128xf32>
    %77 = vector.shape_cast %76 : vector<1x1x4x128xf32> to vector<4x128xf32>
    %cst_84 = arith.constant dense<0.000000e+00> : vector<256x128xf32>
    %78 = tpu.matmul %75, %77, %cst_84 {dimension_numbers = #tpu.dot_dimension_numbers<[1], [0], [0], [1], [0, 0, 1, 1], [], []>} : vector<256x4xf32>, vector<4x128xf32>, vector<256x128xf32> -> vector<256x128xf32>
    %79 = arith.addf %74, %78 : vector<256x128xf32>
    %c0_85 = arith.constant 0 : index
    %c0_86 = arith.constant 0 : index
    %80 = vector.load %arg6[%c0_85, %c0_86] : memref<256x128xf32, #tpu.memory_space<vmem>>, vector<256x128xf32>
    tpu.vector_store %arg6[%c0_85, %c0_86], %79 {strides = array<i32>} : memref<256x128xf32, #tpu.memory_space<vmem>>, vector<256x128xf32>,
    %c2_i32_87 = arith.constant 2 : i32
    %81 = arith.addi %1, %c2_i32_87 : i32
    %c0_88 = arith.constant 0 : index
    %82 = arith.index_cast %81 : i32 to index
    %c1_89 = arith.constant 1 : index
    %c0_90 = arith.constant 0 : index
    %83 = vector.load %arg3[%c0_88, %82, %c1_89, %c0_90] : memref<1x18x18x4xf32, #tpu.memory_space<vmem>>, vector<1x16x16x4xf32>
    %84 = vector.shape_cast %83 : vector<1x16x16x4xf32> to vector<16x16x4xf32>
    %c0_91 = arith.constant 0 : index
    %c0_92 = arith.constant 0 : index
    %85 = vector.load %arg6[%c0_91, %c0_92] : memref<256x128xf32, #tpu.memory_space<vmem>>, vector<256x128xf32>
    %86 = vector.shape_cast %84 : vector<16x16x4xf32> to vector<256x4xf32>
    %c2_93 = arith.constant 2 : index
    %c1_94 = arith.constant 1 : index
    %c0_95 = arith.constant 0 : index
    %c0_96 = arith.constant 0 : index
    %87 = vector.load %arg4[%c2_93, %c1_94, %c0_95, %c0_96] : memref<3x3x4x128xf32, #tpu.memory_space<vmem>>, vector<1x1x4x128xf32>
    %88 = vector.shape_cast %87 : vector<1x1x4x128xf32> to vector<4x128xf32>
    %cst_97 = arith.constant dense<0.000000e+00> : vector<256x128xf32>
    %89 = tpu.matmul %86, %88, %cst_97 {dimension_numbers = #tpu.dot_dimension_numbers<[1], [0], [0], [1], [0, 0, 1, 1], [], []>} : vector<256x4xf32>, vector<4x128xf32>, vector<256x128xf32> -> vector<256x128xf32>
    %90 = arith.addf %85, %89 : vector<256x128xf32>
    %c0_98 = arith.constant 0 : index
    %c0_99 = arith.constant 0 : index
    %91 = vector.load %arg6[%c0_98, %c0_99] : memref<256x128xf32, #tpu.memory_space<vmem>>, vector<256x128xf32>
    tpu.vector_store %arg6[%c0_98, %c0_99], %90 {strides = array<i32>} : memref<256x128xf32, #tpu.memory_space<vmem>>, vector<256x128xf32>,
    %c2_i32_100 = arith.constant 2 : i32
    %92 = arith.addi %1, %c2_i32_100 : i32
    %c0_101 = arith.constant 0 : index
    %93 = arith.index_cast %92 : i32 to index
    %c2_102 = arith.constant 2 : index
    %c0_103 = arith.constant 0 : index
    %94 = vector.load %arg3[%c0_101, %93, %c2_102, %c0_103] : memref<1x18x18x4xf32, #tpu.memory_space<vmem>>, vector<1x16x16x4xf32>
    %95 = vector.shape_cast %94 : vector<1x16x16x4xf32> to vector<16x16x4xf32>
    %c0_104 = arith.constant 0 : index
    %c0_105 = arith.constant 0 : index
    %96 = vector.load %arg6[%c0_104, %c0_105] : memref<256x128xf32, #tpu.memory_space<vmem>>, vector<256x128xf32>
    %97 = vector.shape_cast %95 : vector<16x16x4xf32> to vector<256x4xf32>
    %c2_106 = arith.constant 2 : index
    %c2_107 = arith.constant 2 : index
    %c0_108 = arith.constant 0 : index
    %c0_109 = arith.constant 0 : index
    %98 = vector.load %arg4[%c2_106, %c2_107, %c0_108, %c0_109] : memref<3x3x4x128xf32, #tpu.memory_space<vmem>>, vector<1x1x4x128xf32>
    %99 = vector.shape_cast %98 : vector<1x1x4x128xf32> to vector<4x128xf32>
    %cst_110 = arith.constant dense<0.000000e+00> : vector<256x128xf32>
    %100 = tpu.matmul %97, %99, %cst_110 {dimension_numbers = #tpu.dot_dimension_numbers<[1], [0], [0], [1], [0, 0, 1, 1], [], []>} : vector<256x4xf32>, vector<4x128xf32>, vector<256x128xf32> -> vector<256x128xf32>
    %101 = arith.addf %96, %100 : vector<256x128xf32>
    %c0_111 = arith.constant 0 : index
    %c0_112 = arith.constant 0 : index
    %102 = vector.load %arg6[%c0_111, %c0_112] : memref<256x128xf32, #tpu.memory_space<vmem>>, vector<256x128xf32>
    tpu.vector_store %arg6[%c0_111, %c0_112], %101 {strides = array<i32>} : memref<256x128xf32, #tpu.memory_space<vmem>>, vector<256x128xf32>,
    %c0_113 = arith.constant 0 : index
    %c0_114 = arith.constant 0 : index
    %103 = vector.load %arg6[%c0_113, %c0_114] : memref<256x128xf32, #tpu.memory_space<vmem>>, vector<256x128xf32>
    %104 = vector.shape_cast %103 : vector<256x128xf32> to vector<16x16x128xf32>
    %c0_115 = arith.constant 0 : index
    %c0_116 = arith.constant 0 : index
    %c0_117 = arith.constant 0 : index
    %c0_118 = arith.constant 0 : index
    %105 = vector.load %arg5[%c0_115, %c0_116, %c0_117, %c0_118] : memref<1x16x16x128xf32, #tpu.memory_space<vmem>>, vector<1x16x16x128xf32>
    %106 = vector.shape_cast %105 : vector<1x16x16x128xf32> to vector<16x16x128xf32>
    %107 = vector.shape_cast %104 : vector<16x16x128xf32> to vector<1x16x16x128xf32>
    tpu.vector_store %arg5[%c0_115, %c0_116, %c0_117, %c0_118], %107 {strides = array<i32>} : memref<1x16x16x128xf32, #tpu.memory_space<vmem>>, vector<1x16x16x128xf32>,
    return
  }
  func.func @transform_0(%arg0: i32, %arg1: i32, %arg2: i32) -> (i32, i32, i32, i32) {
    %c0_i32 = arith.constant 0 : i32
    %c0_i32_0 = arith.constant 0 : i32
    %c0_i32_1 = arith.constant 0 : i32
    %c0_i32_2 = arith.constant 0 : i32
    return %arg0, %c0_i32, %c0_i32_0, %c0_i32_1 : i32, i32, i32, i32
  }
  func.func @transform_1(%arg0: i32, %arg1: i32, %arg2: i32) -> (i32, i32, i32, i32) {
    %c0_i32 = arith.constant 0 : i32
    %c0_i32_0 = arith.constant 0 : i32
    %c0_i32_1 = arith.constant 0 : i32
    %c0_i32_2 = arith.constant 0 : i32
    return %c0_i32, %c0_i32_0, %c0_i32_1, %arg2 : i32, i32, i32, i32
  }
  func.func @transform_2(%arg0: i32, %arg1: i32, %arg2: i32) -> (i32, i32, i32, i32) {
    %c0_i32 = arith.constant 0 : i32
    %c0_i32_0 = arith.constant 0 : i32
    return %arg0, %arg1, %c0_i32, %arg2 : i32, i32, i32, i32
  }
}

</mosaic_0001>

<llo_original>
// kernel: tpu_custom_call.1
$region0: #{tpu_custom_call.1}
  #allocation0 [shape = 'u32[]', space=smem, size = 0x4, offset = 0x4, fixed_abs, tag = 'smem constant byte address 0x4 - core index']
  #allocation1 [shape = 'u32[144,128]{1,0:T(1,128)}', space=vmem, size = 0x12000, scoped, tag = 'internal scratch']
  #allocation2 [shape = 'f32[256,128]{1,0:T(8,128)}', space=vmem, size = 0x20000, scoped, tag = 'scratch operand']
  %s0 = inlined_call_operand.vmem [shape: f32[2,18,18,4], index: 0, kind: input, shape index: {}]
  %s1 = inlined_call_operand.vmem [shape: f32[3,3,4,128], index: 1, kind: input, shape index: {}]
  %s2 = inlined_call_operand.hbm [shape: f32[2,16,16,128], index: 2, kind: output, shape index: {}]
  %s3 = sld [smem:[#allocation0]]
  $region41: #{tpu_custom_call.1} parent=0
    _
  %s5 = ssub.s32 1, %s3
  %s6 = scalar_select 0, %s5, %s3
  $region1: #{tpu_custom_call.1} parent=0
    #allocation3 [shape = 'u8[262144]{0}', space=vmem, size = 0x40000, scoped, tag = 'output window, operand 0']
    #allocation4 [shape = 's32[2]{0}', space=sflag, size = 0x8, scoped, tag = 'scoped memory for tpu_custom_call.1']
    %7 = vsyncpa [#allocation4], 0
    %s8 = scalar_lea.sflag [#allocation4], 1
    %9 = vsyncpa %s8, 0
    loop: start=0, step=1, limit=4
    $region2: #{tpu_custom_call.1} parent=1 // loop_pre_header
      _
    $region3: #{tpu_custom_call.1} parent=1 // loop_header
      %s11 = sphi 0, %s15
      %p12 = scmp.ge.s32.totalorder %s11, 4
      %s18 = sphi 0, %s37
      %s19 = sphi 0, %s33
      %s20 = sphi 0, %s29
      %s21 = sphi 0, %s18
      %s22 = sphi 0, %s19
      %s23 = sphi 0, %s20
      %s24 = sphi 0, %s21
      %s25 = sphi 0, %s22
      %s26 = sphi 0, %s23
      %s40 = sphi 0, %s42
      %s43 = sphi 0, %s40
      %s44 = sphi 0, %s43
      %s60 = sphi 0, %s44
      %s66 = sphi 0, %s68
      %s69 = sphi 0, %s66
      %s70 = sphi 0, %s69
      %s86 = sphi 0, %s70
      %s96 = sphi 0, %s98
      %s99 = sphi 0, %s96
      %s100 = sphi 0, %s99
      %s116 = sphi 0, %s100
    $region4: #{tpu_custom_call.1} parent=1 // loop_header_branch
      %14 = sbr.rel (%p12) target = $region8
    $region5: #{tpu_custom_call.1} parent=1 // loop_body
      %s16 = ssub.s32 %s11, 1
      %s17 = ssub.s32 %s11, 2
      %s27 = sadd.s32 1, %s20
      %p28 = scmp.ge.s32.totalorder %s27, 1
      %s29 = scalar_select %p28, 0, %s27
      %s30 = sadd.s32 1, %s19
      %s31 = scalar_select %p28, %s30, %s19
      %p32 = scmp.ge.s32.totalorder %s31, 1
      %s33 = scalar_select %p32, 0, %s31
      %s34 = sadd.s32 1, %s18
      %s35 = scalar_select %p32, %s34, %s18
      %p36 = scmp.ge.s32.totalorder %s35, 2
      %s37 = scalar_select %p36, 0, %s35
      %s38 = ssub.s32 %s18, %s37
      %p39 = scmp.eq.s32.totalorder %s38, 0
      %s41 = sadd.s32 %s40, 1
      %s42 = scalar_select %p39, %s40, %s41
      %p45 = pneg %p39
      %p46 = scmp.eq.s32.totalorder %s11, 1
      %p47 = por %p45, %p46
      %p48 = scmp.ne.s32.totalorder %s40, %s43
      %p49 = scmp.eq.s32.totalorder %s11, 0
      %p50 = por %p48, %p49
      %p51 = scmp.ne.s32.totalorder %s40, %s43
      %p52 = scmp.eq.s32.totalorder %s16, 1
      %p53 = por %p51, %p52
      %p54 = scmp.ne.s32.totalorder %s43, %s44
      %p55 = scmp.eq.s32.totalorder %s16, 0
      %p56 = por %p54, %p55
      %p57 = scmp.ne.s32.totalorder %s43, %s44
      %p58 = scmp.eq.s32.totalorder %s17, 1
      %p59 = por %p57, %p58
      %p61 = scmp.ne.s32.totalorder %s44, %s60
      %p62 = scmp.eq.s32.totalorder %s17, 0
      %p63 = por %p61, %p62
      %s64 = ssub.s32 %s20, %s29
      %p65 = scmp.eq.s32.totalorder %s64, 0
      %s67 = sadd.s32 %s66, 1
      %s68 = scalar_select %p65, %s66, %s67
      %p71 = pneg %p65
      %p72 = scmp.eq.s32.totalorder %s11, 1
      %p73 = por %p71, %p72
      %p74 = scmp.ne.s32.totalorder %s66, %s69
      %p75 = scmp.eq.s32.totalorder %s11, 0
      %p76 = por %p74, %p75
      %p77 = scmp.ne.s32.totalorder %s66, %s69
      %p78 = scmp.eq.s32.totalorder %s16, 1
      %p79 = por %p77, %p78
      %p80 = scmp.ne.s32.totalorder %s69, %s70
      %p81 = scmp.eq.s32.totalorder %s16, 0
      %p82 = por %p80, %p81
      %p83 = scmp.ne.s32.totalorder %s69, %s70
      %p84 = scmp.eq.s32.totalorder %s17, 1
      %p85 = por %p83, %p84
      %p87 = scmp.ne.s32.totalorder %s70, %s86
      %p88 = scmp.eq.s32.totalorder %s17, 0
      %p89 = por %p87, %p88
      %s90 = ssub.s32 %s18, %s37
      %s91 = ssub.s32 %s19, %s33
      %s92 = sor.u32 %s90, %s91
      %s93 = ssub.s32 %s20, %s29
      %s94 = sor.u32 %s92, %s93
      %p95 = scmp.eq.s32.totalorder %s94, 0
      %s97 = sadd.s32 %s96, 1
      %s98 = scalar_select %p95, %s96, %s97
      %p101 = pneg %p95
      %p102 = scmp.eq.s32.totalorder %s11, 1
      %p103 = por %p101, %p102
      %p104 = scmp.ne.s32.totalorder %s96, %s99
      %p105 = scmp.eq.s32.totalorder %s11, 0
      %p106 = por %p104, %p105
      %p107 = scmp.ne.s32.totalorder %s96, %s99
      %p108 = scmp.eq.s32.totalorder %s16, 1
      %p109 = por %p107, %p108
      %p110 = scmp.ne.s32.totalorder %s99, %s100
      %p111 = scmp.eq.s32.totalorder %s16, 0
      %p112 = por %p110, %p111
      %p113 = scmp.ne.s32.totalorder %s99, %s100
      %p114 = scmp.eq.s32.totalorder %s17, 1
      %p115 = por %p113, %p114
      %p117 = scmp.ne.s32.totalorder %s100, %s116
      %p118 = scmp.eq.s32.totalorder %s17, 0
      %p119 = por %p117, %p118
      %p120 = scmp.le.s32.totalorder 1, %s11
      %p121 = scmp.lt.s32.totalorder %s11, 3
      %p122 = pnand %p120, %p121
      %p123 = pneg %p122
      // Predicated region
      $region9: #{tpu_custom_call.1} parent=5 // pred_check
        _
      $region10: #{tpu_custom_call.1} parent=5 // pred_check_branch
        %125 = sbr.rel (%p122) target = $region12
      $region11: #{tpu_custom_call.1} parent=5 // pred_region
        %s126 = ssub.s32 %s11, 1
        // Predicated region
        $region13: #{tpu_custom_call.1} parent=11 // pred_check
          %p127 = pneg %p82
        $region14: #{tpu_custom_call.1} parent=11 // pred_check_branch
          %129 = sbr.rel (%p127) target = $region16
        $region15: #{tpu_custom_call.1} parent=11 // pred_region
          %p130 = scmp.lt.s32.totalorder %s23, 0
          %s131 = scalar_select %p130, %s23, 0
          %s132 = smul.addr %s131, 4
          %s133 = scalar_lea.vmem %s1, %s132
        $region16: #{tpu_custom_call.1} parent=11 // pred_fallthru
          _
      $region12: #{tpu_custom_call.1} parent=5 // pred_fallthru
        _
      %p134 = scmp.lt.s32.totalorder %s11, 2
      // Predicated region
      $region17: #{tpu_custom_call.1} parent=5 // pred_check
        %p135 = pneg %p134
      $region18: #{tpu_custom_call.1} parent=5 // pred_check_branch
        %137 = sbr.rel (%p135) target = $region20
      $region19: #{tpu_custom_call.1} parent=5 // pred_region
        // Predicated region
        $region21: #{tpu_custom_call.1} parent=19 // pred_check
          %p138 = pneg %p50
        $region22: #{tpu_custom_call.1} parent=19 // pred_check_branch
          %140 = sbr.rel (%p138) target = $region24
        $region23: #{tpu_custom_call.1} parent=19 // pred_region
          %p141 = scmp.lt.s32.totalorder %s18, 1
          %s142 = scalar_select %p141, %s18, 1
          %s143 = smul.addr %s142, 54
          %s144 = smul.addr %s143, 8
          %s145 = scalar_lea.vmem %s0, %s144
        $region24: #{tpu_custom_call.1} parent=19 // pred_fallthru
          _
      $region20: #{tpu_custom_call.1} parent=5 // pred_fallthru
        _
      %p146 = scmp.le.s32.totalorder 1, %s11
      %p147 = scmp.lt.s32.totalorder %s11, 3
      %p148 = pnand %p146, %p147
      %p149 = pneg %p148
      // Predicated region
      $region25: #{tpu_custom_call.1} parent=5 // pred_check
        _
      $region26: #{tpu_custom_call.1} parent=5 // pred_check_branch
        %151 = sbr.rel (%p148) target = $region28
      $region27: #{tpu_custom_call.1} parent=5 // pred_region
        %s152 = ssub.s32 %s11, 1
        %p153 = scmp.lt.s32.totalorder %s21, 1
        %s154 = scalar_select %p153, %s21, 1
        %s155 = smul.addr %s154, 54
        %s156 = smul.addr %s155, 8
        %s157 = scalar_lea.vmem %s0, %s156
        %p158 = pneg %p56
        %p159 = pneg %p53
        %p160 = scmp.lt.s32.totalorder %s23, 0
        %s161 = scalar_select %p160, %s23, 0
        %s162 = smul.addr %s161, 4
        %s163 = scalar_lea.vmem %s1, %s162
        %p164 = pneg %p82
        %p165 = pneg %p79
        %p166 = pneg %p112
        %p167 = pneg %p109
        %s168 = sand.u32 %s99, 1
        %s169 = scalar_lea.sflag [#allocation4], %s168
        %s170 = sand.u32 %s99, 1
        %s171 = smul.addr %s170, 256
        %s172 = scalar_lea.vmem [#allocation3], %s171
        %p173 = scmp.lt.s32.totalorder %s21, 1
        %s174 = scalar_select %p173, %s21, 1
        %s175 = smul.addr %s174, 54
        %s176 = smul.addr %s175, 8
        %s177 = scalar_lea.vmem %s0, %s176
        %p178 = scmp.lt.s32.totalorder %s23, 0
        %s179 = scalar_select %p178, %s23, 0
        %s180 = smul.addr %s179, 4
        %s181 = scalar_lea.vmem %s1, %s180
        %s182 = smul.u32 16, %s22
        %s183 = smul.u32 %s22, 16
        %184 = vst [vmem:[#allocation2] sm:$0xff] 0.0
        %185 = vst [vmem:[#allocation2 + $0x8] sm:$0xff] 0.0
        %186 = vst [vmem:[#allocation2 + $0x10] sm:$0xff] 0.0
        %187 = vst [vmem:[#allocation2 + $0x18] sm:$0xff] 0.0
        %188 = vst [vmem:[#allocation2 + $0x20] sm:$0xff] 0.0
        %189 = vst [vmem:[#allocation2 + $0x28] sm:$0xff] 0.0
        %190 = vst [vmem:[#allocation2 + $0x30] sm:$0xff] 0.0
        %191 = vst [vmem:[#allocation2 + $0x38] sm:$0xff] 0.0
        %192 = vst [vmem:[#allocation2 + $0x40] sm:$0xff] 0.0
        %193 = vst [vmem:[#allocation2 + $0x48] sm:$0xff] 0.0
        %194 = vst [vmem:[#allocation2 + $0x50] sm:$0xff] 0.0
        %195 = vst [vmem:[#allocation2 + $0x58] sm:$0xff] 0.0
        %196 = vst [vmem:[#allocation2 + $0x60] sm:$0xff] 0.0
        %197 = vst [vmem:[#allocation2 + $0x68] sm:$0xff] 0.0
        %198 = vst [vmem:[#allocation2 + $0x70] sm:$0xff] 0.0
        %199 = vst [vmem:[#allocation2 + $0x78] sm:$0xff] 0.0
        %200 = vst [vmem:[#allocation2 + $0x80] sm:$0xff] 0.0
        %201 = vst [vmem:[#allocation2 + $0x88] sm:$0xff] 0.0
        %202 = vst [vmem:[#allocation2 + $0x90] sm:$0xff] 0.0
        %203 = vst [vmem:[#allocation2 + $0x98] sm:$0xff] 0.0
        %204 = vst [vmem:[#allocation2 + $0xa0] sm:$0xff] 0.0
        %205 = vst [vmem:[#allocation2 + $0xa8] sm:$0xff] 0.0
        %206 = vst [vmem:[#allocation2 + $0xb0] sm:$0xff] 0.0
        %207 = vst [vmem:[#allocation2 + $0xb8] sm:$0xff] 0.0
        %208 = vst [vmem:[#allocation2 + $0xc0] sm:$0xff] 0.0
        %209 = vst [vmem:[#allocation2 + $0xc8] sm:$0xff] 0.0
        %210 = vst [vmem:[#allocation2 + $0xd0] sm:$0xff] 0.0
        %211 = vst [vmem:[#allocation2 + $0xd8] sm:$0xff] 0.0
        %212 = vst [vmem:[#allocation2 + $0xe0] sm:$0xff] 0.0
        %213 = vst [vmem:[#allocation2 + $0xe8] sm:$0xff] 0.0
        %214 = vst [vmem:[#allocation2 + $0xf0] sm:$0xff] 0.0
        %215 = vst [vmem:[#allocation2 + $0xf8] sm:$0xff] 0.0
        %s216 = smul.u32 %s183, 24
        %s217 = scalar_lea.vmem %s177, %s216
        %v218 = vld [vmem:[%s217] sm:$0xff]
        %v219 = vld [vmem:[%s217 + $0x8] sm:$0xff]
        %v220 = vld [vmem:[%s217 + $0x18] sm:$0xff]
        %v221 = vld [vmem:[%s217 + $0x20] sm:$0xff]
        %v222 = vld [vmem:[%s217 + $0x30] sm:$0xff]
        %v223 = vld [vmem:[%s217 + $0x38] sm:$0xff]
        %v224 = vld [vmem:[%s217 + $0x48] sm:$0xff]
        %v225 = vld [vmem:[%s217 + $0x50] sm:$0xff]
        %v226 = vld [vmem:[%s217 + $0x60] sm:$0xff]
        %v227 = vld [vmem:[%s217 + $0x68] sm:$0xff]
        %v228 = vld [vmem:[%s217 + $0x78] sm:$0xff]
        %v229 = vld [vmem:[%s217 + $0x80] sm:$0xff]
        %v230 = vld [vmem:[%s217 + $0x90] sm:$0xff]
        %v231 = vld [vmem:[%s217 + $0x98] sm:$0xff]
        %v232 = vld [vmem:[%s217 + $0xa8] sm:$0xff]
        %v233 = vld [vmem:[%s217 + $0xb0] sm:$0xff]
        %v234 = vld [vmem:[%s217 + $0xc0] sm:$0xff]
        %v235 = vld [vmem:[%s217 + $0xc8] sm:$0xff]
        %v236 = vld [vmem:[%s217 + $0xd8] sm:$0xff]
        %v237 = vld [vmem:[%s217 + $0xe0] sm:$0xff]
        %v238 = vld [vmem:[%s217 + $0xf0] sm:$0xff]
        %v239 = vld [vmem:[%s217 + $0xf8] sm:$0xff]
        %v240 = vld [vmem:[%s217 + $0x108] sm:$0xff]
        %v241 = vld [vmem:[%s217 + $0x110] sm:$0xff]
        %v242 = vld [vmem:[%s217 + $0x120] sm:$0xff]
        %v243 = vld [vmem:[%s217 + $0x128] sm:$0xff]
        %v244 = vld [vmem:[%s217 + $0x138] sm:$0xff]
        %v245 = vld [vmem:[%s217 + $0x140] sm:$0xff]
        %v246 = vld [vmem:[%s217 + $0x150] sm:$0xff]
        %v247 = vld [vmem:[%s217 + $0x158] sm:$0xff]
        %v248 = vld [vmem:[%s217 + $0x168] sm:$0xff]
        %v249 = vld [vmem:[%s217 + $0x170] sm:$0xff]
        %v250 = vld [vmem:[#allocation2] sm:$0xff]
        %v251 = vld [vmem:[#allocation2 + $0x8] sm:$0xff]
        %v252 = vld [vmem:[#allocation2 + $0x10] sm:$0xff]
        %v253 = vld [vmem:[#allocation2 + $0x18] sm:$0xff]
        %v254 = vld [vmem:[#allocation2 + $0x20] sm:$0xff]
        %v255 = vld [vmem:[#allocation2 + $0x28] sm:$0xff]
        %v256 = vld [vmem:[#allocation2 + $0x30] sm:$0xff]
        %v257 = vld [vmem:[#allocation2 + $0x38] sm:$0xff]
        %v258 = vld [vmem:[#allocation2 + $0x40] sm:$0xff]
        %v259 = vld [vmem:[#allocation2 + $0x48] sm:$0xff]
        %v260 = vld [vmem:[#allocation2 + $0x50] sm:$0xff]
        %v261 = vld [vmem:[#allocation2 + $0x58] sm:$0xff]
        %v262 = vld [vmem:[#allocation2 + $0x60] sm:$0xff]
        %v263 = vld [vmem:[#allocation2 + $0x68] sm:$0xff]
        %v264 = vld [vmem:[#allocation2 + $0x70] sm:$0xff]
        %v265 = vld [vmem:[#allocation2 + $0x78] sm:$0xff]
        %v266 = vld [vmem:[#allocation2 + $0x80] sm:$0xff]
        %v267 = vld [vmem:[#allocation2 + $0x88] sm:$0xff]
        %v268 = vld [vmem:[#allocation2 + $0x90] sm:$0xff]
        %v269 = vld [vmem:[#allocation2 + $0x98] sm:$0xff]
        %v270 = vld [vmem:[#allocation2 + $0xa0] sm:$0xff]
        %v271 = vld [vmem:[#allocation2 + $0xa8] sm:$0xff]
        %v272 = vld [vmem:[#allocation2 + $0xb0] sm:$0xff]
        %v273 = vld [vmem:[#allocation2 + $0xb8] sm:$0xff]
        %v274 = vld [vmem:[#allocation2 + $0xc0] sm:$0xff]
        %v275 = vld [vmem:[#allocation2 + $0xc8] sm:$0xff]
        %v276 = vld [vmem:[#allocation2 + $0xd0] sm:$0xff]
        %v277 = vld [vmem:[#allocation2 + $0xd8] sm:$0xff]
        %v278 = vld [vmem:[#allocation2 + $0xe0] sm:$0xff]
        %v279 = vld [vmem:[#allocation2 + $0xe8] sm:$0xff]
        %v280 = vld [vmem:[#allocation2 + $0xf0] sm:$0xff]
        %v281 = vld [vmem:[#allocation2 + $0xf8] sm:$0xff]
        %v282 = vld [vmem:[%s181] sm:$0xf]
        %vm283 = vcmask 31744
        %v285 = vsel %vm283, %v218, 0
        %v288 = vsel %vm283, %v219, 0
        %v291 = vsel %vm283, %v220, 0
        %v294 = vsel %vm283, %v221, 0
        %v297 = vsel %vm283, %v222, 0
        %v300 = vsel %vm283, %v223, 0
        %v303 = vsel %vm283, %v224, 0
        %v306 = vsel %vm283, %v225, 0
        %v309 = vsel %vm283, %v226, 0
        %v312 = vsel %vm283, %v227, 0
        %v315 = vsel %vm283, %v228, 0
        %v318 = vsel %vm283, %v229, 0
        %v321 = vsel %vm283, %v230, 0
        %v324 = vsel %vm283, %v231, 0
        %v327 = vsel %vm283, %v232, 0
        %v330 = vsel %vm283, %v233, 0
        %v333 = vsel %vm283, %v234, 0
        %v336 = vsel %vm283, %v235, 0
        %v339 = vsel %vm283, %v236, 0
        %v342 = vsel %vm283, %v237, 0
        %v345 = vsel %vm283, %v238, 0
        %v348 = vsel %vm283, %v239, 0
        %v351 = vsel %vm283, %v240, 0
        %v354 = vsel %vm283, %v241, 0
        %v357 = vsel %vm283, %v242, 0
        %v360 = vsel %vm283, %v243, 0
        %v363 = vsel %vm283, %v244, 0
        %v366 = vsel %vm283, %v245, 0
        %v369 = vsel %vm283, %v246, 0
        %v372 = vsel %vm283, %v247, 0
        %v375 = vsel %vm283, %v248, 0
        %v378 = vsel %vm283, %v249, 0
        %vm380 = vcmask 1043456
        %v382 = vsel %vm380, %v282, 0
        %384 = vmatprep.subr.mxu0 0.0
        %385 = vmatpush1.msra.mxu0 %v382
        %386 = vmatprep.subr.mxu0 0.0
        %387 = vmatpush1.msra.mxu0 0.0
        %388 = vmatprep.subr.mxu0 0.0
        %389 = vmatpush1.msra.mxu0 0.0
        %390 = vmatprep.subr.mxu0 0.0
        %391 = vmatpush1.msra.mxu0 0.0
        %392 = vmatprep.subr.mxu0 0.0
        %393 = vmatpush1.msra.mxu0 0.0
        %394 = vmatprep.subr.mxu0 0.0
        %395 = vmatpush1.msra.mxu0 0.0
        %396 = vmatprep.subr.mxu0 0.0
        %397 = vmatpush1.msra.mxu0 0.0
        %398 = vmatprep.subr.mxu0 0.0
        %399 = vmatpush1.msra.mxu0 0.0
        %400 = vmatprep.subr.mxu0 0.0
        %401 = vmatpush1.msra.mxu0 0.0
        %402 = vmatprep.subr.mxu0 0.0
        %403 = vmatpush1.msra.mxu0 0.0
        %404 = vmatprep.subr.mxu0 0.0
        %405 = vmatpush1.msra.mxu0 0.0
        %406 = vmatprep.subr.mxu0 0.0
        %407 = vmatpush1.msra.mxu0 0.0
        %408 = vmatprep.subr.mxu0 0.0
        %409 = vmatpush1.msra.mxu0 0.0
        %410 = vmatprep.subr.mxu0 0.0
        %411 = vmatpush1.msra.mxu0 0.0
        %412 = vmatprep.subr.mxu0 0.0
        %413 = vmatpush1.msra.mxu0 0.0
        %414 = vmatprep.subr.mxu0 0.0
        %415 = vmatpush1.msra.mxu0 0.0
        %416 = vmatprep.subr.mxu0 0.0
        %417 = vmatpush1.msra.mxu0 0.0
        %418 = vmatprep.subr.mxu0 0.0
        %419 = vmatpush1.msra.mxu0 0.0
        %420 = vmatprep.subr.mxu0 0.0
        %421 = vmatpush1.msra.mxu0 0.0
        %422 = vmatprep.subr.mxu0 0.0
        %423 = vmatpush1.msra.mxu0 0.0
        %424 = vmatprep.subr.mxu0 0.0
        %425 = vmatpush1.msra.mxu0 0.0
        %426 = vmatprep.subr.mxu0 0.0
        %427 = vmatpush1.msra.mxu0 0.0
        %428 = vmatprep.subr.mxu0 0.0
        %429 = vmatpush1.msra.mxu0 0.0
        %430 = vmatprep.subr.mxu0 0.0
        %431 = vmatpush1.msra.mxu0 0.0
        %432 = vmatprep.subr.mxu0 0.0
        %433 = vmatpush1.msra.mxu0 0.0
        %434 = vmatprep.subr.mxu0 0.0
        %435 = vmatpush1.msra.mxu0 0.0
        %436 = vmatprep.subr.mxu0 0.0
        %437 = vmatpush1.msra.mxu0 0.0
        %438 = vmatprep.subr.mxu0 0.0
        %439 = vmatpush1.msra.mxu0 0.0
        %440 = vmatprep.subr.mxu0 0.0
        %441 = vmatpush1.msra.mxu0 0.0
        %442 = vmatprep.subr.mxu0 0.0
        %443 = vmatpush1.msra.mxu0 0.0
        %444 = vmatprep.subr.mxu0 0.0
        %445 = vmatpush1.msra.mxu0 0.0
        %446 = vmatprep.subr.mxu0 0.0
        %447 = vmatpush1.msra.mxu0 0.0
        %448 = vmatprep.mubr.f32.mxu0 0.0
        %449 = vmatmul.mubr.f32.gmra.mrb[0].mxu0 %v285
        %v450 = vpop.f32.mrb[0].mxu0
        %v451 = vadd.f32 0.0, %v450
        %v452 = vpop.f32.mrb[0].mxu0
        %453 = vmatprep.mubr.f32.mxu0 0.0
        %454 = vmatmul.mubr.f32.gmra.mrb[0].mxu0 %v288
        %v455 = vpop.f32.mrb[0].mxu0
        %v456 = vadd.f32 0.0, %v455
        %v457 = vpop.f32.mrb[0].mxu0
        %458 = vmatprep.mubr.f32.mxu0 0.0
        %459 = vmatmul.mubr.f32.gmra.mrb[0].mxu0 %v291
        %v460 = vpop.f32.mrb[0].mxu0
        %v461 = vadd.f32 0.0, %v460
        %v462 = vpop.f32.mrb[0].mxu0
        %463 = vmatprep.mubr.f32.mxu0 0.0
        %464 = vmatmul.mubr.f32.gmra.mrb[0].mxu0 %v294
        %v465 = vpop.f32.mrb[0].mxu0
        %v466 = vadd.f32 0.0, %v465
        %v467 = vpop.f32.mrb[0].mxu0
        %468 = vmatprep.mubr.f32.mxu0 0.0
        %469 = vmatmul.mubr.f32.gmra.mrb[0].mxu0 %v297
        %v470 = vpop.f32.mrb[0].mxu0
        %v471 = vadd.f32 0.0, %v470
        %v472 = vpop.f32.mrb[0].mxu0
        %473 = vmatprep.mubr.f32.mxu0 0.0
        %474 = vmatmul.mubr.f32.gmra.mrb[0].mxu0 %v300
        %v475 = vpop.f32.mrb[0].mxu0
        %v476 = vadd.f32 0.0, %v475
        %v477 = vpop.f32.mrb[0].mxu0
        %478 = vmatprep.mubr.f32.mxu0 0.0
        %479 = vmatmul.mubr.f32.gmra.mrb[0].mxu0 %v303
        %v480 = vpop.f32.mrb[0].mxu0
        %v481 = vadd.f32 0.0, %v480
        %v482 = vpop.f32.mrb[0].mxu0
        %483 = vmatprep.mubr.f32.mxu0 0.0
        %484 = vmatmul.mubr.f32.gmra.mrb[0].mxu0 %v306
        %v485 = vpop.f32.mrb[0].mxu0
        %v486 = vadd.f32 0.0, %v485
        %v487 = vpop.f32.mrb[0].mxu0
        %488 = vmatprep.mubr.f32.mxu0 0.0
        %489 = vmatmul.mubr.f32.gmra.mrb[0].mxu0 %v309
        %v490 = vpop.f32.mrb[0].mxu0
        %v491 = vadd.f32 0.0, %v490
        %v492 = vpop.f32.mrb[0].mxu0
        %493 = vmatprep.mubr.f32.mxu0 0.0
        %494 = vmatmul.mubr.f32.gmra.mrb[0].mxu0 %v312
        %v495 = vpop.f32.mrb[0].mxu0
        %v496 = vadd.f32 0.0, %v495
        %v497 = vpop.f32.mrb[0].mxu0
        %498 = vmatprep.mubr.f32.mxu0 0.0
        %499 = vmatmul.mubr.f32.gmra.mrb[0].mxu0 %v315
        %v500 = vpop.f32.mrb[0].mxu0
        %v501 = vadd.f32 0.0, %v500
        %v502 = vpop.f32.mrb[0].mxu0
        %503 = vmatprep.mubr.f32.mxu0 0.0
        %504 = vmatmul.mubr.f32.gmra.mrb[0].mxu0 %v318
        %v505 = vpop.f32.mrb[0].mxu0
        %v506 = vadd.f32 0.0, %v505
        %v507 = vpop.f32.mrb[0].mxu0
        %508 = vmatprep.mubr.f32.mxu0 0.0
        %509 = vmatmul.mubr.f32.gmra.mrb[0].mxu0 %v321
        %v510 = vpop.f32.mrb[0].mxu0
        %v511 = vadd.f32 0.0, %v510
        %v512 = vpop.f32.mrb[0].mxu0
        %513 = vmatprep.mubr.f32.mxu0 0.0
        %514 = vmatmul.mubr.f32.gmra.mrb[0].mxu0 %v324
        %v515 = vpop.f32.mrb[0].mxu0
        %v516 = vadd.f32 0.0, %v515
        %v517 = vpop.f32.mrb[0].mxu0
        %518 = vmatprep.mubr.f32.mxu0 0.0
        %519 = vmatmul.mubr.f32.gmra.mrb[0].mxu0 %v327
        %v520 = vpop.f32.mrb[0].mxu0
        %v521 = vadd.f32 0.0, %v520
        %v522 = vpop.f32.mrb[0].mxu0
        %523 = vmatprep.mubr.f32.mxu0 0.0
        %524 = vmatmul.mubr.f32.gmra.mrb[0].mxu0 %v330
        %v525 = vpop.f32.mrb[0].mxu0
        %v526 = vadd.f32 0.0, %v525
        %v527 = vpop.f32.mrb[0].mxu0
        %528 = vmatprep.mubr.f32.mxu0 0.0
        %529 = vmatmul.mubr.f32.gmra.mrb[0].mxu0 %v333
        %v530 = vpop.f32.mrb[0].mxu0
        %v531 = vadd.f32 0.0, %v530
        %v532 = vpop.f32.mrb[0].mxu0
        %533 = vmatprep.mubr.f32.mxu0 0.0
        %534 = vmatmul.mubr.f32.gmra.mrb[0].mxu0 %v336
        %v535 = vpop.f32.mrb[0].mxu0
        %v536 = vadd.f32 0.0, %v535
        %v537 = vpop.f32.mrb[0].mxu0
        %538 = vmatprep.mubr.f32.mxu0 0.0
        %539 = vmatmul.mubr.f32.gmra.mrb[0].mxu0 %v339
        %v540 = vpop.f32.mrb[0].mxu0
        %v541 = vadd.f32 0.0, %v540
        %v542 = vpop.f32.mrb[0].mxu0
        %543 = vmatprep.mubr.f32.mxu0 0.0
        %544 = vmatmul.mubr.f32.gmra.mrb[0].mxu0 %v342
        %v545 = vpop.f32.mrb[0].mxu0
        %v546 = vadd.f32 0.0, %v545
        %v547 = vpop.f32.mrb[0].mxu0
        %548 = vmatprep.mubr.f32.mxu0 0.0
        %549 = vmatmul.mubr.f32.gmra.mrb[0].mxu0 %v345
        %v550 = vpop.f32.mrb[0].mxu0
        %v551 = vadd.f32 0.0, %v550
        %v552 = vpop.f32.mrb[0].mxu0
        %553 = vmatprep.mubr.f32.mxu0 0.0
        %554 = vmatmul.mubr.f32.gmra.mrb[0].mxu0 %v348
        %v555 = vpop.f32.mrb[0].mxu0
        %v556 = vadd.f32 0.0, %v555
        %v557 = vpop.f32.mrb[0].mxu0
        %558 = vmatprep.mubr.f32.mxu0 0.0
        %559 = vmatmul.mubr.f32.gmra.mrb[0].mxu0 %v351
        %v560 = vpop.f32.mrb[0].mxu0
        %v561 = vadd.f32 0.0, %v560
        %v562 = vpop.f32.mrb[0].mxu0
        %563 = vmatprep.mubr.f32.mxu0 0.0
        %564 = vmatmul.mubr.f32.gmra.mrb[0].mxu0 %v354
        %v565 = vpop.f32.mrb[0].mxu0
        %v566 = vadd.f32 0.0, %v565
        %v567 = vpop.f32.mrb[0].mxu0
        %568 = vmatprep.mubr.f32.mxu0 0.0
        %569 = vmatmul.mubr.f32.gmra.mrb[0].mxu0 %v357
        %v570 = vpop.f32.mrb[0].mxu0
        %v571 = vadd.f32 0.0, %v570
        %v572 = vpop.f32.mrb[0].mxu0
        %573 = vmatprep.mubr.f32.mxu0 0.0
        %574 = vmatmul.mubr.f32.gmra.mrb[0].mxu0 %v360
        %v575 = vpop.f32.mrb[0].mxu0
        %v576 = vadd.f32 0.0, %v575
        %v577 = vpop.f32.mrb[0].mxu0
        %578 = vmatprep.mubr.f32.mxu0 0.0
        %579 = vmatmul.mubr.f32.gmra.mrb[0].mxu0 %v363
        %v580 = vpop.f32.mrb[0].mxu0
        %v581 = vadd.f32 0.0, %v580
        %v582 = vpop.f32.mrb[0].mxu0
        %583 = vmatprep.mubr.f32.mxu0 0.0
        %584 = vmatmul.mubr.f32.gmra.mrb[0].mxu0 %v366
        %v585 = vpop.f32.mrb[0].mxu0
        %v586 = vadd.f32 0.0, %v585
        %v587 = vpop.f32.mrb[0].mxu0
        %588 = vmatprep.mubr.f32.mxu0 0.0
        %589 = vmatmul.mubr.f32.gmra.mrb[0].mxu0 %v369
        %v590 = vpop.f32.mrb[0].mxu0
        %v591 = vadd.f32 0.0, %v590
        %v592 = vpop.f32.mrb[0].mxu0
        %593 = vmatprep.mubr.f32.mxu0 0.0
        %594 = vmatmul.mubr.f32.gmra.mrb[0].mxu0 %v372
        %v595 = vpop.f32.mrb[0].mxu0
        %v596 = vadd.f32 0.0, %v595
        %v597 = vpop.f32.mrb[0].mxu0
        %598 = vmatprep.mubr.f32.mxu0 0.0
        %599 = vmatmul.mubr.f32.gmra.mrb[0].mxu0 %v375
        %v600 = vpop.f32.mrb[0].mxu0
        %v601 = vadd.f32 0.0, %v600
        %v602 = vpop.f32.mrb[0].mxu0
        %603 = vmatprep.mubr.f32.mxu0 0.0
        %604 = vmatmul.mubr.f32.gmra.mrb[0].mxu0 %v378
        %v605 = vpop.f32.mrb[0].mxu0
        %v606 = vadd.f32 0.0, %v605
        %v607 = vpop.f32.mrb[0].mxu0
        %608 = vdwg.mxu0
        %v609 = vadd.f32 %v250, %v451
        %v610 = vadd.f32 %v251, %v456
        %v611 = vadd.f32 %v252, %v461
        %v612 = vadd.f32 %v253, %v466
        %v613 = vadd.f32 %v254, %v471
        %v614 = vadd.f32 %v255, %v476
        %v615 = vadd.f32 %v256, %v481
        %v616 = vadd.f32 %v257, %v486
        %v617 = vadd.f32 %v258, %v491
        %v618 = vadd.f32 %v259, %v496
        %v619 = vadd.f32 %v260, %v501
        %v620 = vadd.f32 %v261, %v506
        %v621 = vadd.f32 %v262, %v511
        %v622 = vadd.f32 %v263, %v516
        %v623 = vadd.f32 %v264, %v521
        %v624 = vadd.f32 %v265, %v526
        %v625 = vadd.f32 %v266, %v531
        %v626 = vadd.f32 %v267, %v536
        %v627 = vadd.f32 %v268, %v541
        %v628 = vadd.f32 %v269, %v546
        %v629 = vadd.f32 %v270, %v551
        %v630 = vadd.f32 %v271, %v556
        %v631 = vadd.f32 %v272, %v561
        %v632 = vadd.f32 %v273, %v566
        %v633 = vadd.f32 %v274, %v571
        %v634 = vadd.f32 %v275, %v576
        %v635 = vadd.f32 %v276, %v581
        %v636 = vadd.f32 %v277, %v586
        %v637 = vadd.f32 %v278, %v591
        %v638 = vadd.f32 %v279, %v596
        %v639 = vadd.f32 %v280, %v601
        %v640 = vadd.f32 %v281, %v606
        %641 = vst [vmem:[#allocation2] sm:$0xff] %v609
        %642 = vst [vmem:[#allocation2 + $0x8] sm:$0xff] %v610
        %643 = vst [vmem:[#allocation2 + $0x10] sm:$0xff] %v611
        %644 = vst [vmem:[#allocation2 + $0x18] sm:$0xff] %v612
        %645 = vst [vmem:[#allocation2 + $0x20] sm:$0xff] %v613
        %646 = vst [vmem:[#allocation2 + $0x28] sm:$0xff] %v614
        %647 = vst [vmem:[#allocation2 + $0x30] sm:$0xff] %v615
        %648 = vst [vmem:[#allocation2 + $0x38] sm:$0xff] %v616
        %649 = vst [vmem:[#allocation2 + $0x40] sm:$0xff] %v617
        %650 = vst [vmem:[#allocation2 + $0x48] sm:$0xff] %v618
        %651 = vst [vmem:[#allocation2 + $0x50] sm:$0xff] %v619
        %652 = vst [vmem:[#allocation2 + $0x58] sm:$0xff] %v620
        %653 = vst [vmem:[#allocation2 + $0x60] sm:$0xff] %v621
        %654 = vst [vmem:[#allocation2 + $0x68] sm:$0xff] %v622
        %655 = vst [vmem:[#allocation2 + $0x70] sm:$0xff] %v623
        %656 = vst [vmem:[#allocation2 + $0x78] sm:$0xff] %v624
        %657 = vst [vmem:[#allocation2 + $0x80] sm:$0xff] %v625
        %658 = vst [vmem:[#allocation2 + $0x88] sm:$0xff] %v626
        %659 = vst [vmem:[#allocation2 + $0x90] sm:$0xff] %v627
        %660 = vst [vmem:[#allocation2 + $0x98] sm:$0xff] %v628
        %661 = vst [vmem:[#allocation2 + $0xa0] sm:$0xff] %v629
        %662 = vst [vmem:[#allocation2 + $0xa8] sm:$0xff] %v630
        %663 = vst [vmem:[#allocation2 + $0xb0] sm:$0xff] %v631
        %664 = vst [vmem:[#allocation2 + $0xb8] sm:$0xff] %v632
        %665 = vst [vmem:[#allocation2 + $0xc0] sm:$0xff] %v633
        %666 = vst [vmem:[#allocation2 + $0xc8] sm:$0xff] %v634
        %667 = vst [vmem:[#allocation2 + $0xd0] sm:$0xff] %v635
        %668 = vst [vmem:[#allocation2 + $0xd8] sm:$0xff] %v636
        %669 = vst [vmem:[#allocation2 + $0xe0] sm:$0xff] %v637
        %670 = vst [vmem:[#allocation2 + $0xe8] sm:$0xff] %v638
        %671 = vst [vmem:[#allocation2 + $0xf0] sm:$0xff] %v639
        %672 = vst [vmem:[#allocation2 + $0xf8] sm:$0xff] %v640
        %v673 = vld [vmem:[%s217 + $0x1] sm:$0xff]
        %v674 = vld [vmem:[%s217 + $0x9] sm:$0xff]
        %v675 = vld [vmem:[%s217 + $0x19] sm:$0xff]
        %v676 = vld [vmem:[%s217 + $0x21] sm:$0xff]
        %v677 = vld [vmem:[%s217 + $0x31] sm:$0xff]
        %v678 = vld [vmem:[%s217 + $0x39] sm:$0xff]
        %v679 = vld [vmem:[%s217 + $0x49] sm:$0xff]
        %v680 = vld [vmem:[%s217 + $0x51] sm:$0xff]
        %v681 = vld [vmem:[%s217 + $0x61] sm:$0xff]
        %v682 = vld [vmem:[%s217 + $0x69] sm:$0xff]
        %v683 = vld [vmem:[%s217 + $0x79] sm:$0xff]
        %v684 = vld [vmem:[%s217 + $0x81] sm:$0xff]
        %v685 = vld [vmem:[%s217 + $0x91] sm:$0xff]
        %v686 = vld [vmem:[%s217 + $0x99] sm:$0xff]
        %v687 = vld [vmem:[%s217 + $0xa9] sm:$0xff]
        %v688 = vld [vmem:[%s217 + $0xb1] sm:$0xff]
        %v689 = vld [vmem:[%s217 + $0xc1] sm:$0xff]
        %v690 = vld [vmem:[%s217 + $0xc9] sm:$0xff]
        %v691 = vld [vmem:[%s217 + $0xd9] sm:$0xff]
        %v692 = vld [vmem:[%s217 + $0xe1] sm:$0xff]
        %v693 = vld [vmem:[%s217 + $0xf1] sm:$0xff]
        %v694 = vld [vmem:[%s217 + $0xf9] sm:$0xff]
        %v695 = vld [vmem:[%s217 + $0x109] sm:$0xff]
        %v696 = vld [vmem:[%s217 + $0x111] sm:$0xff]
        %v697 = vld [vmem:[%s217 + $0x121] sm:$0xff]
        %v698 = vld [vmem:[%s217 + $0x129] sm:$0xff]
        %v699 = vld [vmem:[%s217 + $0x139] sm:$0xff]
        %v700 = vld [vmem:[%s217 + $0x141] sm:$0xff]
        %v701 = vld [vmem:[%s217 + $0x151] sm:$0xff]
        %v702 = vld [vmem:[%s217 + $0x159] sm:$0xff]
        %v703 = vld [vmem:[%s217 + $0x169] sm:$0xff]
        %v704 = vld [vmem:[%s217 + $0x171] sm:$0xff]
        %v705 = vld [vmem:[#allocation2] sm:$0xff]
        %v706 = vld [vmem:[#allocation2 + $0x8] sm:$0xff]
        %v707 = vld [vmem:[#allocation2 + $0x10] sm:$0xff]
        %v708 = vld [vmem:[#allocation2 + $0x18] sm:$0xff]
        %v709 = vld [vmem:[#allocation2 + $0x20] sm:$0xff]
        %v710 = vld [vmem:[#allocation2 + $0x28] sm:$0xff]
        %v711 = vld [vmem:[#allocation2 + $0x30] sm:$0xff]
        %v712 = vld [vmem:[#allocation2 + $0x38] sm:$0xff]
        %v713 = vld [vmem:[#allocation2 + $0x40] sm:$0xff]
        %v714 = vld [vmem:[#allocation2 + $0x48] sm:$0xff]
        %v715 = vld [vmem:[#allocation2 + $0x50] sm:$0xff]
        %v716 = vld [vmem:[#allocation2 + $0x58] sm:$0xff]
        %v717 = vld [vmem:[#allocation2 + $0x60] sm:$0xff]
        %v718 = vld [vmem:[#allocation2 + $0x68] sm:$0xff]
        %v719 = vld [vmem:[#allocation2 + $0x70] sm:$0xff]
        %v720 = vld [vmem:[#allocation2 + $0x78] sm:$0xff]
        %v721 = vld [vmem:[#allocation2 + $0x80] sm:$0xff]
        %v722 = vld [vmem:[#allocation2 + $0x88] sm:$0xff]
        %v723 = vld [vmem:[#allocation2 + $0x90] sm:$0xff]
        %v724 = vld [vmem:[#allocation2 + $0x98] sm:$0xff]
        %v725 = vld [vmem:[#allocation2 + $0xa0] sm:$0xff]
        %v726 = vld [vmem:[#allocation2 + $0xa8] sm:$0xff]
        %v727 = vld [vmem:[#allocation2 + $0xb0] sm:$0xff]
        %v728 = vld [vmem:[#allocation2 + $0xb8] sm:$0xff]
        %v729 = vld [vmem:[#allocation2 + $0xc0] sm:$0xff]
        %v730 = vld [vmem:[#allocation2 + $0xc8] sm:$0xff]
        %v731 = vld [vmem:[#allocation2 + $0xd0] sm:$0xff]
        %v732 = vld [vmem:[#allocation2 + $0xd8] sm:$0xff]
        %v733 = vld [vmem:[#allocation2 + $0xe0] sm:$0xff]
        %v734 = vld [vmem:[#allocation2 + $0xe8] sm:$0xff]
        %v735 = vld [vmem:[#allocation2 + $0xf0] sm:$0xff]
        %v736 = vld [vmem:[#allocation2 + $0xf8] sm:$0xff]
        %s737 = scalar_lea.vmem %s181, 4
        %v738 = vld [vmem:[%s737] sm:$0xf]
        %v740 = vsel %vm283, %v673, 0
        %v743 = vsel %vm283, %v674, 0
        %v746 = vsel %vm283, %v675, 0
        %v749 = vsel %vm283, %v676, 0
        %v752 = vsel %vm283, %v677, 0
        %v755 = vsel %vm283, %v678, 0
        %v758 = vsel %vm283, %v679, 0
        %v761 = vsel %vm283, %v680, 0
        %v764 = vsel %vm283, %v681, 0
        %v767 = vsel %vm283, %v682, 0
        %v770 = vsel %vm283, %v683, 0
        %v773 = vsel %vm283, %v684, 0
        %v776 = vsel %vm283, %v685, 0
        %v779 = vsel %vm283, %v686, 0
        %v782 = vsel %vm283, %v687, 0
        %v785 = vsel %vm283, %v688, 0
        %v788 = vsel %vm283, %v689, 0
        %v791 = vsel %vm283, %v690, 0
        %v794 = vsel %vm283, %v691, 0
        %v797 = vsel %vm283, %v692, 0
        %v800 = vsel %vm283, %v693, 0
        %v803 = vsel %vm283, %v694, 0
        %v806 = vsel %vm283, %v695, 0
        %v809 = vsel %vm283, %v696, 0
        %v812 = vsel %vm283, %v697, 0
        %v815 = vsel %vm283, %v698, 0
        %v818 = vsel %vm283, %v699, 0
        %v821 = vsel %vm283, %v700, 0
        %v824 = vsel %vm283, %v701, 0
        %v827 = vsel %vm283, %v702, 0
        %v830 = vsel %vm283, %v703, 0
        %v833 = vsel %vm283, %v704, 0
        %v836 = vsel %vm380, %v738, 0
        %838 = vmatprep.subr.mxu0 0.0
        %839 = vmatpush1.msra.mxu0 %v836
        %840 = vmatprep.subr.mxu0 0.0
        %841 = vmatpush1.msra.mxu0 0.0
        %842 = vmatprep.subr.mxu0 0.0
        %843 = vmatpush1.msra.mxu0 0.0
        %844 = vmatprep.subr.mxu0 0.0
        %845 = vmatpush1.msra.mxu0 0.0
        %846 = vmatprep.subr.mxu0 0.0
        %847 = vmatpush1.msra.mxu0 0.0
        %848 = vmatprep.subr.mxu0 0.0
        %849 = vmatpush1.msra.mxu0 0.0
        %850 = vmatprep.subr.mxu0 0.0
        %851 = vmatpush1.msra.mxu0 0.0
        %852 = vmatprep.subr.mxu0 0.0
        %853 = vmatpush1.msra.mxu0 0.0
        %854 = vmatprep.subr.mxu0 0.0
        %855 = vmatpush1.msra.mxu0 0.0
        %856 = vmatprep.subr.mxu0 0.0
        %857 = vmatpush1.msra.mxu0 0.0
        %858 = vmatprep.subr.mxu0 0.0
        %859 = vmatpush1.msra.mxu0 0.0
        %860 = vmatprep.subr.mxu0 0.0
        %861 = vmatpush1.msra.mxu0 0.0
        %862 = vmatprep.subr.mxu0 0.0
        %863 = vmatpush1.msra.mxu0 0.0
        %864 = vmatprep.subr.mxu0 0.0
        %865 = vmatpush1.msra.mxu0 0.0
        %866 = vmatprep.subr.mxu0 0.0
        %867 = vmatpush1.msra.mxu0 0.0
        %868 = vmatprep.subr.mxu0 0.0
        %869 = vmatpush1.msra.mxu0 0.0
        %870 = vmatprep.subr.mxu0 0.0
        %871 = vmatpush1.msra.mxu0 0.0
        %872 = vmatprep.subr.mxu0 0.0
        %873 = vmatpush1.msra.mxu0 0.0
        %874 = vmatprep.subr.mxu0 0.0
        %875 = vmatpush1.msra.mxu0 0.0
        %876 = vmatprep.subr.mxu0 0.0
        %877 = vmatpush1.msra.mxu0 0.0
        %878 = vmatprep.subr.mxu0 0.0
        %879 = vmatpush1.msra.mxu0 0.0
        %880 = vmatprep.subr.mxu0 0.0
        %881 = vmatpush1.msra.mxu0 0.0
        %882 = vmatprep.subr.mxu0 0.0
        %883 = vmatpush1.msra.mxu0 0.0
        %884 = vmatprep.subr.mxu0 0.0
        %885 = vmatpush1.msra.mxu0 0.0
        %886 = vmatprep.subr.mxu0 0.0
        %887 = vmatpush1.msra.mxu0 0.0
        %888 = vmatprep.subr.mxu0 0.0
        %889 = vmatpush1.msra.mxu0 0.0
        %890 = vmatprep.subr.mxu0 0.0
        %891 = vmatpush1.msra.mxu0 0.0
        %892 = vmatprep.subr.mxu0 0.0
        %893 = vmatpush1.msra.mxu0 0.0
        %894 = vmatprep.subr.mxu0 0.0
        %895 = vmatpush1.msra.mxu0 0.0
        %896 = vmatprep.subr.mxu0 0.0
        %897 = vmatpush1.msra.mxu0 0.0
        %898 = vmatprep.subr.mxu0 0.0
        %899 = vmatpush1.msra.mxu0 0.0
        %900 = vmatprep.subr.mxu0 0.0
        %901 = vmatpush1.msra.mxu0 0.0
        %902 = vmatprep.mubr.f32.mxu0 0.0
        %903 = vmatmul.mubr.f32.gmra.mrb[0].mxu0 %v740
        %v904 = vpop.f32.mrb[0].mxu0
        %v905 = vadd.f32 0.0, %v904
        %v906 = vpop.f32.mrb[0].mxu0
        %907 = vmatprep.mubr.f32.mxu0 0.0
        %908 = vmatmul.mubr.f32.gmra.mrb[0].mxu0 %v743
        %v909 = vpop.f32.mrb[0].mxu0
        %v910 = vadd.f32 0.0, %v909
        %v911 = vpop.f32.mrb[0].mxu0
        %912 = vmatprep.mubr.f32.mxu0 0.0
        %913 = vmatmul.mubr.f32.gmra.mrb[0].mxu0 %v746
        %v914 = vpop.f32.mrb[0].mxu0
        %v915 = vadd.f32 0.0, %v914
        %v916 = vpop.f32.mrb[0].mxu0
        %917 = vmatprep.mubr.f32.mxu0 0.0
        %918 = vmatmul.mubr.f32.gmra.mrb[0].mxu0 %v749
        %v919 = vpop.f32.mrb[0].mxu0
        %v920 = vadd.f32 0.0, %v919
        %v921 = vpop.f32.mrb[0].mxu0
        %922 = vmatprep.mubr.f32.mxu0 0.0
        %923 = vmatmul.mubr.f32.gmra.mrb[0].mxu0 %v752
        %v924 = vpop.f32.mrb[0].mxu0
        %v925 = vadd.f32 0.0, %v924
        %v926 = vpop.f32.mrb[0].mxu0
        %927 = vmatprep.mubr.f32.mxu0 0.0
        %928 = vmatmul.mubr.f32.gmra.mrb[0].mxu0 %v755
        %v929 = vpop.f32.mrb[0].mxu0
        %v930 = vadd.f32 0.0, %v929
        %v931 = vpop.f32.mrb[0].mxu0
        %932 = vmatprep.mubr.f32.mxu0 0.0
        %933 = vmatmul.mubr.f32.gmra.mrb[0].mxu0 %v758
        %v934 = vpop.f32.mrb[0].mxu0
        %v935 = vadd.f32 0.0, %v934
        %v936 = vpop.f32.mrb[0].mxu0
        %937 = vmatprep.mubr.f32.mxu0 0.0
        %938 = vmatmul.mubr.f32.gmra.mrb[0].mxu0 %v761
        %v939 = vpop.f32.mrb[0].mxu0
        %v940 = vadd.f32 0.0, %v939
        %v941 = vpop.f32.mrb[0].mxu0
        %942 = vmatprep.mubr.f32.mxu0 0.0
        %943 = vmatmul.mubr.f32.gmra.mrb[0].mxu0 %v764
        %v944 = vpop.f32.mrb[0].mxu0
        %v945 = vadd.f32 0.0, %v944
        %v946 = vpop.f32.mrb[0].mxu0
        %947 = vmatprep.mubr.f32.mxu0 0.0
        %948 = vmatmul.mubr.f32.gmra.mrb[0].mxu0 %v767
        %v949 = vpop.f32.mrb[0].mxu0
        %v950 = vadd.f32 0.0, %v949
        %v951 = vpop.f32.mrb[0].mxu0
        %952 = vmatprep.mubr.f32.mxu0 0.0
        %953 = vmatmul.mubr.f32.gmra.mrb[0].mxu0 %v770
        %v954 = vpop.f32.mrb[0].mxu0
        %v955 = vadd.f32 0.0, %v954
        %v956 = vpop.f32.mrb[0].mxu0
        %957 = vmatprep.mubr.f32.mxu0 0.0
        %958 = vmatmul.mubr.f32.gmra.mrb[0].mxu0 %v773
        %v959 = vpop.f32.mrb[0].mxu0
        %v960 = vadd.f32 0.0, %v959
        %v961 = vpop.f32.mrb[0].mxu0
        %962 = vmatprep.mubr.f32.mxu0 0.0
        %963 = vmatmul.mubr.f32.gmra.mrb[0].mxu0 %v776
        %v964 = vpop.f32.mrb[0].mxu0
        %v965 = vadd.f32 0.0, %v964
        %v966 = vpop.f32.mrb[0].mxu0
        %967 = vmatprep.mubr.f32.mxu0 0.0
        %968 = vmatmul.mubr.f32.gmra.mrb[0].mxu0 %v779
        %v969 = vpop.f32.mrb[0].mxu0
        %v970 = vadd.f32 0.0, %v969
        %v971 = vpop.f32.mrb[0].mxu0
        %972 = vmatprep.mubr.f32.mxu0 0.0
        %973 = vmatmul.mubr.f32.gmra.mrb[0].mxu0 %v782
        %v974 = vpop.f32.mrb[0].mxu0
        %v975 = vadd.f32 0.0, %v974
        %v976 = vpop.f32.mrb[0].mxu0
        %977 = vmatprep.mubr.f32.mxu0 0.0
        %978 = vmatmul.mubr.f32.gmra.mrb[0].mxu0 %v785
        %v979 = vpop.f32.mrb[0].mxu0
        %v980 = vadd.f32 0.0, %v979
        %v981 = vpop.f32.mrb[0].mxu0
        %982 = vmatprep.mubr.f32.mxu0 0.0
        %983 = vmatmul.mubr.f32.gmra.mrb[0].mxu0 %v788
        %v984 = vpop.f32.mrb[0].mxu0
        %v985 = vadd.f32 0.0, %v984
        %v986 = vpop.f32.mrb[0].mxu0
        %987 = vmatprep.mubr.f32.mxu0 0.0
        %988 = vmatmul.mubr.f32.gmra.mrb[0].mxu0 %v791
        %v989 = vpop.f32.mrb[0].mxu0
        %v990 = vadd.f32 0.0, %v989
        %v991 = vpop.f32.mrb[0].mxu0
        %992 = vmatprep.mubr.f32.mxu0 0.0
        %993 = vmatmul.mubr.f32.gmra.mrb[0].mxu0 %v794
        %v994 = vpop.f32.mrb[0].mxu0
        %v995 = vadd.f32 0.0, %v994
        %v996 = vpop.f32.mrb[0].mxu0
        %997 = vmatprep.mubr.f32.mxu0 0.0
        %998 = vmatmul.mubr.f32.gmra.mrb[0].mxu0 %v797
        %v999 = vpop.f32.mrb[0].mxu0
        %v1000 = vadd.f32 0.0, %v999
        %v1001 = vpop.f32.mrb[0].mxu0
        %1002 = vmatprep.mubr.f32.mxu0 0.0
        %1003 = vmatmul.mubr.f32.gmra.mrb[0].mxu0 %v800
        %v1004 = vpop.f32.mrb[0].mxu0
        %v1005 = vadd.f32 0.0, %v1004
        %v1006 = vpop.f32.mrb[0].mxu0
        %1007 = vmatprep.mubr.f32.mxu0 0.0
        %1008 = vmatmul.mubr.f32.gmra.mrb[0].mxu0 %v803
        %v1009 = vpop.f32.mrb[0].mxu0
        %v1010 = vadd.f32 0.0, %v1009
        %v1011 = vpop.f32.mrb[0].mxu0
        %1012 = vmatprep.mubr.f32.mxu0 0.0
        %1013 = vmatmul.mubr.f32.gmra.mrb[0].mxu0 %v806
        %v1014 = vpop.f32.mrb[0].mxu0
        %v1015 = vadd.f32 0.0, %v1014
        %v1016 = vpop.f32.mrb[0].mxu0
        %1017 = vmatprep.mubr.f32.mxu0 0.0
        %1018 = vmatmul.mubr.f32.gmra.mrb[0].mxu0 %v809
        %v1019 = vpop.f32.mrb[0].mxu0
        %v1020 = vadd.f32 0.0, %v1019
        %v1021 = vpop.f32.mrb[0].mxu0
        %1022 = vmatprep.mubr.f32.mxu0 0.0
        %1023 = vmatmul.mubr.f32.gmra.mrb[0].mxu0 %v812
        %v1024 = vpop.f32.mrb[0].mxu0
        %v1025 = vadd.f32 0.0, %v1024
        %v1026 = vpop.f32.mrb[0].mxu0
        %1027 = vmatprep.mubr.f32.mxu0 0.0
        %1028 = vmatmul.mubr.f32.gmra.mrb[0].mxu0 %v815
        %v1029 = vpop.f32.mrb[0].mxu0
        %v1030 = vadd.f32 0.0, %v1029
        %v1031 = vpop.f32.mrb[0].mxu0
        %1032 = vmatprep.mubr.f32.mxu0 0.0
        %1033 = vmatmul.mubr.f32.gmra.mrb[0].mxu0 %v818
        %v1034 = vpop.f32.mrb[0].mxu0
        %v1035 = vadd.f32 0.0, %v1034
        %v1036 = vpop.f32.mrb[0].mxu0
        %1037 = vmatprep.mubr.f32.mxu0 0.0
        %1038 = vmatmul.mubr.f32.gmra.mrb[0].mxu0 %v821
        %v1039 = vpop.f32.mrb[0].mxu0
        %v1040 = vadd.f32 0.0, %v1039
        %v1041 = vpop.f32.mrb[0].mxu0
        %1042 = vmatprep.mubr.f32.mxu0 0.0
        %1043 = vmatmul.mubr.f32.gmra.mrb[0].mxu0 %v824
        %v1044 = vpop.f32.mrb[0].mxu0
        %v1045 = vadd.f32 0.0, %v1044
        %v1046 = vpop.f32.mrb[0].mxu0
        %1047 = vmatprep.mubr.f32.mxu0 0.0
        %1048 = vmatmul.mubr.f32.gmra.mrb[0].mxu0 %v827
        %v1049 = vpop.f32.mrb[0].mxu0
        %v1050 = vadd.f32 0.0, %v1049
        %v1051 = vpop.f32.mrb[0].mxu0
        %1052 = vmatprep.mubr.f32.mxu0 0.0
        %1053 = vmatmul.mubr.f32.gmra.mrb[0].mxu0 %v830
        %v1054 = vpop.f32.mrb[0].mxu0
        %v1055 = vadd.f32 0.0, %v1054
        %v1056 = vpop.f32.mrb[0].mxu0
        %1057 = vmatprep.mubr.f32.mxu0 0.0
        %1058 = vmatmul.mubr.f32.gmra.mrb[0].mxu0 %v833
        %v1059 = vpop.f32.mrb[0].mxu0
        %v1060 = vadd.f32 0.0, %v1059
        %v1061 = vpop.f32.mrb[0].mxu0
        %1062 = vdwg.mxu0
        %v1063 = vadd.f32 %v705, %v905
        %v1064 = vadd.f32 %v706, %v910
        %v1065 = vadd.f32 %v707, %v915
        %v1066 = vadd.f32 %v708, %v920
        %v1067 = vadd.f32 %v709, %v925
        %v1068 = vadd.f32 %v710, %v930
        %v1069 = vadd.f32 %v711, %v935
        %v1070 = vadd.f32 %v712, %v940
        %v1071 = vadd.f32 %v713, %v945
        %v1072 = vadd.f32 %v714, %v950
        %v1073 = vadd.f32 %v715, %v955
        %v1074 = vadd.f32 %v716, %v960
        %v1075 = vadd.f32 %v717, %v965
        %v1076 = vadd.f32 %v718, %v970
        %v1077 = vadd.f32 %v719, %v975
        %v1078 = vadd.f32 %v720, %v980
        %v1079 = vadd.f32 %v721, %v985
        %v1080 = vadd.f32 %v722, %v990
        %v1081 = vadd.f32 %v723, %v995
        %v1082 = vadd.f32 %v724, %v1000
        %v1083 = vadd.f32 %v725, %v1005
        %v1084 = vadd.f32 %v726, %v1010
        %v1085 = vadd.f32 %v727, %v1015
        %v1086 = vadd.f32 %v728, %v1020
        %v1087 = vadd.f32 %v729, %v1025
        %v1088 = vadd.f32 %v730, %v1030
        %v1089 = vadd.f32 %v731, %v1035
        %v1090 = vadd.f32 %v732, %v1040
        %v1091 = vadd.f32 %v733, %v1045
        %v1092 = vadd.f32 %v734, %v1050
        %v1093 = vadd.f32 %v735, %v1055
        %v1094 = vadd.f32 %v736, %v1060
        %1095 = vst [vmem:[#allocation2] sm:$0xff] %v1063
        %1096 = vst [vmem:[#allocation2 + $0x8] sm:$0xff] %v1064
        %1097 = vst [vmem:[#allocation2 + $0x10] sm:$0xff] %v1065
        %1098 = vst [vmem:[#allocation2 + $0x18] sm:$0xff] %v1066
        %1099 = vst [vmem:[#allocation2 + $0x20] sm:$0xff] %v1067
        %1100 = vst [vmem:[#allocation2 + $0x28] sm:$0xff] %v1068
        %1101 = vst [vmem:[#allocation2 + $0x30] sm:$0xff] %v1069
        %1102 = vst [vmem:[#allocation2 + $0x38] sm:$0xff] %v1070
        %1103 = vst [vmem:[#allocation2 + $0x40] sm:$0xff] %v1071
        %1104 = vst [vmem:[#allocation2 + $0x48] sm:$0xff] %v1072
        %1105 = vst [vmem:[#allocation2 + $0x50] sm:$0xff] %v1073
        %1106 = vst [vmem:[#allocation2 + $0x58] sm:$0xff] %v1074
        %1107 = vst [vmem:[#allocation2 + $0x60] sm:$0xff] %v1075
        %1108 = vst [vmem:[#allocation2 + $0x68] sm:$0xff] %v1076
        %1109 = vst [vmem:[#allocation2 + $0x70] sm:$0xff] %v1077
        %1110 = vst [vmem:[#allocation2 + $0x78] sm:$0xff] %v1078
        %1111 = vst [vmem:[#allocation2 + $0x80] sm:$0xff] %v1079
        %1112 = vst [vmem:[#allocation2 + $0x88] sm:$0xff] %v1080
        %1113 = vst [vmem:[#allocation2 + $0x90] sm:$0xff] %v1081
        %1114 = vst [vmem:[#allocation2 + $0x98] sm:$0xff] %v1082
        %1115 = vst [vmem:[#allocation2 + $0xa0] sm:$0xff] %v1083
        %1116 = vst [vmem:[#allocation2 + $0xa8] sm:$0xff] %v1084
        %1117 = vst [vmem:[#allocation2 + $0xb0] sm:$0xff] %v1085
        %1118 = vst [vmem:[#allocation2 + $0xb8] sm:$0xff] %v1086
        %1119 = vst [vmem:[#allocation2 + $0xc0] sm:$0xff] %v1087
        %1120 = vst [vmem:[#allocation2 + $0xc8] sm:$0xff] %v1088
        %1121 = vst [vmem:[#allocation2 + $0xd0] sm:$0xff] %v1089
        %1122 = vst [vmem:[#allocation2 + $0xd8] sm:$0xff] %v1090
        %1123 = vst [vmem:[#allocation2 + $0xe0] sm:$0xff] %v1091
        %1124 = vst [vmem:[#allocation2 + $0xe8] sm:$0xff] %v1092
        %1125 = vst [vmem:[#allocation2 + $0xf0] sm:$0xff] %v1093
        %1126 = vst [vmem:[#allocation2 + $0xf8] sm:$0xff] %v1094
        %v1127 = vld [vmem:[%s217 + $0x2] sm:$0xff]
        %v1128 = vld [vmem:[%s217 + $0xa] sm:$0xff]
        %v1129 = vld [vmem:[%s217 + $0x1a] sm:$0xff]
        %v1130 = vld [vmem:[%s217 + $0x22] sm:$0xff]
        %v1131 = vld [vmem:[%s217 + $0x32] sm:$0xff]
        %v1132 = vld [vmem:[%s217 + $0x3a] sm:$0xff]
        %v1133 = vld [vmem:[%s217 + $0x4a] sm:$0xff]
        %v1134 = vld [vmem:[%s217 + $0x52] sm:$0xff]
        %v1135 = vld [vmem:[%s217 + $0x62] sm:$0xff]
        %v1136 = vld [vmem:[%s217 + $0x6a] sm:$0xff]
        %v1137 = vld [vmem:[%s217 + $0x7a] sm:$0xff]
        %v1138 = vld [vmem:[%s217 + $0x82] sm:$0xff]
        %v1139 = vld [vmem:[%s217 + $0x92] sm:$0xff]
        %v1140 = vld [vmem:[%s217 + $0x9a] sm:$0xff]
        %v1141 = vld [vmem:[%s217 + $0xaa] sm:$0xff]
        %v1142 = vld [vmem:[%s217 + $0xb2] sm:$0xff]
        %v1143 = vld [vmem:[%s217 + $0xc2] sm:$0xff]
        %v1144 = vld [vmem:[%s217 + $0xca] sm:$0xff]
        %v1145 = vld [vmem:[%s217 + $0xda] sm:$0xff]
        %v1146 = vld [vmem:[%s217 + $0xe2] sm:$0xff]
        %v1147 = vld [vmem:[%s217 + $0xf2] sm:$0xff]
        %v1148 = vld [vmem:[%s217 + $0xfa] sm:$0xff]
        %v1149 = vld [vmem:[%s217 + $0x10a] sm:$0xff]
        %v1150 = vld [vmem:[%s217 + $0x112] sm:$0xff]
        %v1151 = vld [vmem:[%s217 + $0x122] sm:$0xff]
        %v1152 = vld [vmem:[%s217 + $0x12a] sm:$0xff]
        %v1153 = vld [vmem:[%s217 + $0x13a] sm:$0xff]
        %v1154 = vld [vmem:[%s217 + $0x142] sm:$0xff]
        %v1155 = vld [vmem:[%s217 + $0x152] sm:$0xff]
        %v1156 = vld [vmem:[%s217 + $0x15a] sm:$0xff]
        %v1157 = vld [vmem:[%s217 + $0x16a] sm:$0xff]
        %v1158 = vld [vmem:[%s217 + $0x172] sm:$0xff]
        %v1159 = vld [vmem:[#allocation2] sm:$0xff]
        %v1160 = vld [vmem:[#allocation2 + $0x8] sm:$0xff]
        %v1161 = vld [vmem:[#allocation2 + $0x10] sm:$0xff]
        %v1162 = vld [vmem:[#allocation2 + $0x18] sm:$0xff]
        %v1163 = vld [vmem:[#allocation2 + $0x20] sm:$0xff]
        %v1164 = vld [vmem:[#allocation2 + $0x28] sm:$0xff]
        %v1165 = vld [vmem:[#allocation2 + $0x30] sm:$0xff]
        %v1166 = vld [vmem:[#allocation2 + $0x38] sm:$0xff]
        %v1167 = vld [vmem:[#allocation2 + $0x40] sm:$0xff]
        %v1168 = vld [vmem:[#allocation2 + $0x48] sm:$0xff]
        %v1169 = vld [vmem:[#allocation2 + $0x50] sm:$0xff]
        %v1170 = vld [vmem:[#allocation2 + $0x58] sm:$0xff]
        %v1171 = vld [vmem:[#allocation2 + $0x60] sm:$0xff]
        %v1172 = vld [vmem:[#allocation2 + $0x68] sm:$0xff]
        %v1173 = vld [vmem:[#allocation2 + $0x70] sm:$0xff]
        %v1174 = vld [vmem:[#allocation2 + $0x78] sm:$0xff]
        %v1175 = vld [vmem:[#allocation2 + $0x80] sm:$0xff]
        %v1176 = vld [vmem:[#allocation2 + $0x88] sm:$0xff]
        %v1177 = vld [vmem:[#allocation2 + $0x90] sm:$0xff]
        %v1178 = vld [vmem:[#allocation2 + $0x98] sm:$0xff]
        %v1179 = vld [vmem:[#allocation2 + $0xa0] sm:$0xff]
        %v1180 = vld [vmem:[#allocation2 + $0xa8] sm:$0xff]
        %v1181 = vld [vmem:[#allocation2 + $0xb0] sm:$0xff]
        %v1182 = vld [vmem:[#allocation2 + $0xb8] sm:$0xff]
        %v1183 = vld [vmem:[#allocation2 + $0xc0] sm:$0xff]
        %v1184 = vld [vmem:[#allocation2 + $0xc8] sm:$0xff]
        %v1185 = vld [vmem:[#allocation2 + $0xd0] sm:$0xff]
        %v1186 = vld [vmem:[#allocation2 + $0xd8] sm:$0xff]
        %v1187 = vld [vmem:[#allocation2 + $0xe0] sm:$0xff]
        %v1188 = vld [vmem:[#allocation2 + $0xe8] sm:$0xff]
        %v1189 = vld [vmem:[#allocation2 + $0xf0] sm:$0xff]
        %v1190 = vld [vmem:[#allocation2 + $0xf8] sm:$0xff]
        %s1191 = scalar_lea.vmem %s181, 8
        %v1192 = vld [vmem:[%s1191] sm:$0xf]
        %v1194 = vsel %vm283, %v1127, 0
        %v1197 = vsel %vm283, %v1128, 0
        %v1200 = vsel %vm283, %v1129, 0
        %v1203 = vsel %vm283, %v1130, 0
        %v1206 = vsel %vm283, %v1131, 0
        %v1209 = vsel %vm283, %v1132, 0
        %v1212 = vsel %vm283, %v1133, 0
        %v1215 = vsel %vm283, %v1134, 0
        %v1218 = vsel %vm283, %v1135, 0
        %v1221 = vsel %vm283, %v1136, 0
        %v1224 = vsel %vm283, %v1137, 0
        %v1227 = vsel %vm283, %v1138, 0
        %v1230 = vsel %vm283, %v1139, 0
        %v1233 = vsel %vm283, %v1140, 0
        %v1236 = vsel %vm283, %v1141, 0
        %v1239 = vsel %vm283, %v1142, 0
        %v1242 = vsel %vm283, %v1143, 0
        %v1245 = vsel %vm283, %v1144, 0
        %v1248 = vsel %vm283, %v1145, 0
        %v1251 = vsel %vm283, %v1146, 0
        %v1254 = vsel %vm283, %v1147, 0
        %v1257 = vsel %vm283, %v1148, 0
        %v1260 = vsel %vm283, %v1149, 0
        %v1263 = vsel %vm283, %v1150, 0
        %v1266 = vsel %vm283, %v1151, 0
        %v1269 = vsel %vm283, %v1152, 0
        %v1272 = vsel %vm283, %v1153, 0
        %v1275 = vsel %vm283, %v1154, 0
        %v1278 = vsel %vm283, %v1155, 0
        %v1281 = vsel %vm283, %v1156, 0
        %v1284 = vsel %vm283, %v1157, 0
        %v1287 = vsel %vm283, %v1158, 0
        %v1290 = vsel %vm380, %v1192, 0
        %1292 = vmatprep.subr.mxu0 0.0
        %1293 = vmatpush1.msra.mxu0 %v1290
        %1294 = vmatprep.subr.mxu0 0.0
        %1295 = vmatpush1.msra.mxu0 0.0
        %1296 = vmatprep.subr.mxu0 0.0
        %1297 = vmatpush1.msra.mxu0 0.0
        %1298 = vmatprep.subr.mxu0 0.0
        %1299 = vmatpush1.msra.mxu0 0.0
        %1300 = vmatprep.subr.mxu0 0.0
        %1301 = vmatpush1.msra.mxu0 0.0
        %1302 = vmatprep.subr.mxu0 0.0
        %1303 = vmatpush1.msra.mxu0 0.0
        %1304 = vmatprep.subr.mxu0 0.0
        %1305 = vmatpush1.msra.mxu0 0.0
        %1306 = vmatprep.subr.mxu0 0.0
        %1307 = vmatpush1.msra.mxu0 0.0
        %1308 = vmatprep.subr.mxu0 0.0
        %1309 = vmatpush1.msra.mxu0 0.0
        %1310 = vmatprep.subr.mxu0 0.0
        %1311 = vmatpush1.msra.mxu0 0.0
        %1312 = vmatprep.subr.mxu0 0.0
        %1313 = vmatpush1.msra.mxu0 0.0
        %1314 = vmatprep.subr.mxu0 0.0
        %1315 = vmatpush1.msra.mxu0 0.0
        %1316 = vmatprep.subr.mxu0 0.0
        %1317 = vmatpush1.msra.mxu0 0.0
        %1318 = vmatprep.subr.mxu0 0.0
        %1319 = vmatpush1.msra.mxu0 0.0
        %1320 = vmatprep.subr.mxu0 0.0
        %1321 = vmatpush1.msra.mxu0 0.0
        %1322 = vmatprep.subr.mxu0 0.0
        %1323 = vmatpush1.msra.mxu0 0.0
        %1324 = vmatprep.subr.mxu0 0.0
        %1325 = vmatpush1.msra.mxu0 0.0
        %1326 = vmatprep.subr.mxu0 0.0
        %1327 = vmatpush1.msra.mxu0 0.0
        %1328 = vmatprep.subr.mxu0 0.0
        %1329 = vmatpush1.msra.mxu0 0.0
        %1330 = vmatprep.subr.mxu0 0.0
        %1331 = vmatpush1.msra.mxu0 0.0
        %1332 = vmatprep.subr.mxu0 0.0
        %1333 = vmatpush1.msra.mxu0 0.0
        %1334 = vmatprep.subr.mxu0 0.0
        %1335 = vmatpush1.msra.mxu0 0.0
        %1336 = vmatprep.subr.mxu0 0.0
        %1337 = vmatpush1.msra.mxu0 0.0
        %1338 = vmatprep.subr.mxu0 0.0
        %1339 = vmatpush1.msra.mxu0 0.0
        %1340 = vmatprep.subr.mxu0 0.0
        %1341 = vmatpush1.msra.mxu0 0.0
        %1342 = vmatprep.subr.mxu0 0.0
        %1343 = vmatpush1.msra.mxu0 0.0
        %1344 = vmatprep.subr.mxu0 0.0
        %1345 = vmatpush1.msra.mxu0 0.0
        %1346 = vmatprep.subr.mxu0 0.0
        %1347 = vmatpush1.msra.mxu0 0.0
        %1348 = vmatprep.subr.mxu0 0.0
        %1349 = vmatpush1.msra.mxu0 0.0
        %1350 = vmatprep.subr.mxu0 0.0
        %1351 = vmatpush1.msra.mxu0 0.0
        %1352 = vmatprep.subr.mxu0 0.0
        %1353 = vmatpush1.msra.mxu0 0.0
        %1354 = vmatprep.subr.mxu0 0.0
        %1355 = vmatpush1.msra.mxu0 0.0
        %1356 = vmatprep.mubr.f32.mxu0 0.0
        %1357 = vmatmul.mubr.f32.gmra.mrb[0].mxu0 %v1194
        %v1358 = vpop.f32.mrb[0].mxu0
        %v1359 = vadd.f32 0.0, %v1358
        %v1360 = vpop.f32.mrb[0].mxu0
        %1361 = vmatprep.mubr.f32.mxu0 0.0
        %1362 = vmatmul.mubr.f32.gmra.mrb[0].mxu0 %v1197
        %v1363 = vpop.f32.mrb[0].mxu0
        %v1364 = vadd.f32 0.0, %v1363
        %v1365 = vpop.f32.mrb[0].mxu0
        %1366 = vmatprep.mubr.f32.mxu0 0.0
        %1367 = vmatmul.mubr.f32.gmra.mrb[0].mxu0 %v1200
        %v1368 = vpop.f32.mrb[0].mxu0
        %v1369 = vadd.f32 0.0, %v1368
        %v1370 = vpop.f32.mrb[0].mxu0
        %1371 = vmatprep.mubr.f32.mxu0 0.0
        %1372 = vmatmul.mubr.f32.gmra.mrb[0].mxu0 %v1203
        %v1373 = vpop.f32.mrb[0].mxu0
        %v1374 = vadd.f32 0.0, %v1373
        %v1375 = vpop.f32.mrb[0].mxu0
        %1376 = vmatprep.mubr.f32.mxu0 0.0
        %1377 = vmatmul.mubr.f32.gmra.mrb[0].mxu0 %v1206
        %v1378 = vpop.f32.mrb[0].mxu0
        %v1379 = vadd.f32 0.0, %v1378
        %v1380 = vpop.f32.mrb[0].mxu0
        %1381 = vmatprep.mubr.f32.mxu0 0.0
        %1382 = vmatmul.mubr.f32.gmra.mrb[0].mxu0 %v1209
        %v1383 = vpop.f32.mrb[0].mxu0
        %v1384 = vadd.f32 0.0, %v1383
        %v1385 = vpop.f32.mrb[0].mxu0
        %1386 = vmatprep.mubr.f32.mxu0 0.0
        %1387 = vmatmul.mubr.f32.gmra.mrb[0].mxu0 %v1212
        %v1388 = vpop.f32.mrb[0].mxu0
        %v1389 = vadd.f32 0.0, %v1388
        %v1390 = vpop.f32.mrb[0].mxu0
        %1391 = vmatprep.mubr.f32.mxu0 0.0
        %1392 = vmatmul.mubr.f32.gmra.mrb[0].mxu0 %v1215
        %v1393 = vpop.f32.mrb[0].mxu0
        %v1394 = vadd.f32 0.0, %v1393
        %v1395 = vpop.f32.mrb[0].mxu0
        %1396 = vmatprep.mubr.f32.mxu0 0.0
        %1397 = vmatmul.mubr.f32.gmra.mrb[0].mxu0 %v1218
        %v1398 = vpop.f32.mrb[0].mxu0
        %v1399 = vadd.f32 0.0, %v1398
        %v1400 = vpop.f32.mrb[0].mxu0
        %1401 = vmatprep.mubr.f32.mxu0 0.0
        %1402 = vmatmul.mubr.f32.gmra.mrb[0].mxu0 %v1221
        %v1403 = vpop.f32.mrb[0].mxu0
        %v1404 = vadd.f32 0.0, %v1403
        %v1405 = vpop.f32.mrb[0].mxu0
        %1406 = vmatprep.mubr.f32.mxu0 0.0
        %1407 = vmatmul.mubr.f32.gmra.mrb[0].mxu0 %v1224
        %v1408 = vpop.f32.mrb[0].mxu0
        %v1409 = vadd.f32 0.0, %v1408
        %v1410 = vpop.f32.mrb[0].mxu0
        %1411 = vmatprep.mubr.f32.mxu0 0.0
        %1412 = vmatmul.mubr.f32.gmra.mrb[0].mxu0 %v1227
        %v1413 = vpop.f32.mrb[0].mxu0
        %v1414 = vadd.f32 0.0, %v1413
        %v1415 = vpop.f32.mrb[0].mxu0
        %1416 = vmatprep.mubr.f32.mxu0 0.0
        %1417 = vmatmul.mubr.f32.gmra.mrb[0].mxu0 %v1230
        %v1418 = vpop.f32.mrb[0].mxu0
        %v1419 = vadd.f32 0.0, %v1418
        %v1420 = vpop.f32.mrb[0].mxu0
        %1421 = vmatprep.mubr.f32.mxu0 0.0
        %1422 = vmatmul.mubr.f32.gmra.mrb[0].mxu0 %v1233
        %v1423 = vpop.f32.mrb[0].mxu0
        %v1424 = vadd.f32 0.0, %v1423
        %v1425 = vpop.f32.mrb[0].mxu0
        %1426 = vmatprep.mubr.f32.mxu0 0.0
        %1427 = vmatmul.mubr.f32.gmra.mrb[0].mxu0 %v1236
        %v1428 = vpop.f32.mrb[0].mxu0
        %v1429 = vadd.f32 0.0, %v1428
        %v1430 = vpop.f32.mrb[0].mxu0
        %1431 = vmatprep.mubr.f32.mxu0 0.0
        %1432 = vmatmul.mubr.f32.gmra.mrb[0].mxu0 %v1239
        %v1433 = vpop.f32.mrb[0].mxu0
        %v1434 = vadd.f32 0.0, %v1433
        %v1435 = vpop.f32.mrb[0].mxu0
        %1436 = vmatprep.mubr.f32.mxu0 0.0
        %1437 = vmatmul.mubr.f32.gmra.mrb[0].mxu0 %v1242
        %v1438 = vpop.f32.mrb[0].mxu0
        %v1439 = vadd.f32 0.0, %v1438
        %v1440 = vpop.f32.mrb[0].mxu0
        %1441 = vmatprep.mubr.f32.mxu0 0.0
        %1442 = vmatmul.mubr.f32.gmra.mrb[0].mxu0 %v1245
        %v1443 = vpop.f32.mrb[0].mxu0
        %v1444 = vadd.f32 0.0, %v1443
        %v1445 = vpop.f32.mrb[0].mxu0
        %1446 = vmatprep.mubr.f32.mxu0 0.0
        %1447 = vmatmul.mubr.f32.gmra.mrb[0].mxu0 %v1248
        %v1448 = vpop.f32.mrb[0].mxu0
        %v1449 = vadd.f32 0.0, %v1448
        %v1450 = vpop.f32.mrb[0].mxu0
        %1451 = vmatprep.mubr.f32.mxu0 0.0
        %1452 = vmatmul.mubr.f32.gmra.mrb[0].mxu0 %v1251
        %v1453 = vpop.f32.mrb[0].mxu0
        %v1454 = vadd.f32 0.0, %v1453
        %v1455 = vpop.f32.mrb[0].mxu0
        %1456 = vmatprep.mubr.f32.mxu0 0.0
        %1457 = vmatmul.mubr.f32.gmra.mrb[0].mxu0 %v1254
        %v1458 = vpop.f32.mrb[0].mxu0
        %v1459 = vadd.f32 0.0, %v1458
        %v1460 = vpop.f32.mrb[0].mxu0
        %1461 = vmatprep.mubr.f32.mxu0 0.0
        %1462 = vmatmul.mubr.f32.gmra.mrb[0].mxu0 %v1257
        %v1463 = vpop.f32.mrb[0].mxu0
        %v1464 = vadd.f32 0.0, %v1463
        %v1465 = vpop.f32.mrb[0].mxu0
        %1466 = vmatprep.mubr.f32.mxu0 0.0
        %1467 = vmatmul.mubr.f32.gmra.mrb[0].mxu0 %v1260
        %v1468 = vpop.f32.mrb[0].mxu0
        %v1469 = vadd.f32 0.0, %v1468
        %v1470 = vpop.f32.mrb[0].mxu0
        %1471 = vmatprep.mubr.f32.mxu0 0.0
        %1472 = vmatmul.mubr.f32.gmra.mrb[0].mxu0 %v1263
        %v1473 = vpop.f32.mrb[0].mxu0
        %v1474 = vadd.f32 0.0, %v1473
        %v1475 = vpop.f32.mrb[0].mxu0
        %1476 = vmatprep.mubr.f32.mxu0 0.0
        %1477 = vmatmul.mubr.f32.gmra.mrb[0].mxu0 %v1266
        %v1478 = vpop.f32.mrb[0].mxu0
        %v1479 = vadd.f32 0.0, %v1478
        %v1480 = vpop.f32.mrb[0].mxu0
        %1481 = vmatprep.mubr.f32.mxu0 0.0
        %1482 = vmatmul.mubr.f32.gmra.mrb[0].mxu0 %v1269
        %v1483 = vpop.f32.mrb[0].mxu0
        %v1484 = vadd.f32 0.0, %v1483
        %v1485 = vpop.f32.mrb[0].mxu0
        %1486 = vmatprep.mubr.f32.mxu0 0.0
        %1487 = vmatmul.mubr.f32.gmra.mrb[0].mxu0 %v1272
        %v1488 = vpop.f32.mrb[0].mxu0
        %v1489 = vadd.f32 0.0, %v1488
        %v1490 = vpop.f32.mrb[0].mxu0
        %1491 = vmatprep.mubr.f32.mxu0 0.0
        %1492 = vmatmul.mubr.f32.gmra.mrb[0].mxu0 %v1275
        %v1493 = vpop.f32.mrb[0].mxu0
        %v1494 = vadd.f32 0.0, %v1493
        %v1495 = vpop.f32.mrb[0].mxu0
        %1496 = vmatprep.mubr.f32.mxu0 0.0
        %1497 = vmatmul.mubr.f32.gmra.mrb[0].mxu0 %v1278
        %v1498 = vpop.f32.mrb[0].mxu0
        %v1499 = vadd.f32 0.0, %v1498
        %v1500 = vpop.f32.mrb[0].mxu0
        %1501 = vmatprep.mubr.f32.mxu0 0.0
        %1502 = vmatmul.mubr.f32.gmra.mrb[0].mxu0 %v1281
        %v1503 = vpop.f32.mrb[0].mxu0
        %v1504 = vadd.f32 0.0, %v1503
        %v1505 = vpop.f32.mrb[0].mxu0
        %1506 = vmatprep.mubr.f32.mxu0 0.0
        %1507 = vmatmul.mubr.f32.gmra.mrb[0].mxu0 %v1284
        %v1508 = vpop.f32.mrb[0].mxu0
        %v1509 = vadd.f32 0.0, %v1508
        %v1510 = vpop.f32.mrb[0].mxu0
        %1511 = vmatprep.mubr.f32.mxu0 0.0
        %1512 = vmatmul.mubr.f32.gmra.mrb[0].mxu0 %v1287
        %v1513 = vpop.f32.mrb[0].mxu0
        %v1514 = vadd.f32 0.0, %v1513
        %v1515 = vpop.f32.mrb[0].mxu0
        %1516 = vdwg.mxu0
        %v1517 = vadd.f32 %v1159, %v1359
        %v1518 = vadd.f32 %v1160, %v1364
        %v1519 = vadd.f32 %v1161, %v1369
        %v1520 = vadd.f32 %v1162, %v1374
        %v1521 = vadd.f32 %v1163, %v1379
        %v1522 = vadd.f32 %v1164, %v1384
        %v1523 = vadd.f32 %v1165, %v1389
        %v1524 = vadd.f32 %v1166, %v1394
        %v1525 = vadd.f32 %v1167, %v1399
        %v1526 = vadd.f32 %v1168, %v1404
        %v1527 = vadd.f32 %v1169, %v1409
        %v1528 = vadd.f32 %v1170, %v1414
        %v1529 = vadd.f32 %v1171, %v1419
        %v1530 = vadd.f32 %v1172, %v1424
        %v1531 = vadd.f32 %v1173, %v1429
        %v1532 = vadd.f32 %v1174, %v1434
        %v1533 = vadd.f32 %v1175, %v1439
        %v1534 = vadd.f32 %v1176, %v1444
        %v1535 = vadd.f32 %v1177, %v1449
        %v1536 = vadd.f32 %v1178, %v1454
        %v1537 = vadd.f32 %v1179, %v1459
        %v1538 = vadd.f32 %v1180, %v1464
        %v1539 = vadd.f32 %v1181, %v1469
        %v1540 = vadd.f32 %v1182, %v1474
        %v1541 = vadd.f32 %v1183, %v1479
        %v1542 = vadd.f32 %v1184, %v1484
        %v1543 = vadd.f32 %v1185, %v1489
        %v1544 = vadd.f32 %v1186, %v1494
        %v1545 = vadd.f32 %v1187, %v1499
        %v1546 = vadd.f32 %v1188, %v1504
        %v1547 = vadd.f32 %v1189, %v1509
        %v1548 = vadd.f32 %v1190, %v1514
        %1549 = vst [vmem:[#allocation2] sm:$0xff] %v1517
        %1550 = vst [vmem:[#allocation2 + $0x8] sm:$0xff] %v1518
        %1551 = vst [vmem:[#allocation2 + $0x10] sm:$0xff] %v1519
        %1552 = vst [vmem:[#allocation2 + $0x18] sm:$0xff] %v1520
        %1553 = vst [vmem:[#allocation2 + $0x20] sm:$0xff] %v1521
        %1554 = vst [vmem:[#allocation2 + $0x28] sm:$0xff] %v1522
        %1555 = vst [vmem:[#allocation2 + $0x30] sm:$0xff] %v1523
        %1556 = vst [vmem:[#allocation2 + $0x38] sm:$0xff] %v1524
        %1557 = vst [vmem:[#allocation2 + $0x40] sm:$0xff] %v1525
        %1558 = vst [vmem:[#allocation2 + $0x48] sm:$0xff] %v1526
        %1559 = vst [vmem:[#allocation2 + $0x50] sm:$0xff] %v1527
        %1560 = vst [vmem:[#allocation2 + $0x58] sm:$0xff] %v1528
        %1561 = vst [vmem:[#allocation2 + $0x60] sm:$0xff] %v1529
        %1562 = vst [vmem:[#allocation2 + $0x68] sm:$0xff] %v1530
        %1563 = vst [vmem:[#allocation2 + $0x70] sm:$0xff] %v1531
        %1564 = vst [vmem:[#allocation2 + $0x78] sm:$0xff] %v1532
        %1565 = vst [vmem:[#allocation2 + $0x80] sm:$0xff] %v1533
        %1566 = vst [vmem:[#allocation2 + $0x88] sm:$0xff] %v1534
        %1567 = vst [vmem:[#allocation2 + $0x90] sm:$0xff] %v1535
        %1568 = vst [vmem:[#allocation2 + $0x98] sm:$0xff] %v1536
        %1569 = vst [vmem:[#allocation2 + $0xa0] sm:$0xff] %v1537
        %1570 = vst [vmem:[#allocation2 + $0xa8] sm:$0xff] %v1538
        %1571 = vst [vmem:[#allocation2 + $0xb0] sm:$0xff] %v1539
        %1572 = vst [vmem:[#allocation2 + $0xb8] sm:$0xff] %v1540
        %1573 = vst [vmem:[#allocation2 + $0xc0] sm:$0xff] %v1541
        %1574 = vst [vmem:[#allocation2 + $0xc8] sm:$0xff] %v1542
        %1575 = vst [vmem:[#allocation2 + $0xd0] sm:$0xff] %v1543
        %1576 = vst [vmem:[#allocation2 + $0xd8] sm:$0xff] %v1544
        %1577 = vst [vmem:[#allocation2 + $0xe0] sm:$0xff] %v1545
        %1578 = vst [vmem:[#allocation2 + $0xe8] sm:$0xff] %v1546
        %1579 = vst [vmem:[#allocation2 + $0xf0] sm:$0xff] %v1547
        %1580 = vst [vmem:[#allocation2 + $0xf8] sm:$0xff] %v1548
        %s1581 = sadd.s32 %s183, 1
        %s1582 = smul.u32 %s1581, 24
        %s1583 = scalar_lea.vmem %s177, %s1582
        %v1584 = vld [vmem:[%s1583] sm:$0xff]
        %v1585 = vld [vmem:[%s1583 + $0x8] sm:$0xff]
        %v1586 = vld [vmem:[%s1583 + $0x18] sm:$0xff]
        %v1587 = vld [vmem:[%s1583 + $0x20] sm:$0xff]
        %v1588 = vld [vmem:[%s1583 + $0x30] sm:$0xff]
        %v1589 = vld [vmem:[%s1583 + $0x38] sm:$0xff]
        %v1590 = vld [vmem:[%s1583 + $0x48] sm:$0xff]
        %v1591 = vld [vmem:[%s1583 + $0x50] sm:$0xff]
        %v1592 = vld [vmem:[%s1583 + $0x60] sm:$0xff]
        %v1593 = vld [vmem:[%s1583 + $0x68] sm:$0xff]
        %v1594 = vld [vmem:[%s1583 + $0x78] sm:$0xff]
        %v1595 = vld [vmem:[%s1583 + $0x80] sm:$0xff]
        %v1596 = vld [vmem:[%s1583 + $0x90] sm:$0xff]
        %v1597 = vld [vmem:[%s1583 + $0x98] sm:$0xff]
        %v1598 = vld [vmem:[%s1583 + $0xa8] sm:$0xff]
        %v1599 = vld [vmem:[%s1583 + $0xb0] sm:$0xff]
        %v1600 = vld [vmem:[%s1583 + $0xc0] sm:$0xff]
        %v1601 = vld [vmem:[%s1583 + $0xc8] sm:$0xff]
        %v1602 = vld [vmem:[%s1583 + $0xd8] sm:$0xff]
        %v1603 = vld [vmem:[%s1583 + $0xe0] sm:$0xff]
        %v1604 = vld [vmem:[%s1583 + $0xf0] sm:$0xff]
        %v1605 = vld [vmem:[%s1583 + $0xf8] sm:$0xff]
        %v1606 = vld [vmem:[%s1583 + $0x108] sm:$0xff]
        %v1607 = vld [vmem:[%s1583 + $0x110] sm:$0xff]
        %v1608 = vld [vmem:[%s1583 + $0x120] sm:$0xff]
        %v1609 = vld [vmem:[%s1583 + $0x128] sm:$0xff]
        %v1610 = vld [vmem:[%s1583 + $0x138] sm:$0xff]
        %v1611 = vld [vmem:[%s1583 + $0x140] sm:$0xff]
        %v1612 = vld [vmem:[%s1583 + $0x150] sm:$0xff]
        %v1613 = vld [vmem:[%s1583 + $0x158] sm:$0xff]
        %v1614 = vld [vmem:[%s1583 + $0x168] sm:$0xff]
        %v1615 = vld [vmem:[%s1583 + $0x170] sm:$0xff]
        %v1616 = vld [vmem:[#allocation2] sm:$0xff]
        %v1617 = vld [vmem:[#allocation2 + $0x8] sm:$0xff]
        %v1618 = vld [vmem:[#allocation2 + $0x10] sm:$0xff]
        %v1619 = vld [vmem:[#allocation2 + $0x18] sm:$0xff]
        %v1620 = vld [vmem:[#allocation2 + $0x20] sm:$0xff]
        %v1621 = vld [vmem:[#allocation2 + $0x28] sm:$0xff]
        %v1622 = vld [vmem:[#allocation2 + $0x30] sm:$0xff]
        %v1623 = vld [vmem:[#allocation2 + $0x38] sm:$0xff]
        %v1624 = vld [vmem:[#allocation2 + $0x40] sm:$0xff]
        %v1625 = vld [vmem:[#allocation2 + $0x48] sm:$0xff]
        %v1626 = vld [vmem:[#allocation2 + $0x50] sm:$0xff]
        %v1627 = vld [vmem:[#allocation2 + $0x58] sm:$0xff]
        %v1628 = vld [vmem:[#allocation2 + $0x60] sm:$0xff]
        %v1629 = vld [vmem:[#allocation2 + $0x68] sm:$0xff]
        %v1630 = vld [vmem:[#allocation2 + $0x70] sm:$0xff]
        %v1631 = vld [vmem:[#allocation2 + $0x78] sm:$0xff]
        %v1632 = vld [vmem:[#allocation2 + $0x80] sm:$0xff]
        %v1633 = vld [vmem:[#allocation2 + $0x88] sm:$0xff]
        %v1634 = vld [vmem:[#allocation2 + $0x90] sm:$0xff]
        %v1635 = vld [vmem:[#allocation2 + $0x98] sm:$0xff]
        %v1636 = vld [vmem:[#allocation2 + $0xa0] sm:$0xff]
        %v1637 = vld [vmem:[#allocation2 + $0xa8] sm:$0xff]
        %v1638 = vld [vmem:[#allocation2 + $0xb0] sm:$0xff]
        %v1639 = vld [vmem:[#allocation2 + $0xb8] sm:$0xff]
        %v1640 = vld [vmem:[#allocation2 + $0xc0] sm:$0xff]
        %v1641 = vld [vmem:[#allocation2 + $0xc8] sm:$0xff]
        %v1642 = vld [vmem:[#allocation2 + $0xd0] sm:$0xff]
        %v1643 = vld [vmem:[#allocation2 + $0xd8] sm:$0xff]
        %v1644 = vld [vmem:[#allocation2 + $0xe0] sm:$0xff]
        %v1645 = vld [vmem:[#allocation2 + $0xe8] sm:$0xff]
        %v1646 = vld [vmem:[#allocation2 + $0xf0] sm:$0xff]
        %v1647 = vld [vmem:[#allocation2 + $0xf8] sm:$0xff]
        %s1648 = scalar_lea.vmem %s181, 12
        %v1649 = vld [vmem:[%s1648] sm:$0xf]
        %v1651 = vsel %vm283, %v1584, 0
        %v1654 = vsel %vm283, %v1585, 0
        %v1657 = vsel %vm283, %v1586, 0
        %v1660 = vsel %vm283, %v1587, 0
        %v1663 = vsel %vm283, %v1588, 0
        %v1666 = vsel %vm283, %v1589, 0
        %v1669 = vsel %vm283, %v1590, 0
        %v1672 = vsel %vm283, %v1591, 0
        %v1675 = vsel %vm283, %v1592, 0
        %v1678 = vsel %vm283, %v1593, 0
        %v1681 = vsel %vm283, %v1594, 0
        %v1684 = vsel %vm283, %v1595, 0
        %v1687 = vsel %vm283, %v1596, 0
        %v1690 = vsel %vm283, %v1597, 0
        %v1693 = vsel %vm283, %v1598, 0
        %v1696 = vsel %vm283, %v1599, 0
        %v1699 = vsel %vm283, %v1600, 0
        %v1702 = vsel %vm283, %v1601, 0
        %v1705 = vsel %vm283, %v1602, 0
        %v1708 = vsel %vm283, %v1603, 0
        %v1711 = vsel %vm283, %v1604, 0
        %v1714 = vsel %vm283, %v1605, 0
        %v1717 = vsel %vm283, %v1606, 0
        %v1720 = vsel %vm283, %v1607, 0
        %v1723 = vsel %vm283, %v1608, 0
        %v1726 = vsel %vm283, %v1609, 0
        %v1729 = vsel %vm283, %v1610, 0
        %v1732 = vsel %vm283, %v1611, 0
        %v1735 = vsel %vm283, %v1612, 0
        %v1738 = vsel %vm283, %v1613, 0
        %v1741 = vsel %vm283, %v1614, 0
        %v1744 = vsel %vm283, %v1615, 0
        %v1747 = vsel %vm380, %v1649, 0
        %1749 = vmatprep.subr.mxu0 0.0
        %1750 = vmatpush1.msra.mxu0 %v1747
        %1751 = vmatprep.subr.mxu0 0.0
        %1752 = vmatpush1.msra.mxu0 0.0
        %1753 = vmatprep.subr.mxu0 0.0
        %1754 = vmatpush1.msra.mxu0 0.0
        %1755 = vmatprep.subr.mxu0 0.0
        %1756 = vmatpush1.msra.mxu0 0.0
        %1757 = vmatprep.subr.mxu0 0.0
        %1758 = vmatpush1.msra.mxu0 0.0
        %1759 = vmatprep.subr.mxu0 0.0
        %1760 = vmatpush1.msra.mxu0 0.0
        %1761 = vmatprep.subr.mxu0 0.0
        %1762 = vmatpush1.msra.mxu0 0.0
        %1763 = vmatprep.subr.mxu0 0.0
        %1764 = vmatpush1.msra.mxu0 0.0
        %1765 = vmatprep.subr.mxu0 0.0
        %1766 = vmatpush1.msra.mxu0 0.0
        %1767 = vmatprep.subr.mxu0 0.0
        %1768 = vmatpush1.msra.mxu0 0.0
        %1769 = vmatprep.subr.mxu0 0.0
        %1770 = vmatpush1.msra.mxu0 0.0
        %1771 = vmatprep.subr.mxu0 0.0
        %1772 = vmatpush1.msra.mxu0 0.0
        %1773 = vmatprep.subr.mxu0 0.0
        %1774 = vmatpush1.msra.mxu0 0.0
        %1775 = vmatprep.subr.mxu0 0.0
        %1776 = vmatpush1.msra.mxu0 0.0
        %1777 = vmatprep.subr.mxu0 0.0
        %1778 = vmatpush1.msra.mxu0 0.0
        %1779 = vmatprep.subr.mxu0 0.0
        %1780 = vmatpush1.msra.mxu0 0.0
        %1781 = vmatprep.subr.mxu0 0.0
        %1782 = vmatpush1.msra.mxu0 0.0
        %1783 = vmatprep.subr.mxu0 0.0
        %1784 = vmatpush1.msra.mxu0 0.0
        %1785 = vmatprep.subr.mxu0 0.0
        %1786 = vmatpush1.msra.mxu0 0.0
        %1787 = vmatprep.subr.mxu0 0.0
        %1788 = vmatpush1.msra.mxu0 0.0
        %1789 = vmatprep.subr.mxu0 0.0
        %1790 = vmatpush1.msra.mxu0 0.0
        %1791 = vmatprep.subr.mxu0 0.0
        %1792 = vmatpush1.msra.mxu0 0.0
        %1793 = vmatprep.subr.mxu0 0.0
        %1794 = vmatpush1.msra.mxu0 0.0
        %1795 = vmatprep.subr.mxu0 0.0
        %1796 = vmatpush1.msra.mxu0 0.0
        %1797 = vmatprep.subr.mxu0 0.0
        %1798 = vmatpush1.msra.mxu0 0.0
        %1799 = vmatprep.subr.mxu0 0.0
        %1800 = vmatpush1.msra.mxu0 0.0
        %1801 = vmatprep.subr.mxu0 0.0
        %1802 = vmatpush1.msra.mxu0 0.0
        %1803 = vmatprep.subr.mxu0 0.0
        %1804 = vmatpush1.msra.mxu0 0.0
        %1805 = vmatprep.subr.mxu0 0.0
        %1806 = vmatpush1.msra.mxu0 0.0
        %1807 = vmatprep.subr.mxu0 0.0
        %1808 = vmatpush1.msra.mxu0 0.0
        %1809 = vmatprep.subr.mxu0 0.0
        %1810 = vmatpush1.msra.mxu0 0.0
        %1811 = vmatprep.subr.mxu0 0.0
        %1812 = vmatpush1.msra.mxu0 0.0
        %1813 = vmatprep.mubr.f32.mxu0 0.0
        %1814 = vmatmul.mubr.f32.gmra.mrb[0].mxu0 %v1651
        %v1815 = vpop.f32.mrb[0].mxu0
        %v1816 = vadd.f32 0.0, %v1815
        %v1817 = vpop.f32.mrb[0].mxu0
        %1818 = vmatprep.mubr.f32.mxu0 0.0
        %1819 = vmatmul.mubr.f32.gmra.mrb[0].mxu0 %v1654
        %v1820 = vpop.f32.mrb[0].mxu0
        %v1821 = vadd.f32 0.0, %v1820
        %v1822 = vpop.f32.mrb[0].mxu0
        %1823 = vmatprep.mubr.f32.mxu0 0.0
        %1824 = vmatmul.mubr.f32.gmra.mrb[0].mxu0 %v1657
        %v1825 = vpop.f32.mrb[0].mxu0
        %v1826 = vadd.f32 0.0, %v1825
        %v1827 = vpop.f32.mrb[0].mxu0
        %1828 = vmatprep.mubr.f32.mxu0 0.0
        %1829 = vmatmul.mubr.f32.gmra.mrb[0].mxu0 %v1660
        %v1830 = vpop.f32.mrb[0].mxu0
        %v1831 = vadd.f32 0.0, %v1830
        %v1832 = vpop.f32.mrb[0].mxu0
        %1833 = vmatprep.mubr.f32.mxu0 0.0
        %1834 = vmatmul.mubr.f32.gmra.mrb[0].mxu0 %v1663
        %v1835 = vpop.f32.mrb[0].mxu0
        %v1836 = vadd.f32 0.0, %v1835
        %v1837 = vpop.f32.mrb[0].mxu0
        %1838 = vmatprep.mubr.f32.mxu0 0.0
        %1839 = vmatmul.mubr.f32.gmra.mrb[0].mxu0 %v1666
        %v1840 = vpop.f32.mrb[0].mxu0
        %v1841 = vadd.f32 0.0, %v1840
        %v1842 = vpop.f32.mrb[0].mxu0
        %1843 = vmatprep.mubr.f32.mxu0 0.0
        %1844 = vmatmul.mubr.f32.gmra.mrb[0].mxu0 %v1669
        %v1845 = vpop.f32.mrb[0].mxu0
        %v1846 = vadd.f32 0.0, %v1845
        %v1847 = vpop.f32.mrb[0].mxu0
        %1848 = vmatprep.mubr.f32.mxu0 0.0
        %1849 = vmatmul.mubr.f32.gmra.mrb[0].mxu0 %v1672
        %v1850 = vpop.f32.mrb[0].mxu0
        %v1851 = vadd.f32 0.0, %v1850
        %v1852 = vpop.f32.mrb[0].mxu0
        %1853 = vmatprep.mubr.f32.mxu0 0.0
        %1854 = vmatmul.mubr.f32.gmra.mrb[0].mxu0 %v1675
        %v1855 = vpop.f32.mrb[0].mxu0
        %v1856 = vadd.f32 0.0, %v1855
        %v1857 = vpop.f32.mrb[0].mxu0
        %1858 = vmatprep.mubr.f32.mxu0 0.0
        %1859 = vmatmul.mubr.f32.gmra.mrb[0].mxu0 %v1678
        %v1860 = vpop.f32.mrb[0].mxu0
        %v1861 = vadd.f32 0.0, %v1860
        %v1862 = vpop.f32.mrb[0].mxu0
        %1863 = vmatprep.mubr.f32.mxu0 0.0
        %1864 = vmatmul.mubr.f32.gmra.mrb[0].mxu0 %v1681
        %v1865 = vpop.f32.mrb[0].mxu0
        %v1866 = vadd.f32 0.0, %v1865
        %v1867 = vpop.f32.mrb[0].mxu0
        %1868 = vmatprep.mubr.f32.mxu0 0.0
        %1869 = vmatmul.mubr.f32.gmra.mrb[0].mxu0 %v1684
        %v1870 = vpop.f32.mrb[0].mxu0
        %v1871 = vadd.f32 0.0, %v1870
        %v1872 = vpop.f32.mrb[0].mxu0
        %1873 = vmatprep.mubr.f32.mxu0 0.0
        %1874 = vmatmul.mubr.f32.gmra.mrb[0].mxu0 %v1687
        %v1875 = vpop.f32.mrb[0].mxu0
        %v1876 = vadd.f32 0.0, %v1875
        %v1877 = vpop.f32.mrb[0].mxu0
        %1878 = vmatprep.mubr.f32.mxu0 0.0
        %1879 = vmatmul.mubr.f32.gmra.mrb[0].mxu0 %v1690
        %v1880 = vpop.f32.mrb[0].mxu0
        %v1881 = vadd.f32 0.0, %v1880
        %v1882 = vpop.f32.mrb[0].mxu0
        %1883 = vmatprep.mubr.f32.mxu0 0.0
        %1884 = vmatmul.mubr.f32.gmra.mrb[0].mxu0 %v1693
        %v1885 = vpop.f32.mrb[0].mxu0
        %v1886 = vadd.f32 0.0, %v1885
        %v1887 = vpop.f32.mrb[0].mxu0
        %1888 = vmatprep.mubr.f32.mxu0 0.0
        %1889 = vmatmul.mubr.f32.gmra.mrb[0].mxu0 %v1696
        %v1890 = vpop.f32.mrb[0].mxu0
        %v1891 = vadd.f32 0.0, %v1890
        %v1892 = vpop.f32.mrb[0].mxu0
        %1893 = vmatprep.mubr.f32.mxu0 0.0
        %1894 = vmatmul.mubr.f32.gmra.mrb[0].mxu0 %v1699
        %v1895 = vpop.f32.mrb[0].mxu0
        %v1896 = vadd.f32 0.0, %v1895
        %v1897 = vpop.f32.mrb[0].mxu0
        %1898 = vmatprep.mubr.f32.mxu0 0.0
        %1899 = vmatmul.mubr.f32.gmra.mrb[0].mxu0 %v1702
        %v1900 = vpop.f32.mrb[0].mxu0
        %v1901 = vadd.f32 0.0, %v1900
        %v1902 = vpop.f32.mrb[0].mxu0
        %1903 = vmatprep.mubr.f32.mxu0 0.0
        %1904 = vmatmul.mubr.f32.gmra.mrb[0].mxu0 %v1705
        %v1905 = vpop.f32.mrb[0].mxu0
        %v1906 = vadd.f32 0.0, %v1905
        %v1907 = vpop.f32.mrb[0].mxu0
        %1908 = vmatprep.mubr.f32.mxu0 0.0
        %1909 = vmatmul.mubr.f32.gmra.mrb[0].mxu0 %v1708
        %v1910 = vpop.f32.mrb[0].mxu0
        %v1911 = vadd.f32 0.0, %v1910
        %v1912 = vpop.f32.mrb[0].mxu0
        %1913 = vmatprep.mubr.f32.mxu0 0.0
        %1914 = vmatmul.mubr.f32.gmra.mrb[0].mxu0 %v1711
        %v1915 = vpop.f32.mrb[0].mxu0
        %v1916 = vadd.f32 0.0, %v1915
        %v1917 = vpop.f32.mrb[0].mxu0
        %1918 = vmatprep.mubr.f32.mxu0 0.0
        %1919 = vmatmul.mubr.f32.gmra.mrb[0].mxu0 %v1714
        %v1920 = vpop.f32.mrb[0].mxu0
        %v1921 = vadd.f32 0.0, %v1920
        %v1922 = vpop.f32.mrb[0].mxu0
        %1923 = vmatprep.mubr.f32.mxu0 0.0
        %1924 = vmatmul.mubr.f32.gmra.mrb[0].mxu0 %v1717
        %v1925 = vpop.f32.mrb[0].mxu0
        %v1926 = vadd.f32 0.0, %v1925
        %v1927 = vpop.f32.mrb[0].mxu0
        %1928 = vmatprep.mubr.f32.mxu0 0.0
        %1929 = vmatmul.mubr.f32.gmra.mrb[0].mxu0 %v1720
        %v1930 = vpop.f32.mrb[0].mxu0
        %v1931 = vadd.f32 0.0, %v1930
        %v1932 = vpop.f32.mrb[0].mxu0
        %1933 = vmatprep.mubr.f32.mxu0 0.0
        %1934 = vmatmul.mubr.f32.gmra.mrb[0].mxu0 %v1723
        %v1935 = vpop.f32.mrb[0].mxu0
        %v1936 = vadd.f32 0.0, %v1935
        %v1937 = vpop.f32.mrb[0].mxu0
        %1938 = vmatprep.mubr.f32.mxu0 0.0
        %1939 = vmatmul.mubr.f32.gmra.mrb[0].mxu0 %v1726
        %v1940 = vpop.f32.mrb[0].mxu0
        %v1941 = vadd.f32 0.0, %v1940
        %v1942 = vpop.f32.mrb[0].mxu0
        %1943 = vmatprep.mubr.f32.mxu0 0.0
        %1944 = vmatmul.mubr.f32.gmra.mrb[0].mxu0 %v1729
        %v1945 = vpop.f32.mrb[0].mxu0
        %v1946 = vadd.f32 0.0, %v1945
        %v1947 = vpop.f32.mrb[0].mxu0
        %1948 = vmatprep.mubr.f32.mxu0 0.0
        %1949 = vmatmul.mubr.f32.gmra.mrb[0].mxu0 %v1732
        %v1950 = vpop.f32.mrb[0].mxu0
        %v1951 = vadd.f32 0.0, %v1950
        %v1952 = vpop.f32.mrb[0].mxu0
        %1953 = vmatprep.mubr.f32.mxu0 0.0
        %1954 = vmatmul.mubr.f32.gmra.mrb[0].mxu0 %v1735
        %v1955 = vpop.f32.mrb[0].mxu0
        %v1956 = vadd.f32 0.0, %v1955
        %v1957 = vpop.f32.mrb[0].mxu0
        %1958 = vmatprep.mubr.f32.mxu0 0.0
        %1959 = vmatmul.mubr.f32.gmra.mrb[0].mxu0 %v1738
        %v1960 = vpop.f32.mrb[0].mxu0
        %v1961 = vadd.f32 0.0, %v1960
        %v1962 = vpop.f32.mrb[0].mxu0
        %1963 = vmatprep.mubr.f32.mxu0 0.0
        %1964 = vmatmul.mubr.f32.gmra.mrb[0].mxu0 %v1741
        %v1965 = vpop.f32.mrb[0].mxu0
        %v1966 = vadd.f32 0.0, %v1965
        %v1967 = vpop.f32.mrb[0].mxu0
        %1968 = vmatprep.mubr.f32.mxu0 0.0
        %1969 = vmatmul.mubr.f32.gmra.mrb[0].mxu0 %v1744
        %v1970 = vpop.f32.mrb[0].mxu0
        %v1971 = vadd.f32 0.0, %v1970
        %v1972 = vpop.f32.mrb[0].mxu0
        %1973 = vdwg.mxu0
        %v1974 = vadd.f32 %v1616, %v1816
        %v1975 = vadd.f32 %v1617, %v1821
        %v1976 = vadd.f32 %v1618, %v1826
        %v1977 = vadd.f32 %v1619, %v1831
        %v1978 = vadd.f32 %v1620, %v1836
        %v1979 = vadd.f32 %v1621, %v1841
        %v1980 = vadd.f32 %v1622, %v1846
        %v1981 = vadd.f32 %v1623, %v1851
        %v1982 = vadd.f32 %v1624, %v1856
        %v1983 = vadd.f32 %v1625, %v1861
        %v1984 = vadd.f32 %v1626, %v1866
        %v1985 = vadd.f32 %v1627, %v1871
        %v1986 = vadd.f32 %v1628, %v1876
        %v1987 = vadd.f32 %v1629, %v1881
        %v1988 = vadd.f32 %v1630, %v1886
        %v1989 = vadd.f32 %v1631, %v1891
        %v1990 = vadd.f32 %v1632, %v1896
        %v1991 = vadd.f32 %v1633, %v1901
        %v1992 = vadd.f32 %v1634, %v1906
        %v1993 = vadd.f32 %v1635, %v1911
        %v1994 = vadd.f32 %v1636, %v1916
        %v1995 = vadd.f32 %v1637, %v1921
        %v1996 = vadd.f32 %v1638, %v1926
        %v1997 = vadd.f32 %v1639, %v1931
        %v1998 = vadd.f32 %v1640, %v1936
        %v1999 = vadd.f32 %v1641, %v1941
        %v2000 = vadd.f32 %v1642, %v1946
        %v2001 = vadd.f32 %v1643, %v1951
        %v2002 = vadd.f32 %v1644, %v1956
        %v2003 = vadd.f32 %v1645, %v1961
        %v2004 = vadd.f32 %v1646, %v1966
        %v2005 = vadd.f32 %v1647, %v1971
        %2006 = vst [vmem:[#allocation2] sm:$0xff] %v1974
        %2007 = vst [vmem:[#allocation2 + $0x8] sm:$0xff] %v1975
        %2008 = vst [vmem:[#allocation2 + $0x10] sm:$0xff] %v1976
        %2009 = vst [vmem:[#allocation2 + $0x18] sm:$0xff] %v1977
        %2010 = vst [vmem:[#allocation2 + $0x20] sm:$0xff] %v1978
        %2011 = vst [vmem:[#allocation2 + $0x28] sm:$0xff] %v1979
        %2012 = vst [vmem:[#allocation2 + $0x30] sm:$0xff] %v1980
        %2013 = vst [vmem:[#allocation2 + $0x38] sm:$0xff] %v1981
        %2014 = vst [vmem:[#allocation2 + $0x40] sm:$0xff] %v1982
        %2015 = vst [vmem:[#allocation2 + $0x48] sm:$0xff] %v1983
        %2016 = vst [vmem:[#allocation2 + $0x50] sm:$0xff] %v1984
        %2017 = vst [vmem:[#allocation2 + $0x58] sm:$0xff] %v1985
        %2018 = vst [vmem:[#allocation2 + $0x60] sm:$0xff] %v1986
        %2019 = vst [vmem:[#allocation2 + $0x68] sm:$0xff] %v1987
        %2020 = vst [vmem:[#allocation2 + $0x70] sm:$0xff] %v1988
        %2021 = vst [vmem:[#allocation2 + $0x78] sm:$0xff] %v1989
        %2022 = vst [vmem:[#allocation2 + $0x80] sm:$0xff] %v1990
        %2023 = vst [vmem:[#allocation2 + $0x88] sm:$0xff] %v1991
        %2024 = vst [vmem:[#allocation2 + $0x90] sm:$0xff] %v1992
        %2025 = vst [vmem:[#allocation2 + $0x98] sm:$0xff] %v1993
        %2026 = vst [vmem:[#allocation2 + $0xa0] sm:$0xff] %v1994
        %2027 = vst [vmem:[#allocation2 + $0xa8] sm:$0xff] %v1995
        %2028 = vst [vmem:[#allocation2 + $0xb0] sm:$0xff] %v1996
        %2029 = vst [vmem:[#allocation2 + $0xb8] sm:$0xff] %v1997
        %2030 = vst [vmem:[#allocation2 + $0xc0] sm:$0xff] %v1998
        %2031 = vst [vmem:[#allocation2 + $0xc8] sm:$0xff] %v1999
        %2032 = vst [vmem:[#allocation2 + $0xd0] sm:$0xff] %v2000
        %2033 = vst [vmem:[#allocation2 + $0xd8] sm:$0xff] %v2001
        %2034 = vst [vmem:[#allocation2 + $0xe0] sm:$0xff] %v2002
        %2035 = vst [vmem:[#allocation2 + $0xe8] sm:$0xff] %v2003
        %2036 = vst [vmem:[#allocation2 + $0xf0] sm:$0xff] %v2004
        %2037 = vst [vmem:[#allocation2 + $0xf8] sm:$0xff] %v2005
        %v2038 = vld [vmem:[%s1583 + $0x1] sm:$0xff]
        %v2039 = vld [vmem:[%s1583 + $0x9] sm:$0xff]
        %v2040 = vld [vmem:[%s1583 + $0x19] sm:$0xff]
        %v2041 = vld [vmem:[%s1583 + $0x21] sm:$0xff]
        %v2042 = vld [vmem:[%s1583 + $0x31] sm:$0xff]
        %v2043 = vld [vmem:[%s1583 + $0x39] sm:$0xff]
        %v2044 = vld [vmem:[%s1583 + $0x49] sm:$0xff]
        %v2045 = vld [vmem:[%s1583 + $0x51] sm:$0xff]
        %v2046 = vld [vmem:[%s1583 + $0x61] sm:$0xff]
        %v2047 = vld [vmem:[%s1583 + $0x69] sm:$0xff]
        %v2048 = vld [vmem:[%s1583 + $0x79] sm:$0xff]
        %v2049 = vld [vmem:[%s1583 + $0x81] sm:$0xff]
        %v2050 = vld [vmem:[%s1583 + $0x91] sm:$0xff]
        %v2051 = vld [vmem:[%s1583 + $0x99] sm:$0xff]
        %v2052 = vld [vmem:[%s1583 + $0xa9] sm:$0xff]
        %v2053 = vld [vmem:[%s1583 + $0xb1] sm:$0xff]
        %v2054 = vld [vmem:[%s1583 + $0xc1] sm:$0xff]
        %v2055 = vld [vmem:[%s1583 + $0xc9] sm:$0xff]
        %v2056 = vld [vmem:[%s1583 + $0xd9] sm:$0xff]
        %v2057 = vld [vmem:[%s1583 + $0xe1] sm:$0xff]
        %v2058 = vld [vmem:[%s1583 + $0xf1] sm:$0xff]
        %v2059 = vld [vmem:[%s1583 + $0xf9] sm:$0xff]
        %v2060 = vld [vmem:[%s1583 + $0x109] sm:$0xff]
        %v2061 = vld [vmem:[%s1583 + $0x111] sm:$0xff]
        %v2062 = vld [vmem:[%s1583 + $0x121] sm:$0xff]
        %v2063 = vld [vmem:[%s1583 + $0x129] sm:$0xff]
        %v2064 = vld [vmem:[%s1583 + $0x139] sm:$0xff]
        %v2065 = vld [vmem:[%s1583 + $0x141] sm:$0xff]
        %v2066 = vld [vmem:[%s1583 + $0x151] sm:$0xff]
        %v2067 = vld [vmem:[%s1583 + $0x159] sm:$0xff]
        %v2068 = vld [vmem:[%s1583 + $0x169] sm:$0xff]
        %v2069 = vld [vmem:[%s1583 + $0x171] sm:$0xff]
        %v2070 = vld [vmem:[#allocation2] sm:$0xff]
        %v2071 = vld [vmem:[#allocation2 + $0x8] sm:$0xff]
        %v2072 = vld [vmem:[#allocation2 + $0x10] sm:$0xff]
        %v2073 = vld [vmem:[#allocation2 + $0x18] sm:$0xff]
        %v2074 = vld [vmem:[#allocation2 + $0x20] sm:$0xff]
        %v2075 = vld [vmem:[#allocation2 + $0x28] sm:$0xff]
        %v2076 = vld [vmem:[#allocation2 + $0x30] sm:$0xff]
        %v2077 = vld [vmem:[#allocation2 + $0x38] sm:$0xff]
        %v2078 = vld [vmem:[#allocation2 + $0x40] sm:$0xff]
        %v2079 = vld [vmem:[#allocation2 + $0x48] sm:$0xff]
        %v2080 = vld [vmem:[#allocation2 + $0x50] sm:$0xff]
        %v2081 = vld [vmem:[#allocation2 + $0x58] sm:$0xff]
        %v2082 = vld [vmem:[#allocation2 + $0x60] sm:$0xff]
        %v2083 = vld [vmem:[#allocation2 + $0x68] sm:$0xff]
        %v2084 = vld [vmem:[#allocation2 + $0x70] sm:$0xff]
        %v2085 = vld [vmem:[#allocation2 + $0x78] sm:$0xff]
        %v2086 = vld [vmem:[#allocation2 + $0x80] sm:$0xff]
        %v2087 = vld [vmem:[#allocation2 + $0x88] sm:$0xff]
        %v2088 = vld [vmem:[#allocation2 + $0x90] sm:$0xff]
        %v2089 = vld [vmem:[#allocation2 + $0x98] sm:$0xff]
        %v2090 = vld [vmem:[#allocation2 + $0xa0] sm:$0xff]
        %v2091 = vld [vmem:[#allocation2 + $0xa8] sm:$0xff]
        %v2092 = vld [vmem:[#allocation2 + $0xb0] sm:$0xff]
        %v2093 = vld [vmem:[#allocation2 + $0xb8] sm:$0xff]
        %v2094 = vld [vmem:[#allocation2 + $0xc0] sm:$0xff]
        %v2095 = vld [vmem:[#allocation2 + $0xc8] sm:$0xff]
        %v2096 = vld [vmem:[#allocation2 + $0xd0] sm:$0xff]
        %v2097 = vld [vmem:[#allocation2 + $0xd8] sm:$0xff]
        %v2098 = vld [vmem:[#allocation2 + $0xe0] sm:$0xff]
        %v2099 = vld [vmem:[#allocation2 + $0xe8] sm:$0xff]
        %v2100 = vld [vmem:[#allocation2 + $0xf0] sm:$0xff]
        %v2101 = vld [vmem:[#allocation2 + $0xf8] sm:$0xff]
        %s2102 = scalar_lea.vmem %s181, 16
        %v2103 = vld [vmem:[%s2102] sm:$0xf]
        %v2105 = vsel %vm283, %v2038, 0
        %v2108 = vsel %vm283, %v2039, 0
        %v2111 = vsel %vm283, %v2040, 0
        %v2114 = vsel %vm283, %v2041, 0
        %v2117 = vsel %vm283, %v2042, 0
        %v2120 = vsel %vm283, %v2043, 0
        %v2123 = vsel %vm283, %v2044, 0
        %v2126 = vsel %vm283, %v2045, 0
        %v2129 = vsel %vm283, %v2046, 0
        %v2132 = vsel %vm283, %v2047, 0
        %v2135 = vsel %vm283, %v2048, 0
        %v2138 = vsel %vm283, %v2049, 0
        %v2141 = vsel %vm283, %v2050, 0
        %v2144 = vsel %vm283, %v2051, 0
        %v2147 = vsel %vm283, %v2052, 0
        %v2150 = vsel %vm283, %v2053, 0
        %v2153 = vsel %vm283, %v2054, 0
        %v2156 = vsel %vm283, %v2055, 0
        %v2159 = vsel %vm283, %v2056, 0
        %v2162 = vsel %vm283, %v2057, 0
        %v2165 = vsel %vm283, %v2058, 0
        %v2168 = vsel %vm283, %v2059, 0
        %v2171 = vsel %vm283, %v2060, 0
        %v2174 = vsel %vm283, %v2061, 0
        %v2177 = vsel %vm283, %v2062, 0
        %v2180 = vsel %vm283, %v2063, 0
        %v2183 = vsel %vm283, %v2064, 0
        %v2186 = vsel %vm283, %v2065, 0
        %v2189 = vsel %vm283, %v2066, 0
        %v2192 = vsel %vm283, %v2067, 0
        %v2195 = vsel %vm283, %v2068, 0
        %v2198 = vsel %vm283, %v2069, 0
        %v2201 = vsel %vm380, %v2103, 0
        %2203 = vmatprep.subr.mxu0 0.0
        %2204 = vmatpush1.msra.mxu0 %v2201
        %2205 = vmatprep.subr.mxu0 0.0
        %2206 = vmatpush1.msra.mxu0 0.0
        %2207 = vmatprep.subr.mxu0 0.0
        %2208 = vmatpush1.msra.mxu0 0.0
        %2209 = vmatprep.subr.mxu0 0.0
        %2210 = vmatpush1.msra.mxu0 0.0
        %2211 = vmatprep.subr.mxu0 0.0
        %2212 = vmatpush1.msra.mxu0 0.0
        %2213 = vmatprep.subr.mxu0 0.0
        %2214 = vmatpush1.msra.mxu0 0.0
        %2215 = vmatprep.subr.mxu0 0.0
        %2216 = vmatpush1.msra.mxu0 0.0
        %2217 = vmatprep.subr.mxu0 0.0
        %2218 = vmatpush1.msra.mxu0 0.0
        %2219 = vmatprep.subr.mxu0 0.0
        %2220 = vmatpush1.msra.mxu0 0.0
        %2221 = vmatprep.subr.mxu0 0.0
        %2222 = vmatpush1.msra.mxu0 0.0
        %2223 = vmatprep.subr.mxu0 0.0
        %2224 = vmatpush1.msra.mxu0 0.0
        %2225 = vmatprep.subr.mxu0 0.0
        %2226 = vmatpush1.msra.mxu0 0.0
        %2227 = vmatprep.subr.mxu0 0.0
        %2228 = vmatpush1.msra.mxu0 0.0
        %2229 = vmatprep.subr.mxu0 0.0
        %2230 = vmatpush1.msra.mxu0 0.0
        %2231 = vmatprep.subr.mxu0 0.0
        %2232 = vmatpush1.msra.mxu0 0.0
        %2233 = vmatprep.subr.mxu0 0.0
        %2234 = vmatpush1.msra.mxu0 0.0
        %2235 = vmatprep.subr.mxu0 0.0
        %2236 = vmatpush1.msra.mxu0 0.0
        %2237 = vmatprep.subr.mxu0 0.0
        %2238 = vmatpush1.msra.mxu0 0.0
        %2239 = vmatprep.subr.mxu0 0.0
        %2240 = vmatpush1.msra.mxu0 0.0
        %2241 = vmatprep.subr.mxu0 0.0
        %2242 = vmatpush1.msra.mxu0 0.0
        %2243 = vmatprep.subr.mxu0 0.0
        %2244 = vmatpush1.msra.mxu0 0.0
        %2245 = vmatprep.subr.mxu0 0.0
        %2246 = vmatpush1.msra.mxu0 0.0
        %2247 = vmatprep.subr.mxu0 0.0
        %2248 = vmatpush1.msra.mxu0 0.0
        %2249 = vmatprep.subr.mxu0 0.0
        %2250 = vmatpush1.msra.mxu0 0.0
        %2251 = vmatprep.subr.mxu0 0.0
        %2252 = vmatpush1.msra.mxu0 0.0
        %2253 = vmatprep.subr.mxu0 0.0
        %2254 = vmatpush1.msra.mxu0 0.0
        %2255 = vmatprep.subr.mxu0 0.0
        %2256 = vmatpush1.msra.mxu0 0.0
        %2257 = vmatprep.subr.mxu0 0.0
        %2258 = vmatpush1.msra.mxu0 0.0
        %2259 = vmatprep.subr.mxu0 0.0
        %2260 = vmatpush1.msra.mxu0 0.0
        %2261 = vmatprep.subr.mxu0 0.0
        %2262 = vmatpush1.msra.mxu0 0.0
        %2263 = vmatprep.subr.mxu0 0.0
        %2264 = vmatpush1.msra.mxu0 0.0
        %2265 = vmatprep.subr.mxu0 0.0
        %2266 = vmatpush1.msra.mxu0 0.0
        %2267 = vmatprep.mubr.f32.mxu0 0.0
        %2268 = vmatmul.mubr.f32.gmra.mrb[0].mxu0 %v2105
        %v2269 = vpop.f32.mrb[0].mxu0
        %v2270 = vadd.f32 0.0, %v2269
        %v2271 = vpop.f32.mrb[0].mxu0
        %2272 = vmatprep.mubr.f32.mxu0 0.0
        %2273 = vmatmul.mubr.f32.gmra.mrb[0].mxu0 %v2108
        %v2274 = vpop.f32.mrb[0].mxu0
        %v2275 = vadd.f32 0.0, %v2274
        %v2276 = vpop.f32.mrb[0].mxu0
        %2277 = vmatprep.mubr.f32.mxu0 0.0
        %2278 = vmatmul.mubr.f32.gmra.mrb[0].mxu0 %v2111
        %v2279 = vpop.f32.mrb[0].mxu0
        %v2280 = vadd.f32 0.0, %v2279
        %v2281 = vpop.f32.mrb[0].mxu0
        %2282 = vmatprep.mubr.f32.mxu0 0.0
        %2283 = vmatmul.mubr.f32.gmra.mrb[0].mxu0 %v2114
        %v2284 = vpop.f32.mrb[0].mxu0
        %v2285 = vadd.f32 0.0, %v2284
        %v2286 = vpop.f32.mrb[0].mxu0
        %2287 = vmatprep.mubr.f32.mxu0 0.0
        %2288 = vmatmul.mubr.f32.gmra.mrb[0].mxu0 %v2117
        %v2289 = vpop.f32.mrb[0].mxu0
        %v2290 = vadd.f32 0.0, %v2289
        %v2291 = vpop.f32.mrb[0].mxu0
        %2292 = vmatprep.mubr.f32.mxu0 0.0
        %2293 = vmatmul.mubr.f32.gmra.mrb[0].mxu0 %v2120
        %v2294 = vpop.f32.mrb[0].mxu0
        %v2295 = vadd.f32 0.0, %v2294
        %v2296 = vpop.f32.mrb[0].mxu0
        %2297 = vmatprep.mubr.f32.mxu0 0.0
        %2298 = vmatmul.mubr.f32.gmra.mrb[0].mxu0 %v2123
        %v2299 = vpop.f32.mrb[0].mxu0
        %v2300 = vadd.f32 0.0, %v2299
        %v2301 = vpop.f32.mrb[0].mxu0
        %2302 = vmatprep.mubr.f32.mxu0 0.0
        %2303 = vmatmul.mubr.f32.gmra.mrb[0].mxu0 %v2126
        %v2304 = vpop.f32.mrb[0].mxu0
        %v2305 = vadd.f32 0.0, %v2304
        %v2306 = vpop.f32.mrb[0].mxu0
        %2307 = vmatprep.mubr.f32.mxu0 0.0
        %2308 = vmatmul.mubr.f32.gmra.mrb[0].mxu0 %v2129
        %v2309 = vpop.f32.mrb[0].mxu0
        %v2310 = vadd.f32 0.0, %v2309
        %v2311 = vpop.f32.mrb[0].mxu0
        %2312 = vmatprep.mubr.f32.mxu0 0.0
        %2313 = vmatmul.mubr.f32.gmra.mrb[0].mxu0 %v2132
        %v2314 = vpop.f32.mrb[0].mxu0
        %v2315 = vadd.f32 0.0, %v2314
        %v2316 = vpop.f32.mrb[0].mxu0
        %2317 = vmatprep.mubr.f32.mxu0 0.0
        %2318 = vmatmul.mubr.f32.gmra.mrb[0].mxu0 %v2135
        %v2319 = vpop.f32.mrb[0].mxu0
        %v2320 = vadd.f32 0.0, %v2319
        %v2321 = vpop.f32.mrb[0].mxu0
        %2322 = vmatprep.mubr.f32.mxu0 0.0
        %2323 = vmatmul.mubr.f32.gmra.mrb[0].mxu0 %v2138
        %v2324 = vpop.f32.mrb[0].mxu0
        %v2325 = vadd.f32 0.0, %v2324
        %v2326 = vpop.f32.mrb[0].mxu0
        %2327 = vmatprep.mubr.f32.mxu0 0.0
        %2328 = vmatmul.mubr.f32.gmra.mrb[0].mxu0 %v2141
        %v2329 = vpop.f32.mrb[0].mxu0
        %v2330 = vadd.f32 0.0, %v2329
        %v2331 = vpop.f32.mrb[0].mxu0
        %2332 = vmatprep.mubr.f32.mxu0 0.0
        %2333 = vmatmul.mubr.f32.gmra.mrb[0].mxu0 %v2144
        %v2334 = vpop.f32.mrb[0].mxu0
        %v2335 = vadd.f32 0.0, %v2334
        %v2336 = vpop.f32.mrb[0].mxu0
        %2337 = vmatprep.mubr.f32.mxu0 0.0
        %2338 = vmatmul.mubr.f32.gmra.mrb[0].mxu0 %v2147
        %v2339 = vpop.f32.mrb[0].mxu0
        %v2340 = vadd.f32 0.0, %v2339
        %v2341 = vpop.f32.mrb[0].mxu0
        %2342 = vmatprep.mubr.f32.mxu0 0.0
        %2343 = vmatmul.mubr.f32.gmra.mrb[0].mxu0 %v2150
        %v2344 = vpop.f32.mrb[0].mxu0
        %v2345 = vadd.f32 0.0, %v2344
        %v2346 = vpop.f32.mrb[0].mxu0
        %2347 = vmatprep.mubr.f32.mxu0 0.0
        %2348 = vmatmul.mubr.f32.gmra.mrb[0].mxu0 %v2153
        %v2349 = vpop.f32.mrb[0].mxu0
        %v2350 = vadd.f32 0.0, %v2349
        %v2351 = vpop.f32.mrb[0].mxu0
        %2352 = vmatprep.mubr.f32.mxu0 0.0
        %2353 = vmatmul.mubr.f32.gmra.mrb[0].mxu0 %v2156
        %v2354 = vpop.f32.mrb[0].mxu0
        %v2355 = vadd.f32 0.0, %v2354
        %v2356 = vpop.f32.mrb[0].mxu0
        %2357 = vmatprep.mubr.f32.mxu0 0.0
        %2358 = vmatmul.mubr.f32.gmra.mrb[0].mxu0 %v2159
        %v2359 = vpop.f32.mrb[0].mxu0
        %v2360 = vadd.f32 0.0, %v2359
        %v2361 = vpop.f32.mrb[0].mxu0
        %2362 = vmatprep.mubr.f32.mxu0 0.0
        %2363 = vmatmul.mubr.f32.gmra.mrb[0].mxu0 %v2162
        %v2364 = vpop.f32.mrb[0].mxu0
        %v2365 = vadd.f32 0.0, %v2364
        %v2366 = vpop.f32.mrb[0].mxu0
        %2367 = vmatprep.mubr.f32.mxu0 0.0
        %2368 = vmatmul.mubr.f32.gmra.mrb[0].mxu0 %v2165
        %v2369 = vpop.f32.mrb[0].mxu0
        %v2370 = vadd.f32 0.0, %v2369
        %v2371 = vpop.f32.mrb[0].mxu0
        %2372 = vmatprep.mubr.f32.mxu0 0.0
        %2373 = vmatmul.mubr.f32.gmra.mrb[0].mxu0 %v2168
        %v2374 = vpop.f32.mrb[0].mxu0
        %v2375 = vadd.f32 0.0, %v2374
        %v2376 = vpop.f32.mrb[0].mxu0
        %2377 = vmatprep.mubr.f32.mxu0 0.0
        %2378 = vmatmul.mubr.f32.gmra.mrb[0].mxu0 %v2171
        %v2379 = vpop.f32.mrb[0].mxu0
        %v2380 = vadd.f32 0.0, %v2379
        %v2381 = vpop.f32.mrb[0].mxu0
        %2382 = vmatprep.mubr.f32.mxu0 0.0
        %2383 = vmatmul.mubr.f32.gmra.mrb[0].mxu0 %v2174
        %v2384 = vpop.f32.mrb[0].mxu0
        %v2385 = vadd.f32 0.0, %v2384
        %v2386 = vpop.f32.mrb[0].mxu0
        %2387 = vmatprep.mubr.f32.mxu0 0.0
        %2388 = vmatmul.mubr.f32.gmra.mrb[0].mxu0 %v2177
        %v2389 = vpop.f32.mrb[0].mxu0
        %v2390 = vadd.f32 0.0, %v2389
        %v2391 = vpop.f32.mrb[0].mxu0
        %2392 = vmatprep.mubr.f32.mxu0 0.0
        %2393 = vmatmul.mubr.f32.gmra.mrb[0].mxu0 %v2180
        %v2394 = vpop.f32.mrb[0].mxu0
        %v2395 = vadd.f32 0.0, %v2394
        %v2396 = vpop.f32.mrb[0].mxu0
        %2397 = vmatprep.mubr.f32.mxu0 0.0
        %2398 = vmatmul.mubr.f32.gmra.mrb[0].mxu0 %v2183
        %v2399 = vpop.f32.mrb[0].mxu0
        %v2400 = vadd.f32 0.0, %v2399
        %v2401 = vpop.f32.mrb[0].mxu0
        %2402 = vmatprep.mubr.f32.mxu0 0.0
        %2403 = vmatmul.mubr.f32.gmra.mrb[0].mxu0 %v2186
        %v2404 = vpop.f32.mrb[0].mxu0
        %v2405 = vadd.f32 0.0, %v2404
        %v2406 = vpop.f32.mrb[0].mxu0
        %2407 = vmatprep.mubr.f32.mxu0 0.0
        %2408 = vmatmul.mubr.f32.gmra.mrb[0].mxu0 %v2189
        %v2409 = vpop.f32.mrb[0].mxu0
        %v2410 = vadd.f32 0.0, %v2409
        %v2411 = vpop.f32.mrb[0].mxu0
        %2412 = vmatprep.mubr.f32.mxu0 0.0
        %2413 = vmatmul.mubr.f32.gmra.mrb[0].mxu0 %v2192
        %v2414 = vpop.f32.mrb[0].mxu0
        %v2415 = vadd.f32 0.0, %v2414
        %v2416 = vpop.f32.mrb[0].mxu0
        %2417 = vmatprep.mubr.f32.mxu0 0.0
        %2418 = vmatmul.mubr.f32.gmra.mrb[0].mxu0 %v2195
        %v2419 = vpop.f32.mrb[0].mxu0
        %v2420 = vadd.f32 0.0, %v2419
        %v2421 = vpop.f32.mrb[0].mxu0
        %2422 = vmatprep.mubr.f32.mxu0 0.0
        %2423 = vmatmul.mubr.f32.gmra.mrb[0].mxu0 %v2198
        %v2424 = vpop.f32.mrb[0].mxu0
        %v2425 = vadd.f32 0.0, %v2424
        %v2426 = vpop.f32.mrb[0].mxu0
        %2427 = vdwg.mxu0
        %v2428 = vadd.f32 %v2070, %v2270
        %v2429 = vadd.f32 %v2071, %v2275
        %v2430 = vadd.f32 %v2072, %v2280
        %v2431 = vadd.f32 %v2073, %v2285
        %v2432 = vadd.f32 %v2074, %v2290
        %v2433 = vadd.f32 %v2075, %v2295
        %v2434 = vadd.f32 %v2076, %v2300
        %v2435 = vadd.f32 %v2077, %v2305
        %v2436 = vadd.f32 %v2078, %v2310
        %v2437 = vadd.f32 %v2079, %v2315
        %v2438 = vadd.f32 %v2080, %v2320
        %v2439 = vadd.f32 %v2081, %v2325
        %v2440 = vadd.f32 %v2082, %v2330
        %v2441 = vadd.f32 %v2083, %v2335
        %v2442 = vadd.f32 %v2084, %v2340
        %v2443 = vadd.f32 %v2085, %v2345
        %v2444 = vadd.f32 %v2086, %v2350
        %v2445 = vadd.f32 %v2087, %v2355
        %v2446 = vadd.f32 %v2088, %v2360
        %v2447 = vadd.f32 %v2089, %v2365
        %v2448 = vadd.f32 %v2090, %v2370
        %v2449 = vadd.f32 %v2091, %v2375
        %v2450 = vadd.f32 %v2092, %v2380
        %v2451 = vadd.f32 %v2093, %v2385
        %v2452 = vadd.f32 %v2094, %v2390
        %v2453 = vadd.f32 %v2095, %v2395
        %v2454 = vadd.f32 %v2096, %v2400
        %v2455 = vadd.f32 %v2097, %v2405
        %v2456 = vadd.f32 %v2098, %v2410
        %v2457 = vadd.f32 %v2099, %v2415
        %v2458 = vadd.f32 %v2100, %v2420
        %v2459 = vadd.f32 %v2101, %v2425
        %2460 = vst [vmem:[#allocation2] sm:$0xff] %v2428
        %2461 = vst [vmem:[#allocation2 + $0x8] sm:$0xff] %v2429
        %2462 = vst [vmem:[#allocation2 + $0x10] sm:$0xff] %v2430
        %2463 = vst [vmem:[#allocation2 + $0x18] sm:$0xff] %v2431
        %2464 = vst [vmem:[#allocation2 + $0x20] sm:$0xff] %v2432
        %2465 = vst [vmem:[#allocation2 + $0x28] sm:$0xff] %v2433
        %2466 = vst [vmem:[#allocation2 + $0x30] sm:$0xff] %v2434
        %2467 = vst [vmem:[#allocation2 + $0x38] sm:$0xff] %v2435
        %2468 = vst [vmem:[#allocation2 + $0x40] sm:$0xff] %v2436
        %2469 = vst [vmem:[#allocation2 + $0x48] sm:$0xff] %v2437
        %2470 = vst [vmem:[#allocation2 + $0x50] sm:$0xff] %v2438
        %2471 = vst [vmem:[#allocation2 + $0x58] sm:$0xff] %v2439
        %2472 = vst [vmem:[#allocation2 + $0x60] sm:$0xff] %v2440
        %2473 = vst [vmem:[#allocation2 + $0x68] sm:$0xff] %v2441
        %2474 = vst [vmem:[#allocation2 + $0x70] sm:$0xff] %v2442
        %2475 = vst [vmem:[#allocation2 + $0x78] sm:$0xff] %v2443
        %2476 = vst [vmem:[#allocation2 + $0x80] sm:$0xff] %v2444
        %2477 = vst [vmem:[#allocation2 + $0x88] sm:$0xff] %v2445
        %2478 = vst [vmem:[#allocation2 + $0x90] sm:$0xff] %v2446
        %2479 = vst [vmem:[#allocation2 + $0x98] sm:$0xff] %v2447
        %2480 = vst [vmem:[#allocation2 + $0xa0] sm:$0xff] %v2448
        %2481 = vst [vmem:[#allocation2 + $0xa8] sm:$0xff] %v2449
        %2482 = vst [vmem:[#allocation2 + $0xb0] sm:$0xff] %v2450
        %2483 = vst [vmem:[#allocation2 + $0xb8] sm:$0xff] %v2451
        %2484 = vst [vmem:[#allocation2 + $0xc0] sm:$0xff] %v2452
        %2485 = vst [vmem:[#allocation2 + $0xc8] sm:$0xff] %v2453
        %2486 = vst [vmem:[#allocation2 + $0xd0] sm:$0xff] %v2454
        %2487 = vst [vmem:[#allocation2 + $0xd8] sm:$0xff] %v2455
        %2488 = vst [vmem:[#allocation2 + $0xe0] sm:$0xff] %v2456
        %2489 = vst [vmem:[#allocation2 + $0xe8] sm:$0xff] %v2457
        %2490 = vst [vmem:[#allocation2 + $0xf0] sm:$0xff] %v2458
        %2491 = vst [vmem:[#allocation2 + $0xf8] sm:$0xff] %v2459
        %v2492 = vld [vmem:[%s1583 + $0x2] sm:$0xff]
        %v2493 = vld [vmem:[%s1583 + $0xa] sm:$0xff]
        %v2494 = vld [vmem:[%s1583 + $0x1a] sm:$0xff]
        %v2495 = vld [vmem:[%s1583 + $0x22] sm:$0xff]
        %v2496 = vld [vmem:[%s1583 + $0x32] sm:$0xff]
        %v2497 = vld [vmem:[%s1583 + $0x3a] sm:$0xff]
        %v2498 = vld [vmem:[%s1583 + $0x4a] sm:$0xff]
        %v2499 = vld [vmem:[%s1583 + $0x52] sm:$0xff]
        %v2500 = vld [vmem:[%s1583 + $0x62] sm:$0xff]
        %v2501 = vld [vmem:[%s1583 + $0x6a] sm:$0xff]
        %v2502 = vld [vmem:[%s1583 + $0x7a] sm:$0xff]
        %v2503 = vld [vmem:[%s1583 + $0x82] sm:$0xff]
        %v2504 = vld [vmem:[%s1583 + $0x92] sm:$0xff]
        %v2505 = vld [vmem:[%s1583 + $0x9a] sm:$0xff]
        %v2506 = vld [vmem:[%s1583 + $0xaa] sm:$0xff]
        %v2507 = vld [vmem:[%s1583 + $0xb2] sm:$0xff]
        %v2508 = vld [vmem:[%s1583 + $0xc2] sm:$0xff]
        %v2509 = vld [vmem:[%s1583 + $0xca] sm:$0xff]
        %v2510 = vld [vmem:[%s1583 + $0xda] sm:$0xff]
        %v2511 = vld [vmem:[%s1583 + $0xe2] sm:$0xff]
        %v2512 = vld [vmem:[%s1583 + $0xf2] sm:$0xff]
        %v2513 = vld [vmem:[%s1583 + $0xfa] sm:$0xff]
        %v2514 = vld [vmem:[%s1583 + $0x10a] sm:$0xff]
        %v2515 = vld [vmem:[%s1583 + $0x112] sm:$0xff]
        %v2516 = vld [vmem:[%s1583 + $0x122] sm:$0xff]
        %v2517 = vld [vmem:[%s1583 + $0x12a] sm:$0xff]
        %v2518 = vld [vmem:[%s1583 + $0x13a] sm:$0xff]
        %v2519 = vld [vmem:[%s1583 + $0x142] sm:$0xff]
        %v2520 = vld [vmem:[%s1583 + $0x152] sm:$0xff]
        %v2521 = vld [vmem:[%s1583 + $0x15a] sm:$0xff]
        %v2522 = vld [vmem:[%s1583 + $0x16a] sm:$0xff]
        %v2523 = vld [vmem:[%s1583 + $0x172] sm:$0xff]
        %v2524 = vld [vmem:[#allocation2] sm:$0xff]
        %v2525 = vld [vmem:[#allocation2 + $0x8] sm:$0xff]
        %v2526 = vld [vmem:[#allocation2 + $0x10] sm:$0xff]
        %v2527 = vld [vmem:[#allocation2 + $0x18] sm:$0xff]
        %v2528 = vld [vmem:[#allocation2 + $0x20] sm:$0xff]
        %v2529 = vld [vmem:[#allocation2 + $0x28] sm:$0xff]
        %v2530 = vld [vmem:[#allocation2 + $0x30] sm:$0xff]
        %v2531 = vld [vmem:[#allocation2 + $0x38] sm:$0xff]
        %v2532 = vld [vmem:[#allocation2 + $0x40] sm:$0xff]
        %v2533 = vld [vmem:[#allocation2 + $0x48] sm:$0xff]
        %v2534 = vld [vmem:[#allocation2 + $0x50] sm:$0xff]
        %v2535 = vld [vmem:[#allocation2 + $0x58] sm:$0xff]
        %v2536 = vld [vmem:[#allocation2 + $0x60] sm:$0xff]
        %v2537 = vld [vmem:[#allocation2 + $0x68] sm:$0xff]
        %v2538 = vld [vmem:[#allocation2 + $0x70] sm:$0xff]
        %v2539 = vld [vmem:[#allocation2 + $0x78] sm:$0xff]
        %v2540 = vld [vmem:[#allocation2 + $0x80] sm:$0xff]
        %v2541 = vld [vmem:[#allocation2 + $0x88] sm:$0xff]
        %v2542 = vld [vmem:[#allocation2 + $0x90] sm:$0xff]
        %v2543 = vld [vmem:[#allocation2 + $0x98] sm:$0xff]
        %v2544 = vld [vmem:[#allocation2 + $0xa0] sm:$0xff]
        %v2545 = vld [vmem:[#allocation2 + $0xa8] sm:$0xff]
        %v2546 = vld [vmem:[#allocation2 + $0xb0] sm:$0xff]
        %v2547 = vld [vmem:[#allocation2 + $0xb8] sm:$0xff]
        %v2548 = vld [vmem:[#allocation2 + $0xc0] sm:$0xff]
        %v2549 = vld [vmem:[#allocation2 + $0xc8] sm:$0xff]
        %v2550 = vld [vmem:[#allocation2 + $0xd0] sm:$0xff]
        %v2551 = vld [vmem:[#allocation2 + $0xd8] sm:$0xff]
        %v2552 = vld [vmem:[#allocation2 + $0xe0] sm:$0xff]
        %v2553 = vld [vmem:[#allocation2 + $0xe8] sm:$0xff]
        %v2554 = vld [vmem:[#allocation2 + $0xf0] sm:$0xff]
        %v2555 = vld [vmem:[#allocation2 + $0xf8] sm:$0xff]
        %s2556 = scalar_lea.vmem %s181, 20
        %v2557 = vld [vmem:[%s2556] sm:$0xf]
        %v2559 = vsel %vm283, %v2492, 0
        %v2562 = vsel %vm283, %v2493, 0
        %v2565 = vsel %vm283, %v2494, 0
        %v2568 = vsel %vm283, %v2495, 0
        %v2571 = vsel %vm283, %v2496, 0
        %v2574 = vsel %vm283, %v2497, 0
        %v2577 = vsel %vm283, %v2498, 0
        %v2580 = vsel %vm283, %v2499, 0
        %v2583 = vsel %vm283, %v2500, 0
        %v2586 = vsel %vm283, %v2501, 0
        %v2589 = vsel %vm283, %v2502, 0
        %v2592 = vsel %vm283, %v2503, 0
        %v2595 = vsel %vm283, %v2504, 0
        %v2598 = vsel %vm283, %v2505, 0
        %v2601 = vsel %vm283, %v2506, 0
        %v2604 = vsel %vm283, %v2507, 0
        %v2607 = vsel %vm283, %v2508, 0
        %v2610 = vsel %vm283, %v2509, 0
        %v2613 = vsel %vm283, %v2510, 0
        %v2616 = vsel %vm283, %v2511, 0
        %v2619 = vsel %vm283, %v2512, 0
        %v2622 = vsel %vm283, %v2513, 0
        %v2625 = vsel %vm283, %v2514, 0
        %v2628 = vsel %vm283, %v2515, 0
        %v2631 = vsel %vm283, %v2516, 0
        %v2634 = vsel %vm283, %v2517, 0
        %v2637 = vsel %vm283, %v2518, 0
        %v2640 = vsel %vm283, %v2519, 0
        %v2643 = vsel %vm283, %v2520, 0
        %v2646 = vsel %vm283, %v2521, 0
        %v2649 = vsel %vm283, %v2522, 0
        %v2652 = vsel %vm283, %v2523, 0
        %v2655 = vsel %vm380, %v2557, 0
        %2657 = vmatprep.subr.mxu0 0.0
        %2658 = vmatpush1.msra.mxu0 %v2655
        %2659 = vmatprep.subr.mxu0 0.0
        %2660 = vmatpush1.msra.mxu0 0.0
        %2661 = vmatprep.subr.mxu0 0.0
        %2662 = vmatpush1.msra.mxu0 0.0
        %2663 = vmatprep.subr.mxu0 0.0
        %2664 = vmatpush1.msra.mxu0 0.0
        %2665 = vmatprep.subr.mxu0 0.0
        %2666 = vmatpush1.msra.mxu0 0.0
        %2667 = vmatprep.subr.mxu0 0.0
        %2668 = vmatpush1.msra.mxu0 0.0
        %2669 = vmatprep.subr.mxu0 0.0
        %2670 = vmatpush1.msra.mxu0 0.0
        %2671 = vmatprep.subr.mxu0 0.0
        %2672 = vmatpush1.msra.mxu0 0.0
        %2673 = vmatprep.subr.mxu0 0.0
        %2674 = vmatpush1.msra.mxu0 0.0
        %2675 = vmatprep.subr.mxu0 0.0
        %2676 = vmatpush1.msra.mxu0 0.0
        %2677 = vmatprep.subr.mxu0 0.0
        %2678 = vmatpush1.msra.mxu0 0.0
        %2679 = vmatprep.subr.mxu0 0.0
        %2680 = vmatpush1.msra.mxu0 0.0
        %2681 = vmatprep.subr.mxu0 0.0
        %2682 = vmatpush1.msra.mxu0 0.0
        %2683 = vmatprep.subr.mxu0 0.0
        %2684 = vmatpush1.msra.mxu0 0.0
        %2685 = vmatprep.subr.mxu0 0.0
        %2686 = vmatpush1.msra.mxu0 0.0
        %2687 = vmatprep.subr.mxu0 0.0
        %2688 = vmatpush1.msra.mxu0 0.0
        %2689 = vmatprep.subr.mxu0 0.0
        %2690 = vmatpush1.msra.mxu0 0.0
        %2691 = vmatprep.subr.mxu0 0.0
        %2692 = vmatpush1.msra.mxu0 0.0
        %2693 = vmatprep.subr.mxu0 0.0
        %2694 = vmatpush1.msra.mxu0 0.0
        %2695 = vmatprep.subr.mxu0 0.0
        %2696 = vmatpush1.msra.mxu0 0.0
        %2697 = vmatprep.subr.mxu0 0.0
        %2698 = vmatpush1.msra.mxu0 0.0
        %2699 = vmatprep.subr.mxu0 0.0
        %2700 = vmatpush1.msra.mxu0 0.0
        %2701 = vmatprep.subr.mxu0 0.0
        %2702 = vmatpush1.msra.mxu0 0.0
        %2703 = vmatprep.subr.mxu0 0.0
        %2704 = vmatpush1.msra.mxu0 0.0
        %2705 = vmatprep.subr.mxu0 0.0
        %2706 = vmatpush1.msra.mxu0 0.0
        %2707 = vmatprep.subr.mxu0 0.0
        %2708 = vmatpush1.msra.mxu0 0.0
        %2709 = vmatprep.subr.mxu0 0.0
        %2710 = vmatpush1.msra.mxu0 0.0
        %2711 = vmatprep.subr.mxu0 0.0
        %2712 = vmatpush1.msra.mxu0 0.0
        %2713 = vmatprep.subr.mxu0 0.0
        %2714 = vmatpush1.msra.mxu0 0.0
        %2715 = vmatprep.subr.mxu0 0.0
        %2716 = vmatpush1.msra.mxu0 0.0
        %2717 = vmatprep.subr.mxu0 0.0
        %2718 = vmatpush1.msra.mxu0 0.0
        %2719 = vmatprep.subr.mxu0 0.0
        %2720 = vmatpush1.msra.mxu0 0.0
        %2721 = vmatprep.mubr.f32.mxu0 0.0
        %2722 = vmatmul.mubr.f32.gmra.mrb[0].mxu0 %v2559
        %v2723 = vpop.f32.mrb[0].mxu0
        %v2724 = vadd.f32 0.0, %v2723
        %v2725 = vpop.f32.mrb[0].mxu0
        %2726 = vmatprep.mubr.f32.mxu0 0.0
        %2727 = vmatmul.mubr.f32.gmra.mrb[0].mxu0 %v2562
        %v2728 = vpop.f32.mrb[0].mxu0
        %v2729 = vadd.f32 0.0, %v2728
        %v2730 = vpop.f32.mrb[0].mxu0
        %2731 = vmatprep.mubr.f32.mxu0 0.0
        %2732 = vmatmul.mubr.f32.gmra.mrb[0].mxu0 %v2565
        %v2733 = vpop.f32.mrb[0].mxu0
        %v2734 = vadd.f32 0.0, %v2733
        %v2735 = vpop.f32.mrb[0].mxu0
        %2736 = vmatprep.mubr.f32.mxu0 0.0
        %2737 = vmatmul.mubr.f32.gmra.mrb[0].mxu0 %v2568
        %v2738 = vpop.f32.mrb[0].mxu0
        %v2739 = vadd.f32 0.0, %v2738
        %v2740 = vpop.f32.mrb[0].mxu0
        %2741 = vmatprep.mubr.f32.mxu0 0.0
        %2742 = vmatmul.mubr.f32.gmra.mrb[0].mxu0 %v2571
        %v2743 = vpop.f32.mrb[0].mxu0
        %v2744 = vadd.f32 0.0, %v2743
        %v2745 = vpop.f32.mrb[0].mxu0
        %2746 = vmatprep.mubr.f32.mxu0 0.0
        %2747 = vmatmul.mubr.f32.gmra.mrb[0].mxu0 %v2574
        %v2748 = vpop.f32.mrb[0].mxu0
        %v2749 = vadd.f32 0.0, %v2748
        %v2750 = vpop.f32.mrb[0].mxu0
        %2751 = vmatprep.mubr.f32.mxu0 0.0
        %2752 = vmatmul.mubr.f32.gmra.mrb[0].mxu0 %v2577
        %v2753 = vpop.f32.mrb[0].mxu0
        %v2754 = vadd.f32 0.0, %v2753
        %v2755 = vpop.f32.mrb[0].mxu0
        %2756 = vmatprep.mubr.f32.mxu0 0.0
        %2757 = vmatmul.mubr.f32.gmra.mrb[0].mxu0 %v2580
        %v2758 = vpop.f32.mrb[0].mxu0
        %v2759 = vadd.f32 0.0, %v2758
        %v2760 = vpop.f32.mrb[0].mxu0
        %2761 = vmatprep.mubr.f32.mxu0 0.0
        %2762 = vmatmul.mubr.f32.gmra.mrb[0].mxu0 %v2583
        %v2763 = vpop.f32.mrb[0].mxu0
        %v2764 = vadd.f32 0.0, %v2763
        %v2765 = vpop.f32.mrb[0].mxu0
        %2766 = vmatprep.mubr.f32.mxu0 0.0
        %2767 = vmatmul.mubr.f32.gmra.mrb[0].mxu0 %v2586
        %v2768 = vpop.f32.mrb[0].mxu0
        %v2769 = vadd.f32 0.0, %v2768
        %v2770 = vpop.f32.mrb[0].mxu0
        %2771 = vmatprep.mubr.f32.mxu0 0.0
        %2772 = vmatmul.mubr.f32.gmra.mrb[0].mxu0 %v2589
        %v2773 = vpop.f32.mrb[0].mxu0
        %v2774 = vadd.f32 0.0, %v2773
        %v2775 = vpop.f32.mrb[0].mxu0
        %2776 = vmatprep.mubr.f32.mxu0 0.0
        %2777 = vmatmul.mubr.f32.gmra.mrb[0].mxu0 %v2592
        %v2778 = vpop.f32.mrb[0].mxu0
        %v2779 = vadd.f32 0.0, %v2778
        %v2780 = vpop.f32.mrb[0].mxu0
        %2781 = vmatprep.mubr.f32.mxu0 0.0
        %2782 = vmatmul.mubr.f32.gmra.mrb[0].mxu0 %v2595
        %v2783 = vpop.f32.mrb[0].mxu0
        %v2784 = vadd.f32 0.0, %v2783
        %v2785 = vpop.f32.mrb[0].mxu0
        %2786 = vmatprep.mubr.f32.mxu0 0.0
        %2787 = vmatmul.mubr.f32.gmra.mrb[0].mxu0 %v2598
        %v2788 = vpop.f32.mrb[0].mxu0
        %v2789 = vadd.f32 0.0, %v2788
        %v2790 = vpop.f32.mrb[0].mxu0
        %2791 = vmatprep.mubr.f32.mxu0 0.0
        %2792 = vmatmul.mubr.f32.gmra.mrb[0].mxu0 %v2601
        %v2793 = vpop.f32.mrb[0].mxu0
        %v2794 = vadd.f32 0.0, %v2793
        %v2795 = vpop.f32.mrb[0].mxu0
        %2796 = vmatprep.mubr.f32.mxu0 0.0
        %2797 = vmatmul.mubr.f32.gmra.mrb[0].mxu0 %v2604
        %v2798 = vpop.f32.mrb[0].mxu0
        %v2799 = vadd.f32 0.0, %v2798
        %v2800 = vpop.f32.mrb[0].mxu0
        %2801 = vmatprep.mubr.f32.mxu0 0.0
        %2802 = vmatmul.mubr.f32.gmra.mrb[0].mxu0 %v2607
        %v2803 = vpop.f32.mrb[0].mxu0
        %v2804 = vadd.f32 0.0, %v2803
        %v2805 = vpop.f32.mrb[0].mxu0
        %2806 = vmatprep.mubr.f32.mxu0 0.0
        %2807 = vmatmul.mubr.f32.gmra.mrb[0].mxu0 %v2610
        %v2808 = vpop.f32.mrb[0].mxu0
        %v2809 = vadd.f32 0.0, %v2808
        %v2810 = vpop.f32.mrb[0].mxu0
        %2811 = vmatprep.mubr.f32.mxu0 0.0
        %2812 = vmatmul.mubr.f32.gmra.mrb[0].mxu0 %v2613
        %v2813 = vpop.f32.mrb[0].mxu0
        %v2814 = vadd.f32 0.0, %v2813
        %v2815 = vpop.f32.mrb[0].mxu0
        %2816 = vmatprep.mubr.f32.mxu0 0.0
        %2817 = vmatmul.mubr.f32.gmra.mrb[0].mxu0 %v2616
        %v2818 = vpop.f32.mrb[0].mxu0
        %v2819 = vadd.f32 0.0, %v2818
        %v2820 = vpop.f32.mrb[0].mxu0
        %2821 = vmatprep.mubr.f32.mxu0 0.0
        %2822 = vmatmul.mubr.f32.gmra.mrb[0].mxu0 %v2619
        %v2823 = vpop.f32.mrb[0].mxu0
        %v2824 = vadd.f32 0.0, %v2823
        %v2825 = vpop.f32.mrb[0].mxu0
        %2826 = vmatprep.mubr.f32.mxu0 0.0
        %2827 = vmatmul.mubr.f32.gmra.mrb[0].mxu0 %v2622
        %v2828 = vpop.f32.mrb[0].mxu0
        %v2829 = vadd.f32 0.0, %v2828
        %v2830 = vpop.f32.mrb[0].mxu0
        %2831 = vmatprep.mubr.f32.mxu0 0.0
        %2832 = vmatmul.mubr.f32.gmra.mrb[0].mxu0 %v2625
        %v2833 = vpop.f32.mrb[0].mxu0
        %v2834 = vadd.f32 0.0, %v2833
        %v2835 = vpop.f32.mrb[0].mxu0
        %2836 = vmatprep.mubr.f32.mxu0 0.0
        %2837 = vmatmul.mubr.f32.gmra.mrb[0].mxu0 %v2628
        %v2838 = vpop.f32.mrb[0].mxu0
        %v2839 = vadd.f32 0.0, %v2838
        %v2840 = vpop.f32.mrb[0].mxu0
        %2841 = vmatprep.mubr.f32.mxu0 0.0
        %2842 = vmatmul.mubr.f32.gmra.mrb[0].mxu0 %v2631
        %v2843 = vpop.f32.mrb[0].mxu0
        %v2844 = vadd.f32 0.0, %v2843
        %v2845 = vpop.f32.mrb[0].mxu0
        %2846 = vmatprep.mubr.f32.mxu0 0.0
        %2847 = vmatmul.mubr.f32.gmra.mrb[0].mxu0 %v2634
        %v2848 = vpop.f32.mrb[0].mxu0
        %v2849 = vadd.f32 0.0, %v2848
        %v2850 = vpop.f32.mrb[0].mxu0
        %2851 = vmatprep.mubr.f32.mxu0 0.0
        %2852 = vmatmul.mubr.f32.gmra.mrb[0].mxu0 %v2637
        %v2853 = vpop.f32.mrb[0].mxu0
        %v2854 = vadd.f32 0.0, %v2853
        %v2855 = vpop.f32.mrb[0].mxu0
        %2856 = vmatprep.mubr.f32.mxu0 0.0
        %2857 = vmatmul.mubr.f32.gmra.mrb[0].mxu0 %v2640
        %v2858 = vpop.f32.mrb[0].mxu0
        %v2859 = vadd.f32 0.0, %v2858
        %v2860 = vpop.f32.mrb[0].mxu0
        %2861 = vmatprep.mubr.f32.mxu0 0.0
        %2862 = vmatmul.mubr.f32.gmra.mrb[0].mxu0 %v2643
        %v2863 = vpop.f32.mrb[0].mxu0
        %v2864 = vadd.f32 0.0, %v2863
        %v2865 = vpop.f32.mrb[0].mxu0
        %2866 = vmatprep.mubr.f32.mxu0 0.0
        %2867 = vmatmul.mubr.f32.gmra.mrb[0].mxu0 %v2646
        %v2868 = vpop.f32.mrb[0].mxu0
        %v2869 = vadd.f32 0.0, %v2868
        %v2870 = vpop.f32.mrb[0].mxu0
        %2871 = vmatprep.mubr.f32.mxu0 0.0
        %2872 = vmatmul.mubr.f32.gmra.mrb[0].mxu0 %v2649
        %v2873 = vpop.f32.mrb[0].mxu0
        %v2874 = vadd.f32 0.0, %v2873
        %v2875 = vpop.f32.mrb[0].mxu0
        %2876 = vmatprep.mubr.f32.mxu0 0.0
        %2877 = vmatmul.mubr.f32.gmra.mrb[0].mxu0 %v2652
        %v2878 = vpop.f32.mrb[0].mxu0
        %v2879 = vadd.f32 0.0, %v2878
        %v2880 = vpop.f32.mrb[0].mxu0
        %2881 = vdwg.mxu0
        %v2882 = vadd.f32 %v2524, %v2724
        %v2883 = vadd.f32 %v2525, %v2729
        %v2884 = vadd.f32 %v2526, %v2734
        %v2885 = vadd.f32 %v2527, %v2739
        %v2886 = vadd.f32 %v2528, %v2744
        %v2887 = vadd.f32 %v2529, %v2749
        %v2888 = vadd.f32 %v2530, %v2754
        %v2889 = vadd.f32 %v2531, %v2759
        %v2890 = vadd.f32 %v2532, %v2764
        %v2891 = vadd.f32 %v2533, %v2769
        %v2892 = vadd.f32 %v2534, %v2774
        %v2893 = vadd.f32 %v2535, %v2779
        %v2894 = vadd.f32 %v2536, %v2784
        %v2895 = vadd.f32 %v2537, %v2789
        %v2896 = vadd.f32 %v2538, %v2794
        %v2897 = vadd.f32 %v2539, %v2799
        %v2898 = vadd.f32 %v2540, %v2804
        %v2899 = vadd.f32 %v2541, %v2809
        %v2900 = vadd.f32 %v2542, %v2814
        %v2901 = vadd.f32 %v2543, %v2819
        %v2902 = vadd.f32 %v2544, %v2824
        %v2903 = vadd.f32 %v2545, %v2829
        %v2904 = vadd.f32 %v2546, %v2834
        %v2905 = vadd.f32 %v2547, %v2839
        %v2906 = vadd.f32 %v2548, %v2844
        %v2907 = vadd.f32 %v2549, %v2849
        %v2908 = vadd.f32 %v2550, %v2854
        %v2909 = vadd.f32 %v2551, %v2859
        %v2910 = vadd.f32 %v2552, %v2864
        %v2911 = vadd.f32 %v2553, %v2869
        %v2912 = vadd.f32 %v2554, %v2874
        %v2913 = vadd.f32 %v2555, %v2879
        %2914 = vst [vmem:[#allocation2] sm:$0xff] %v2882
        %2915 = vst [vmem:[#allocation2 + $0x8] sm:$0xff] %v2883
        %2916 = vst [vmem:[#allocation2 + $0x10] sm:$0xff] %v2884
        %2917 = vst [vmem:[#allocation2 + $0x18] sm:$0xff] %v2885
        %2918 = vst [vmem:[#allocation2 + $0x20] sm:$0xff] %v2886
        %2919 = vst [vmem:[#allocation2 + $0x28] sm:$0xff] %v2887
        %2920 = vst [vmem:[#allocation2 + $0x30] sm:$0xff] %v2888
        %2921 = vst [vmem:[#allocation2 + $0x38] sm:$0xff] %v2889
        %2922 = vst [vmem:[#allocation2 + $0x40] sm:$0xff] %v2890
        %2923 = vst [vmem:[#allocation2 + $0x48] sm:$0xff] %v2891
        %2924 = vst [vmem:[#allocation2 + $0x50] sm:$0xff] %v2892
        %2925 = vst [vmem:[#allocation2 + $0x58] sm:$0xff] %v2893
        %2926 = vst [vmem:[#allocation2 + $0x60] sm:$0xff] %v2894
        %2927 = vst [vmem:[#allocation2 + $0x68] sm:$0xff] %v2895
        %2928 = vst [vmem:[#allocation2 + $0x70] sm:$0xff] %v2896
        %2929 = vst [vmem:[#allocation2 + $0x78] sm:$0xff] %v2897
        %2930 = vst [vmem:[#allocation2 + $0x80] sm:$0xff] %v2898
        %2931 = vst [vmem:[#allocation2 + $0x88] sm:$0xff] %v2899
        %2932 = vst [vmem:[#allocation2 + $0x90] sm:$0xff] %v2900
        %2933 = vst [vmem:[#allocation2 + $0x98] sm:$0xff] %v2901
        %2934 = vst [vmem:[#allocation2 + $0xa0] sm:$0xff] %v2902
        %2935 = vst [vmem:[#allocation2 + $0xa8] sm:$0xff] %v2903
        %2936 = vst [vmem:[#allocation2 + $0xb0] sm:$0xff] %v2904
        %2937 = vst [vmem:[#allocation2 + $0xb8] sm:$0xff] %v2905
        %2938 = vst [vmem:[#allocation2 + $0xc0] sm:$0xff] %v2906
        %2939 = vst [vmem:[#allocation2 + $0xc8] sm:$0xff] %v2907
        %2940 = vst [vmem:[#allocation2 + $0xd0] sm:$0xff] %v2908
        %2941 = vst [vmem:[#allocation2 + $0xd8] sm:$0xff] %v2909
        %2942 = vst [vmem:[#allocation2 + $0xe0] sm:$0xff] %v2910
        %2943 = vst [vmem:[#allocation2 + $0xe8] sm:$0xff] %v2911
        %2944 = vst [vmem:[#allocation2 + $0xf0] sm:$0xff] %v2912
        %2945 = vst [vmem:[#allocation2 + $0xf8] sm:$0xff] %v2913
        %s2946 = sadd.s32 %s183, 2
        %s2947 = smul.u32 %s2946, 24
        %s2948 = scalar_lea.vmem %s177, %s2947
        %v2949 = vld [vmem:[%s2948] sm:$0xff]
        %v2950 = vld [vmem:[%s2948 + $0x8] sm:$0xff]
        %v2951 = vld [vmem:[%s2948 + $0x18] sm:$0xff]
        %v2952 = vld [vmem:[%s2948 + $0x20] sm:$0xff]
        %v2953 = vld [vmem:[%s2948 + $0x30] sm:$0xff]
        %v2954 = vld [vmem:[%s2948 + $0x38] sm:$0xff]
        %v2955 = vld [vmem:[%s2948 + $0x48] sm:$0xff]
        %v2956 = vld [vmem:[%s2948 + $0x50] sm:$0xff]
        %v2957 = vld [vmem:[%s2948 + $0x60] sm:$0xff]
        %v2958 = vld [vmem:[%s2948 + $0x68] sm:$0xff]
        %v2959 = vld [vmem:[%s2948 + $0x78] sm:$0xff]
        %v2960 = vld [vmem:[%s2948 + $0x80] sm:$0xff]
        %v2961 = vld [vmem:[%s2948 + $0x90] sm:$0xff]
        %v2962 = vld [vmem:[%s2948 + $0x98] sm:$0xff]
        %v2963 = vld [vmem:[%s2948 + $0xa8] sm:$0xff]
        %v2964 = vld [vmem:[%s2948 + $0xb0] sm:$0xff]
        %v2965 = vld [vmem:[%s2948 + $0xc0] sm:$0xff]
        %v2966 = vld [vmem:[%s2948 + $0xc8] sm:$0xff]
        %v2967 = vld [vmem:[%s2948 + $0xd8] sm:$0xff]
        %v2968 = vld [vmem:[%s2948 + $0xe0] sm:$0xff]
        %v2969 = vld [vmem:[%s2948 + $0xf0] sm:$0xff]
        %v2970 = vld [vmem:[%s2948 + $0xf8] sm:$0xff]
        %v2971 = vld [vmem:[%s2948 + $0x108] sm:$0xff]
        %v2972 = vld [vmem:[%s2948 + $0x110] sm:$0xff]
        %v2973 = vld [vmem:[%s2948 + $0x120] sm:$0xff]
        %v2974 = vld [vmem:[%s2948 + $0x128] sm:$0xff]
        %v2975 = vld [vmem:[%s2948 + $0x138] sm:$0xff]
        %v2976 = vld [vmem:[%s2948 + $0x140] sm:$0xff]
        %v2977 = vld [vmem:[%s2948 + $0x150] sm:$0xff]
        %v2978 = vld [vmem:[%s2948 + $0x158] sm:$0xff]
        %v2979 = vld [vmem:[%s2948 + $0x168] sm:$0xff]
        %v2980 = vld [vmem:[%s2948 + $0x170] sm:$0xff]
        %v2981 = vld [vmem:[#allocation2] sm:$0xff]
        %v2982 = vld [vmem:[#allocation2 + $0x8] sm:$0xff]
        %v2983 = vld [vmem:[#allocation2 + $0x10] sm:$0xff]
        %v2984 = vld [vmem:[#allocation2 + $0x18] sm:$0xff]
        %v2985 = vld [vmem:[#allocation2 + $0x20] sm:$0xff]
        %v2986 = vld [vmem:[#allocation2 + $0x28] sm:$0xff]
        %v2987 = vld [vmem:[#allocation2 + $0x30] sm:$0xff]
        %v2988 = vld [vmem:[#allocation2 + $0x38] sm:$0xff]
        %v2989 = vld [vmem:[#allocation2 + $0x40] sm:$0xff]
        %v2990 = vld [vmem:[#allocation2 + $0x48] sm:$0xff]
        %v2991 = vld [vmem:[#allocation2 + $0x50] sm:$0xff]
        %v2992 = vld [vmem:[#allocation2 + $0x58] sm:$0xff]
        %v2993 = vld [vmem:[#allocation2 + $0x60] sm:$0xff]
        %v2994 = vld [vmem:[#allocation2 + $0x68] sm:$0xff]
        %v2995 = vld [vmem:[#allocation2 + $0x70] sm:$0xff]
        %v2996 = vld [vmem:[#allocation2 + $0x78] sm:$0xff]
        %v2997 = vld [vmem:[#allocation2 + $0x80] sm:$0xff]
        %v2998 = vld [vmem:[#allocation2 + $0x88] sm:$0xff]
        %v2999 = vld [vmem:[#allocation2 + $0x90] sm:$0xff]
        %v3000 = vld [vmem:[#allocation2 + $0x98] sm:$0xff]
        %v3001 = vld [vmem:[#allocation2 + $0xa0] sm:$0xff]
        %v3002 = vld [vmem:[#allocation2 + $0xa8] sm:$0xff]
        %v3003 = vld [vmem:[#allocation2 + $0xb0] sm:$0xff]
        %v3004 = vld [vmem:[#allocation2 + $0xb8] sm:$0xff]
        %v3005 = vld [vmem:[#allocation2 + $0xc0] sm:$0xff]
        %v3006 = vld [vmem:[#allocation2 + $0xc8] sm:$0xff]
        %v3007 = vld [vmem:[#allocation2 + $0xd0] sm:$0xff]
        %v3008 = vld [vmem:[#allocation2 + $0xd8] sm:$0xff]
        %v3009 = vld [vmem:[#allocation2 + $0xe0] sm:$0xff]
        %v3010 = vld [vmem:[#allocation2 + $0xe8] sm:$0xff]
        %v3011 = vld [vmem:[#allocation2 + $0xf0] sm:$0xff]
        %v3012 = vld [vmem:[#allocation2 + $0xf8] sm:$0xff]
        %s3013 = scalar_lea.vmem %s181, 24
        %v3014 = vld [vmem:[%s3013] sm:$0xf]
        %v3016 = vsel %vm283, %v2949, 0
        %v3019 = vsel %vm283, %v2950, 0
        %v3022 = vsel %vm283, %v2951, 0
        %v3025 = vsel %vm283, %v2952, 0
        %v3028 = vsel %vm283, %v2953, 0
        %v3031 = vsel %vm283, %v2954, 0
        %v3034 = vsel %vm283, %v2955, 0
        %v3037 = vsel %vm283, %v2956, 0
        %v3040 = vsel %vm283, %v2957, 0
        %v3043 = vsel %vm283, %v2958, 0
        %v3046 = vsel %vm283, %v2959, 0
        %v3049 = vsel %vm283, %v2960, 0
        %v3052 = vsel %vm283, %v2961, 0
        %v3055 = vsel %vm283, %v2962, 0
        %v3058 = vsel %vm283, %v2963, 0
        %v3061 = vsel %vm283, %v2964, 0
        %v3064 = vsel %vm283, %v2965, 0
        %v3067 = vsel %vm283, %v2966, 0
        %v3070 = vsel %vm283, %v2967, 0
        %v3073 = vsel %vm283, %v2968, 0
        %v3076 = vsel %vm283, %v2969, 0
        %v3079 = vsel %vm283, %v2970, 0
        %v3082 = vsel %vm283, %v2971, 0
        %v3085 = vsel %vm283, %v2972, 0
        %v3088 = vsel %vm283, %v2973, 0
        %v3091 = vsel %vm283, %v2974, 0
        %v3094 = vsel %vm283, %v2975, 0
        %v3097 = vsel %vm283, %v2976, 0
        %v3100 = vsel %vm283, %v2977, 0
        %v3103 = vsel %vm283, %v2978, 0
        %v3106 = vsel %vm283, %v2979, 0
        %v3109 = vsel %vm283, %v2980, 0
        %v3112 = vsel %vm380, %v3014, 0
        %3114 = vmatprep.subr.mxu0 0.0
        %3115 = vmatpush1.msra.mxu0 %v3112
        %3116 = vmatprep.subr.mxu0 0.0
        %3117 = vmatpush1.msra.mxu0 0.0
        %3118 = vmatprep.subr.mxu0 0.0
        %3119 = vmatpush1.msra.mxu0 0.0
        %3120 = vmatprep.subr.mxu0 0.0
        %3121 = vmatpush1.msra.mxu0 0.0
        %3122 = vmatprep.subr.mxu0 0.0
        %3123 = vmatpush1.msra.mxu0 0.0
        %3124 = vmatprep.subr.mxu0 0.0
        %3125 = vmatpush1.msra.mxu0 0.0
        %3126 = vmatprep.subr.mxu0 0.0
        %3127 = vmatpush1.msra.mxu0 0.0
        %3128 = vmatprep.subr.mxu0 0.0
        %3129 = vmatpush1.msra.mxu0 0.0
        %3130 = vmatprep.subr.mxu0 0.0
        %3131 = vmatpush1.msra.mxu0 0.0
        %3132 = vmatprep.subr.mxu0 0.0
        %3133 = vmatpush1.msra.mxu0 0.0
        %3134 = vmatprep.subr.mxu0 0.0
        %3135 = vmatpush1.msra.mxu0 0.0
        %3136 = vmatprep.subr.mxu0 0.0
        %3137 = vmatpush1.msra.mxu0 0.0
        %3138 = vmatprep.subr.mxu0 0.0
        %3139 = vmatpush1.msra.mxu0 0.0
        %3140 = vmatprep.subr.mxu0 0.0
        %3141 = vmatpush1.msra.mxu0 0.0
        %3142 = vmatprep.subr.mxu0 0.0
        %3143 = vmatpush1.msra.mxu0 0.0
        %3144 = vmatprep.subr.mxu0 0.0
        %3145 = vmatpush1.msra.mxu0 0.0
        %3146 = vmatprep.subr.mxu0 0.0
        %3147 = vmatpush1.msra.mxu0 0.0
        %3148 = vmatprep.subr.mxu0 0.0
        %3149 = vmatpush1.msra.mxu0 0.0
        %3150 = vmatprep.subr.mxu0 0.0
        %3151 = vmatpush1.msra.mxu0 0.0
        %3152 = vmatprep.subr.mxu0 0.0
        %3153 = vmatpush1.msra.mxu0 0.0
        %3154 = vmatprep.subr.mxu0 0.0
        %3155 = vmatpush1.msra.mxu0 0.0
        %3156 = vmatprep.subr.mxu0 0.0
        %3157 = vmatpush1.msra.mxu0 0.0
        %3158 = vmatprep.subr.mxu0 0.0
        %3159 = vmatpush1.msra.mxu0 0.0
        %3160 = vmatprep.subr.mxu0 0.0
        %3161 = vmatpush1.msra.mxu0 0.0
        %3162 = vmatprep.subr.mxu0 0.0
        %3163 = vmatpush1.msra.mxu0 0.0
        %3164 = vmatprep.subr.mxu0 0.0
        %3165 = vmatpush1.msra.mxu0 0.0
        %3166 = vmatprep.subr.mxu0 0.0
        %3167 = vmatpush1.msra.mxu0 0.0
        %3168 = vmatprep.subr.mxu0 0.0
        %3169 = vmatpush1.msra.mxu0 0.0
        %3170 = vmatprep.subr.mxu0 0.0
        %3171 = vmatpush1.msra.mxu0 0.0
        %3172 = vmatprep.subr.mxu0 0.0
        %3173 = vmatpush1.msra.mxu0 0.0
        %3174 = vmatprep.subr.mxu0 0.0
        %3175 = vmatpush1.msra.mxu0 0.0
        %3176 = vmatprep.subr.mxu0 0.0
        %3177 = vmatpush1.msra.mxu0 0.0
        %3178 = vmatprep.mubr.f32.mxu0 0.0
        %3179 = vmatmul.mubr.f32.gmra.mrb[0].mxu0 %v3016
        %v3180 = vpop.f32.mrb[0].mxu0
        %v3181 = vadd.f32 0.0, %v3180
        %v3182 = vpop.f32.mrb[0].mxu0
        %3183 = vmatprep.mubr.f32.mxu0 0.0
        %3184 = vmatmul.mubr.f32.gmra.mrb[0].mxu0 %v3019
        %v3185 = vpop.f32.mrb[0].mxu0
        %v3186 = vadd.f32 0.0, %v3185
        %v3187 = vpop.f32.mrb[0].mxu0
        %3188 = vmatprep.mubr.f32.mxu0 0.0
        %3189 = vmatmul.mubr.f32.gmra.mrb[0].mxu0 %v3022
        %v3190 = vpop.f32.mrb[0].mxu0
        %v3191 = vadd.f32 0.0, %v3190
        %v3192 = vpop.f32.mrb[0].mxu0
        %3193 = vmatprep.mubr.f32.mxu0 0.0
        %3194 = vmatmul.mubr.f32.gmra.mrb[0].mxu0 %v3025
        %v3195 = vpop.f32.mrb[0].mxu0
        %v3196 = vadd.f32 0.0, %v3195
        %v3197 = vpop.f32.mrb[0].mxu0
        %3198 = vmatprep.mubr.f32.mxu0 0.0
        %3199 = vmatmul.mubr.f32.gmra.mrb[0].mxu0 %v3028
        %v3200 = vpop.f32.mrb[0].mxu0
        %v3201 = vadd.f32 0.0, %v3200
        %v3202 = vpop.f32.mrb[0].mxu0
        %3203 = vmatprep.mubr.f32.mxu0 0.0
        %3204 = vmatmul.mubr.f32.gmra.mrb[0].mxu0 %v3031
        %v3205 = vpop.f32.mrb[0].mxu0
        %v3206 = vadd.f32 0.0, %v3205
        %v3207 = vpop.f32.mrb[0].mxu0
        %3208 = vmatprep.mubr.f32.mxu0 0.0
        %3209 = vmatmul.mubr.f32.gmra.mrb[0].mxu0 %v3034
        %v3210 = vpop.f32.mrb[0].mxu0
        %v3211 = vadd.f32 0.0, %v3210
        %v3212 = vpop.f32.mrb[0].mxu0
        %3213 = vmatprep.mubr.f32.mxu0 0.0
        %3214 = vmatmul.mubr.f32.gmra.mrb[0].mxu0 %v3037
        %v3215 = vpop.f32.mrb[0].mxu0
        %v3216 = vadd.f32 0.0, %v3215
        %v3217 = vpop.f32.mrb[0].mxu0
        %3218 = vmatprep.mubr.f32.mxu0 0.0
        %3219 = vmatmul.mubr.f32.gmra.mrb[0].mxu0 %v3040
        %v3220 = vpop.f32.mrb[0].mxu0
        %v3221 = vadd.f32 0.0, %v3220
        %v3222 = vpop.f32.mrb[0].mxu0
        %3223 = vmatprep.mubr.f32.mxu0 0.0
        %3224 = vmatmul.mubr.f32.gmra.mrb[0].mxu0 %v3043
        %v3225 = vpop.f32.mrb[0].mxu0
        %v3226 = vadd.f32 0.0, %v3225
        %v3227 = vpop.f32.mrb[0].mxu0
        %3228 = vmatprep.mubr.f32.mxu0 0.0
        %3229 = vmatmul.mubr.f32.gmra.mrb[0].mxu0 %v3046
        %v3230 = vpop.f32.mrb[0].mxu0
        %v3231 = vadd.f32 0.0, %v3230
        %v3232 = vpop.f32.mrb[0].mxu0
        %3233 = vmatprep.mubr.f32.mxu0 0.0
        %3234 = vmatmul.mubr.f32.gmra.mrb[0].mxu0 %v3049
        %v3235 = vpop.f32.mrb[0].mxu0
        %v3236 = vadd.f32 0.0, %v3235
        %v3237 = vpop.f32.mrb[0].mxu0
        %3238 = vmatprep.mubr.f32.mxu0 0.0
        %3239 = vmatmul.mubr.f32.gmra.mrb[0].mxu0 %v3052
        %v3240 = vpop.f32.mrb[0].mxu0
        %v3241 = vadd.f32 0.0, %v3240
        %v3242 = vpop.f32.mrb[0].mxu0
        %3243 = vmatprep.mubr.f32.mxu0 0.0
        %3244 = vmatmul.mubr.f32.gmra.mrb[0].mxu0 %v3055
        %v3245 = vpop.f32.mrb[0].mxu0
        %v3246 = vadd.f32 0.0, %v3245
        %v3247 = vpop.f32.mrb[0].mxu0
        %3248 = vmatprep.mubr.f32.mxu0 0.0
        %3249 = vmatmul.mubr.f32.gmra.mrb[0].mxu0 %v3058
        %v3250 = vpop.f32.mrb[0].mxu0
        %v3251 = vadd.f32 0.0, %v3250
        %v3252 = vpop.f32.mrb[0].mxu0
        %3253 = vmatprep.mubr.f32.mxu0 0.0
        %3254 = vmatmul.mubr.f32.gmra.mrb[0].mxu0 %v3061
        %v3255 = vpop.f32.mrb[0].mxu0
        %v3256 = vadd.f32 0.0, %v3255
        %v3257 = vpop.f32.mrb[0].mxu0
        %3258 = vmatprep.mubr.f32.mxu0 0.0
        %3259 = vmatmul.mubr.f32.gmra.mrb[0].mxu0 %v3064
        %v3260 = vpop.f32.mrb[0].mxu0
        %v3261 = vadd.f32 0.0, %v3260
        %v3262 = vpop.f32.mrb[0].mxu0
        %3263 = vmatprep.mubr.f32.mxu0 0.0
        %3264 = vmatmul.mubr.f32.gmra.mrb[0].mxu0 %v3067
        %v3265 = vpop.f32.mrb[0].mxu0
        %v3266 = vadd.f32 0.0, %v3265
        %v3267 = vpop.f32.mrb[0].mxu0
        %3268 = vmatprep.mubr.f32.mxu0 0.0
        %3269 = vmatmul.mubr.f32.gmra.mrb[0].mxu0 %v3070
        %v3270 = vpop.f32.mrb[0].mxu0
        %v3271 = vadd.f32 0.0, %v3270
        %v3272 = vpop.f32.mrb[0].mxu0
        %3273 = vmatprep.mubr.f32.mxu0 0.0
        %3274 = vmatmul.mubr.f32.gmra.mrb[0].mxu0 %v3073
        %v3275 = vpop.f32.mrb[0].mxu0
        %v3276 = vadd.f32 0.0, %v3275
        %v3277 = vpop.f32.mrb[0].mxu0
        %3278 = vmatprep.mubr.f32.mxu0 0.0
        %3279 = vmatmul.mubr.f32.gmra.mrb[0].mxu0 %v3076
        %v3280 = vpop.f32.mrb[0].mxu0
        %v3281 = vadd.f32 0.0, %v3280
        %v3282 = vpop.f32.mrb[0].mxu0
        %3283 = vmatprep.mubr.f32.mxu0 0.0
        %3284 = vmatmul.mubr.f32.gmra.mrb[0].mxu0 %v3079
        %v3285 = vpop.f32.mrb[0].mxu0
        %v3286 = vadd.f32 0.0, %v3285
        %v3287 = vpop.f32.mrb[0].mxu0
        %3288 = vmatprep.mubr.f32.mxu0 0.0
        %3289 = vmatmul.mubr.f32.gmra.mrb[0].mxu0 %v3082
        %v3290 = vpop.f32.mrb[0].mxu0
        %v3291 = vadd.f32 0.0, %v3290
        %v3292 = vpop.f32.mrb[0].mxu0
        %3293 = vmatprep.mubr.f32.mxu0 0.0
        %3294 = vmatmul.mubr.f32.gmra.mrb[0].mxu0 %v3085
        %v3295 = vpop.f32.mrb[0].mxu0
        %v3296 = vadd.f32 0.0, %v3295
        %v3297 = vpop.f32.mrb[0].mxu0
        %3298 = vmatprep.mubr.f32.mxu0 0.0
        %3299 = vmatmul.mubr.f32.gmra.mrb[0].mxu0 %v3088
        %v3300 = vpop.f32.mrb[0].mxu0
        %v3301 = vadd.f32 0.0, %v3300
        %v3302 = vpop.f32.mrb[0].mxu0
        %3303 = vmatprep.mubr.f32.mxu0 0.0
        %3304 = vmatmul.mubr.f32.gmra.mrb[0].mxu0 %v3091
        %v3305 = vpop.f32.mrb[0].mxu0
        %v3306 = vadd.f32 0.0, %v3305
        %v3307 = vpop.f32.mrb[0].mxu0
        %3308 = vmatprep.mubr.f32.mxu0 0.0
        %3309 = vmatmul.mubr.f32.gmra.mrb[0].mxu0 %v3094
        %v3310 = vpop.f32.mrb[0].mxu0
        %v3311 = vadd.f32 0.0, %v3310
        %v3312 = vpop.f32.mrb[0].mxu0
        %3313 = vmatprep.mubr.f32.mxu0 0.0
        %3314 = vmatmul.mubr.f32.gmra.mrb[0].mxu0 %v3097
        %v3315 = vpop.f32.mrb[0].mxu0
        %v3316 = vadd.f32 0.0, %v3315
        %v3317 = vpop.f32.mrb[0].mxu0
        %3318 = vmatprep.mubr.f32.mxu0 0.0
        %3319 = vmatmul.mubr.f32.gmra.mrb[0].mxu0 %v3100
        %v3320 = vpop.f32.mrb[0].mxu0
        %v3321 = vadd.f32 0.0, %v3320
        %v3322 = vpop.f32.mrb[0].mxu0
        %3323 = vmatprep.mubr.f32.mxu0 0.0
        %3324 = vmatmul.mubr.f32.gmra.mrb[0].mxu0 %v3103
        %v3325 = vpop.f32.mrb[0].mxu0
        %v3326 = vadd.f32 0.0, %v3325
        %v3327 = vpop.f32.mrb[0].mxu0
        %3328 = vmatprep.mubr.f32.mxu0 0.0
        %3329 = vmatmul.mubr.f32.gmra.mrb[0].mxu0 %v3106
        %v3330 = vpop.f32.mrb[0].mxu0
        %v3331 = vadd.f32 0.0, %v3330
        %v3332 = vpop.f32.mrb[0].mxu0
        %3333 = vmatprep.mubr.f32.mxu0 0.0
        %3334 = vmatmul.mubr.f32.gmra.mrb[0].mxu0 %v3109
        %v3335 = vpop.f32.mrb[0].mxu0
        %v3336 = vadd.f32 0.0, %v3335
        %v3337 = vpop.f32.mrb[0].mxu0
        %3338 = vdwg.mxu0
        %v3339 = vadd.f32 %v2981, %v3181
        %v3340 = vadd.f32 %v2982, %v3186
        %v3341 = vadd.f32 %v2983, %v3191
        %v3342 = vadd.f32 %v2984, %v3196
        %v3343 = vadd.f32 %v2985, %v3201
        %v3344 = vadd.f32 %v2986, %v3206
        %v3345 = vadd.f32 %v2987, %v3211
        %v3346 = vadd.f32 %v2988, %v3216
        %v3347 = vadd.f32 %v2989, %v3221
        %v3348 = vadd.f32 %v2990, %v3226
        %v3349 = vadd.f32 %v2991, %v3231
        %v3350 = vadd.f32 %v2992, %v3236
        %v3351 = vadd.f32 %v2993, %v3241
        %v3352 = vadd.f32 %v2994, %v3246
        %v3353 = vadd.f32 %v2995, %v3251
        %v3354 = vadd.f32 %v2996, %v3256
        %v3355 = vadd.f32 %v2997, %v3261
        %v3356 = vadd.f32 %v2998, %v3266
        %v3357 = vadd.f32 %v2999, %v3271
        %v3358 = vadd.f32 %v3000, %v3276
        %v3359 = vadd.f32 %v3001, %v3281
        %v3360 = vadd.f32 %v3002, %v3286
        %v3361 = vadd.f32 %v3003, %v3291
        %v3362 = vadd.f32 %v3004, %v3296
        %v3363 = vadd.f32 %v3005, %v3301
        %v3364 = vadd.f32 %v3006, %v3306
        %v3365 = vadd.f32 %v3007, %v3311
        %v3366 = vadd.f32 %v3008, %v3316
        %v3367 = vadd.f32 %v3009, %v3321
        %v3368 = vadd.f32 %v3010, %v3326
        %v3369 = vadd.f32 %v3011, %v3331
        %v3370 = vadd.f32 %v3012, %v3336
        %3371 = vst [vmem:[#allocation2] sm:$0xff] %v3339
        %3372 = vst [vmem:[#allocation2 + $0x8] sm:$0xff] %v3340
        %3373 = vst [vmem:[#allocation2 + $0x10] sm:$0xff] %v3341
        %3374 = vst [vmem:[#allocation2 + $0x18] sm:$0xff] %v3342
        %3375 = vst [vmem:[#allocation2 + $0x20] sm:$0xff] %v3343
        %3376 = vst [vmem:[#allocation2 + $0x28] sm:$0xff] %v3344
        %3377 = vst [vmem:[#allocation2 + $0x30] sm:$0xff] %v3345
        %3378 = vst [vmem:[#allocation2 + $0x38] sm:$0xff] %v3346
        %3379 = vst [vmem:[#allocation2 + $0x40] sm:$0xff] %v3347
        %3380 = vst [vmem:[#allocation2 + $0x48] sm:$0xff] %v3348
        %3381 = vst [vmem:[#allocation2 + $0x50] sm:$0xff] %v3349
        %3382 = vst [vmem:[#allocation2 + $0x58] sm:$0xff] %v3350
        %3383 = vst [vmem:[#allocation2 + $0x60] sm:$0xff] %v3351
        %3384 = vst [vmem:[#allocation2 + $0x68] sm:$0xff] %v3352
        %3385 = vst [vmem:[#allocation2 + $0x70] sm:$0xff] %v3353
        %3386 = vst [vmem:[#allocation2 + $0x78] sm:$0xff] %v3354
        %3387 = vst [vmem:[#allocation2 + $0x80] sm:$0xff] %v3355
        %3388 = vst [vmem:[#allocation2 + $0x88] sm:$0xff] %v3356
        %3389 = vst [vmem:[#allocation2 + $0x90] sm:$0xff] %v3357
        %3390 = vst [vmem:[#allocation2 + $0x98] sm:$0xff] %v3358
        %3391 = vst [vmem:[#allocation2 + $0xa0] sm:$0xff] %v3359
        %3392 = vst [vmem:[#allocation2 + $0xa8] sm:$0xff] %v3360
        %3393 = vst [vmem:[#allocation2 + $0xb0] sm:$0xff] %v3361
        %3394 = vst [vmem:[#allocation2 + $0xb8] sm:$0xff] %v3362
        %3395 = vst [vmem:[#allocation2 + $0xc0] sm:$0xff] %v3363
        %3396 = vst [vmem:[#allocation2 + $0xc8] sm:$0xff] %v3364
        %3397 = vst [vmem:[#allocation2 + $0xd0] sm:$0xff] %v3365
        %3398 = vst [vmem:[#allocation2 + $0xd8] sm:$0xff] %v3366
        %3399 = vst [vmem:[#allocation2 + $0xe0] sm:$0xff] %v3367
        %3400 = vst [vmem:[#allocation2 + $0xe8] sm:$0xff] %v3368
        %3401 = vst [vmem:[#allocation2 + $0xf0] sm:$0xff] %v3369
        %3402 = vst [vmem:[#allocation2 + $0xf8] sm:$0xff] %v3370
        %v3403 = vld [vmem:[%s2948 + $0x1] sm:$0xff]
        %v3404 = vld [vmem:[%s2948 + $0x9] sm:$0xff]
        %v3405 = vld [vmem:[%s2948 + $0x19] sm:$0xff]
        %v3406 = vld [vmem:[%s2948 + $0x21] sm:$0xff]
        %v3407 = vld [vmem:[%s2948 + $0x31] sm:$0xff]
        %v3408 = vld [vmem:[%s2948 + $0x39] sm:$0xff]
        %v3409 = vld [vmem:[%s2948 + $0x49] sm:$0xff]
        %v3410 = vld [vmem:[%s2948 + $0x51] sm:$0xff]
        %v3411 = vld [vmem:[%s2948 + $0x61] sm:$0xff]
        %v3412 = vld [vmem:[%s2948 + $0x69] sm:$0xff]
        %v3413 = vld [vmem:[%s2948 + $0x79] sm:$0xff]
        %v3414 = vld [vmem:[%s2948 + $0x81] sm:$0xff]
        %v3415 = vld [vmem:[%s2948 + $0x91] sm:$0xff]
        %v3416 = vld [vmem:[%s2948 + $0x99] sm:$0xff]
        %v3417 = vld [vmem:[%s2948 + $0xa9] sm:$0xff]
        %v3418 = vld [vmem:[%s2948 + $0xb1] sm:$0xff]
        %v3419 = vld [vmem:[%s2948 + $0xc1] sm:$0xff]
        %v3420 = vld [vmem:[%s2948 + $0xc9] sm:$0xff]
        %v3421 = vld [vmem:[%s2948 + $0xd9] sm:$0xff]
        %v3422 = vld [vmem:[%s2948 + $0xe1] sm:$0xff]
        %v3423 = vld [vmem:[%s2948 + $0xf1] sm:$0xff]
        %v3424 = vld [vmem:[%s2948 + $0xf9] sm:$0xff]
        %v3425 = vld [vmem:[%s2948 + $0x109] sm:$0xff]
        %v3426 = vld [vmem:[%s2948 + $0x111] sm:$0xff]
        %v3427 = vld [vmem:[%s2948 + $0x121] sm:$0xff]
        %v3428 = vld [vmem:[%s2948 + $0x129] sm:$0xff]
        %v3429 = vld [vmem:[%s2948 + $0x139] sm:$0xff]
        %v3430 = vld [vmem:[%s2948 + $0x141] sm:$0xff]
        %v3431 = vld [vmem:[%s2948 + $0x151] sm:$0xff]
        %v3432 = vld [vmem:[%s2948 + $0x159] sm:$0xff]
        %v3433 = vld [vmem:[%s2948 + $0x169] sm:$0xff]
        %v3434 = vld [vmem:[%s2948 + $0x171] sm:$0xff]
        %v3435 = vld [vmem:[#allocation2] sm:$0xff]
        %v3436 = vld [vmem:[#allocation2 + $0x8] sm:$0xff]
        %v3437 = vld [vmem:[#allocation2 + $0x10] sm:$0xff]
        %v3438 = vld [vmem:[#allocation2 + $0x18] sm:$0xff]
        %v3439 = vld [vmem:[#allocation2 + $0x20] sm:$0xff]
        %v3440 = vld [vmem:[#allocation2 + $0x28] sm:$0xff]
        %v3441 = vld [vmem:[#allocation2 + $0x30] sm:$0xff]
        %v3442 = vld [vmem:[#allocation2 + $0x38] sm:$0xff]
        %v3443 = vld [vmem:[#allocation2 + $0x40] sm:$0xff]
        %v3444 = vld [vmem:[#allocation2 + $0x48] sm:$0xff]
        %v3445 = vld [vmem:[#allocation2 + $0x50] sm:$0xff]
        %v3446 = vld [vmem:[#allocation2 + $0x58] sm:$0xff]
        %v3447 = vld [vmem:[#allocation2 + $0x60] sm:$0xff]
        %v3448 = vld [vmem:[#allocation2 + $0x68] sm:$0xff]
        %v3449 = vld [vmem:[#allocation2 + $0x70] sm:$0xff]
        %v3450 = vld [vmem:[#allocation2 + $0x78] sm:$0xff]
        %v3451 = vld [vmem:[#allocation2 + $0x80] sm:$0xff]
        %v3452 = vld [vmem:[#allocation2 + $0x88] sm:$0xff]
        %v3453 = vld [vmem:[#allocation2 + $0x90] sm:$0xff]
        %v3454 = vld [vmem:[#allocation2 + $0x98] sm:$0xff]
        %v3455 = vld [vmem:[#allocation2 + $0xa0] sm:$0xff]
        %v3456 = vld [vmem:[#allocation2 + $0xa8] sm:$0xff]
        %v3457 = vld [vmem:[#allocation2 + $0xb0] sm:$0xff]
        %v3458 = vld [vmem:[#allocation2 + $0xb8] sm:$0xff]
        %v3459 = vld [vmem:[#allocation2 + $0xc0] sm:$0xff]
        %v3460 = vld [vmem:[#allocation2 + $0xc8] sm:$0xff]
        %v3461 = vld [vmem:[#allocation2 + $0xd0] sm:$0xff]
        %v3462 = vld [vmem:[#allocation2 + $0xd8] sm:$0xff]
        %v3463 = vld [vmem:[#allocation2 + $0xe0] sm:$0xff]
        %v3464 = vld [vmem:[#allocation2 + $0xe8] sm:$0xff]
        %v3465 = vld [vmem:[#allocation2 + $0xf0] sm:$0xff]
        %v3466 = vld [vmem:[#allocation2 + $0xf8] sm:$0xff]
        %s3467 = scalar_lea.vmem %s181, 28
        %v3468 = vld [vmem:[%s3467] sm:$0xf]
        %v3470 = vsel %vm283, %v3403, 0
        %v3473 = vsel %vm283, %v3404, 0
        %v3476 = vsel %vm283, %v3405, 0
        %v3479 = vsel %vm283, %v3406, 0
        %v3482 = vsel %vm283, %v3407, 0
        %v3485 = vsel %vm283, %v3408, 0
        %v3488 = vsel %vm283, %v3409, 0
        %v3491 = vsel %vm283, %v3410, 0
        %v3494 = vsel %vm283, %v3411, 0
        %v3497 = vsel %vm283, %v3412, 0
        %v3500 = vsel %vm283, %v3413, 0
        %v3503 = vsel %vm283, %v3414, 0
        %v3506 = vsel %vm283, %v3415, 0
        %v3509 = vsel %vm283, %v3416, 0
        %v3512 = vsel %vm283, %v3417, 0
        %v3515 = vsel %vm283, %v3418, 0
        %v3518 = vsel %vm283, %v3419, 0
        %v3521 = vsel %vm283, %v3420, 0
        %v3524 = vsel %vm283, %v3421, 0
        %v3527 = vsel %vm283, %v3422, 0
        %v3530 = vsel %vm283, %v3423, 0
        %v3533 = vsel %vm283, %v3424, 0
        %v3536 = vsel %vm283, %v3425, 0
        %v3539 = vsel %vm283, %v3426, 0
        %v3542 = vsel %vm283, %v3427, 0
        %v3545 = vsel %vm283, %v3428, 0
        %v3548 = vsel %vm283, %v3429, 0
        %v3551 = vsel %vm283, %v3430, 0
        %v3554 = vsel %vm283, %v3431, 0
        %v3557 = vsel %vm283, %v3432, 0
        %v3560 = vsel %vm283, %v3433, 0
        %v3563 = vsel %vm283, %v3434, 0
        %v3566 = vsel %vm380, %v3468, 0
        %3568 = vmatprep.subr.mxu0 0.0
        %3569 = vmatpush1.msra.mxu0 %v3566
        %3570 = vmatprep.subr.mxu0 0.0
        %3571 = vmatpush1.msra.mxu0 0.0
        %3572 = vmatprep.subr.mxu0 0.0
        %3573 = vmatpush1.msra.mxu0 0.0
        %3574 = vmatprep.subr.mxu0 0.0
        %3575 = vmatpush1.msra.mxu0 0.0
        %3576 = vmatprep.subr.mxu0 0.0
        %3577 = vmatpush1.msra.mxu0 0.0
        %3578 = vmatprep.subr.mxu0 0.0
        %3579 = vmatpush1.msra.mxu0 0.0
        %3580 = vmatprep.subr.mxu0 0.0
        %3581 = vmatpush1.msra.mxu0 0.0
        %3582 = vmatprep.subr.mxu0 0.0
        %3583 = vmatpush1.msra.mxu0 0.0
        %3584 = vmatprep.subr.mxu0 0.0
        %3585 = vmatpush1.msra.mxu0 0.0
        %3586 = vmatprep.subr.mxu0 0.0
        %3587 = vmatpush1.msra.mxu0 0.0
        %3588 = vmatprep.subr.mxu0 0.0
        %3589 = vmatpush1.msra.mxu0 0.0
        %3590 = vmatprep.subr.mxu0 0.0
        %3591 = vmatpush1.msra.mxu0 0.0
        %3592 = vmatprep.subr.mxu0 0.0
        %3593 = vmatpush1.msra.mxu0 0.0
        %3594 = vmatprep.subr.mxu0 0.0
        %3595 = vmatpush1.msra.mxu0 0.0
        %3596 = vmatprep.subr.mxu0 0.0
        %3597 = vmatpush1.msra.mxu0 0.0
        %3598 = vmatprep.subr.mxu0 0.0
        %3599 = vmatpush1.msra.mxu0 0.0
        %3600 = vmatprep.subr.mxu0 0.0
        %3601 = vmatpush1.msra.mxu0 0.0
        %3602 = vmatprep.subr.mxu0 0.0
        %3603 = vmatpush1.msra.mxu0 0.0
        %3604 = vmatprep.subr.mxu0 0.0
        %3605 = vmatpush1.msra.mxu0 0.0
        %3606 = vmatprep.subr.mxu0 0.0
        %3607 = vmatpush1.msra.mxu0 0.0
        %3608 = vmatprep.subr.mxu0 0.0
        %3609 = vmatpush1.msra.mxu0 0.0
        %3610 = vmatprep.subr.mxu0 0.0
        %3611 = vmatpush1.msra.mxu0 0.0
        %3612 = vmatprep.subr.mxu0 0.0
        %3613 = vmatpush1.msra.mxu0 0.0
        %3614 = vmatprep.subr.mxu0 0.0
        %3615 = vmatpush1.msra.mxu0 0.0
        %3616 = vmatprep.subr.mxu0 0.0
        %3617 = vmatpush1.msra.mxu0 0.0
        %3618 = vmatprep.subr.mxu0 0.0
        %3619 = vmatpush1.msra.mxu0 0.0
        %3620 = vmatprep.subr.mxu0 0.0
        %3621 = vmatpush1.msra.mxu0 0.0
        %3622 = vmatprep.subr.mxu0 0.0
        %3623 = vmatpush1.msra.mxu0 0.0
        %3624 = vmatprep.subr.mxu0 0.0
        %3625 = vmatpush1.msra.mxu0 0.0
        %3626 = vmatprep.subr.mxu0 0.0
        %3627 = vmatpush1.msra.mxu0 0.0
        %3628 = vmatprep.subr.mxu0 0.0
        %3629 = vmatpush1.msra.mxu0 0.0
        %3630 = vmatprep.subr.mxu0 0.0
        %3631 = vmatpush1.msra.mxu0 0.0
        %3632 = vmatprep.mubr.f32.mxu0 0.0
        %3633 = vmatmul.mubr.f32.gmra.mrb[0].mxu0 %v3470
        %v3634 = vpop.f32.mrb[0].mxu0
        %v3635 = vadd.f32 0.0, %v3634
        %v3636 = vpop.f32.mrb[0].mxu0
        %3637 = vmatprep.mubr.f32.mxu0 0.0
        %3638 = vmatmul.mubr.f32.gmra.mrb[0].mxu0 %v3473
        %v3639 = vpop.f32.mrb[0].mxu0
        %v3640 = vadd.f32 0.0, %v3639
        %v3641 = vpop.f32.mrb[0].mxu0
        %3642 = vmatprep.mubr.f32.mxu0 0.0
        %3643 = vmatmul.mubr.f32.gmra.mrb[0].mxu0 %v3476
        %v3644 = vpop.f32.mrb[0].mxu0
        %v3645 = vadd.f32 0.0, %v3644
        %v3646 = vpop.f32.mrb[0].mxu0
        %3647 = vmatprep.mubr.f32.mxu0 0.0
        %3648 = vmatmul.mubr.f32.gmra.mrb[0].mxu0 %v3479
        %v3649 = vpop.f32.mrb[0].mxu0
        %v3650 = vadd.f32 0.0, %v3649
        %v3651 = vpop.f32.mrb[0].mxu0
        %3652 = vmatprep.mubr.f32.mxu0 0.0
        %3653 = vmatmul.mubr.f32.gmra.mrb[0].mxu0 %v3482
        %v3654 = vpop.f32.mrb[0].mxu0
        %v3655 = vadd.f32 0.0, %v3654
        %v3656 = vpop.f32.mrb[0].mxu0
        %3657 = vmatprep.mubr.f32.mxu0 0.0
        %3658 = vmatmul.mubr.f32.gmra.mrb[0].mxu0 %v3485
        %v3659 = vpop.f32.mrb[0].mxu0
        %v3660 = vadd.f32 0.0, %v3659
        %v3661 = vpop.f32.mrb[0].mxu0
        %3662 = vmatprep.mubr.f32.mxu0 0.0
        %3663 = vmatmul.mubr.f32.gmra.mrb[0].mxu0 %v3488
        %v3664 = vpop.f32.mrb[0].mxu0
        %v3665 = vadd.f32 0.0, %v3664
        %v3666 = vpop.f32.mrb[0].mxu0
        %3667 = vmatprep.mubr.f32.mxu0 0.0
        %3668 = vmatmul.mubr.f32.gmra.mrb[0].mxu0 %v3491
        %v3669 = vpop.f32.mrb[0].mxu0
        %v3670 = vadd.f32 0.0, %v3669
        %v3671 = vpop.f32.mrb[0].mxu0
        %3672 = vmatprep.mubr.f32.mxu0 0.0
        %3673 = vmatmul.mubr.f32.gmra.mrb[0].mxu0 %v3494
        %v3674 = vpop.f32.mrb[0].mxu0
        %v3675 = vadd.f32 0.0, %v3674
        %v3676 = vpop.f32.mrb[0].mxu0
        %3677 = vmatprep.mubr.f32.mxu0 0.0
        %3678 = vmatmul.mubr.f32.gmra.mrb[0].mxu0 %v3497
        %v3679 = vpop.f32.mrb[0].mxu0
        %v3680 = vadd.f32 0.0, %v3679
        %v3681 = vpop.f32.mrb[0].mxu0
        %3682 = vmatprep.mubr.f32.mxu0 0.0
        %3683 = vmatmul.mubr.f32.gmra.mrb[0].mxu0 %v3500
        %v3684 = vpop.f32.mrb[0].mxu0
        %v3685 = vadd.f32 0.0, %v3684
        %v3686 = vpop.f32.mrb[0].mxu0
        %3687 = vmatprep.mubr.f32.mxu0 0.0
        %3688 = vmatmul.mubr.f32.gmra.mrb[0].mxu0 %v3503
        %v3689 = vpop.f32.mrb[0].mxu0
        %v3690 = vadd.f32 0.0, %v3689
        %v3691 = vpop.f32.mrb[0].mxu0
        %3692 = vmatprep.mubr.f32.mxu0 0.0
        %3693 = vmatmul.mubr.f32.gmra.mrb[0].mxu0 %v3506
        %v3694 = vpop.f32.mrb[0].mxu0
        %v3695 = vadd.f32 0.0, %v3694
        %v3696 = vpop.f32.mrb[0].mxu0
        %3697 = vmatprep.mubr.f32.mxu0 0.0
        %3698 = vmatmul.mubr.f32.gmra.mrb[0].mxu0 %v3509
        %v3699 = vpop.f32.mrb[0].mxu0
        %v3700 = vadd.f32 0.0, %v3699
        %v3701 = vpop.f32.mrb[0].mxu0
        %3702 = vmatprep.mubr.f32.mxu0 0.0
        %3703 = vmatmul.mubr.f32.gmra.mrb[0].mxu0 %v3512
        %v3704 = vpop.f32.mrb[0].mxu0
        %v3705 = vadd.f32 0.0, %v3704
        %v3706 = vpop.f32.mrb[0].mxu0
        %3707 = vmatprep.mubr.f32.mxu0 0.0
        %3708 = vmatmul.mubr.f32.gmra.mrb[0].mxu0 %v3515
        %v3709 = vpop.f32.mrb[0].mxu0
        %v3710 = vadd.f32 0.0, %v3709
        %v3711 = vpop.f32.mrb[0].mxu0
        %3712 = vmatprep.mubr.f32.mxu0 0.0
        %3713 = vmatmul.mubr.f32.gmra.mrb[0].mxu0 %v3518
        %v3714 = vpop.f32.mrb[0].mxu0
        %v3715 = vadd.f32 0.0, %v3714
        %v3716 = vpop.f32.mrb[0].mxu0
        %3717 = vmatprep.mubr.f32.mxu0 0.0
        %3718 = vmatmul.mubr.f32.gmra.mrb[0].mxu0 %v3521
        %v3719 = vpop.f32.mrb[0].mxu0
        %v3720 = vadd.f32 0.0, %v3719
        %v3721 = vpop.f32.mrb[0].mxu0
        %3722 = vmatprep.mubr.f32.mxu0 0.0
        %3723 = vmatmul.mubr.f32.gmra.mrb[0].mxu0 %v3524
        %v3724 = vpop.f32.mrb[0].mxu0
        %v3725 = vadd.f32 0.0, %v3724
        %v3726 = vpop.f32.mrb[0].mxu0
        %3727 = vmatprep.mubr.f32.mxu0 0.0
        %3728 = vmatmul.mubr.f32.gmra.mrb[0].mxu0 %v3527
        %v3729 = vpop.f32.mrb[0].mxu0
        %v3730 = vadd.f32 0.0, %v3729
        %v3731 = vpop.f32.mrb[0].mxu0
        %3732 = vmatprep.mubr.f32.mxu0 0.0
        %3733 = vmatmul.mubr.f32.gmra.mrb[0].mxu0 %v3530
        %v3734 = vpop.f32.mrb[0].mxu0
        %v3735 = vadd.f32 0.0, %v3734
        %v3736 = vpop.f32.mrb[0].mxu0
        %3737 = vmatprep.mubr.f32.mxu0 0.0
        %3738 = vmatmul.mubr.f32.gmra.mrb[0].mxu0 %v3533
        %v3739 = vpop.f32.mrb[0].mxu0
        %v3740 = vadd.f32 0.0, %v3739
        %v3741 = vpop.f32.mrb[0].mxu0
        %3742 = vmatprep.mubr.f32.mxu0 0.0
        %3743 = vmatmul.mubr.f32.gmra.mrb[0].mxu0 %v3536
        %v3744 = vpop.f32.mrb[0].mxu0
        %v3745 = vadd.f32 0.0, %v3744
        %v3746 = vpop.f32.mrb[0].mxu0
        %3747 = vmatprep.mubr.f32.mxu0 0.0
        %3748 = vmatmul.mubr.f32.gmra.mrb[0].mxu0 %v3539
        %v3749 = vpop.f32.mrb[0].mxu0
        %v3750 = vadd.f32 0.0, %v3749
        %v3751 = vpop.f32.mrb[0].mxu0
        %3752 = vmatprep.mubr.f32.mxu0 0.0
        %3753 = vmatmul.mubr.f32.gmra.mrb[0].mxu0 %v3542
        %v3754 = vpop.f32.mrb[0].mxu0
        %v3755 = vadd.f32 0.0, %v3754
        %v3756 = vpop.f32.mrb[0].mxu0
        %3757 = vmatprep.mubr.f32.mxu0 0.0
        %3758 = vmatmul.mubr.f32.gmra.mrb[0].mxu0 %v3545
        %v3759 = vpop.f32.mrb[0].mxu0
        %v3760 = vadd.f32 0.0, %v3759
        %v3761 = vpop.f32.mrb[0].mxu0
        %3762 = vmatprep.mubr.f32.mxu0 0.0
        %3763 = vmatmul.mubr.f32.gmra.mrb[0].mxu0 %v3548
        %v3764 = vpop.f32.mrb[0].mxu0
        %v3765 = vadd.f32 0.0, %v3764
        %v3766 = vpop.f32.mrb[0].mxu0
        %3767 = vmatprep.mubr.f32.mxu0 0.0
        %3768 = vmatmul.mubr.f32.gmra.mrb[0].mxu0 %v3551
        %v3769 = vpop.f32.mrb[0].mxu0
        %v3770 = vadd.f32 0.0, %v3769
        %v3771 = vpop.f32.mrb[0].mxu0
        %3772 = vmatprep.mubr.f32.mxu0 0.0
        %3773 = vmatmul.mubr.f32.gmra.mrb[0].mxu0 %v3554
        %v3774 = vpop.f32.mrb[0].mxu0
        %v3775 = vadd.f32 0.0, %v3774
        %v3776 = vpop.f32.mrb[0].mxu0
        %3777 = vmatprep.mubr.f32.mxu0 0.0
        %3778 = vmatmul.mubr.f32.gmra.mrb[0].mxu0 %v3557
        %v3779 = vpop.f32.mrb[0].mxu0
        %v3780 = vadd.f32 0.0, %v3779
        %v3781 = vpop.f32.mrb[0].mxu0
        %3782 = vmatprep.mubr.f32.mxu0 0.0
        %3783 = vmatmul.mubr.f32.gmra.mrb[0].mxu0 %v3560
        %v3784 = vpop.f32.mrb[0].mxu0
        %v3785 = vadd.f32 0.0, %v3784
        %v3786 = vpop.f32.mrb[0].mxu0
        %3787 = vmatprep.mubr.f32.mxu0 0.0
        %3788 = vmatmul.mubr.f32.gmra.mrb[0].mxu0 %v3563
        %v3789 = vpop.f32.mrb[0].mxu0
        %v3790 = vadd.f32 0.0, %v3789
        %v3791 = vpop.f32.mrb[0].mxu0
        %3792 = vdwg.mxu0
        %v3793 = vadd.f32 %v3435, %v3635
        %v3794 = vadd.f32 %v3436, %v3640
        %v3795 = vadd.f32 %v3437, %v3645
        %v3796 = vadd.f32 %v3438, %v3650
        %v3797 = vadd.f32 %v3439, %v3655
        %v3798 = vadd.f32 %v3440, %v3660
        %v3799 = vadd.f32 %v3441, %v3665
        %v3800 = vadd.f32 %v3442, %v3670
        %v3801 = vadd.f32 %v3443, %v3675
        %v3802 = vadd.f32 %v3444, %v3680
        %v3803 = vadd.f32 %v3445, %v3685
        %v3804 = vadd.f32 %v3446, %v3690
        %v3805 = vadd.f32 %v3447, %v3695
        %v3806 = vadd.f32 %v3448, %v3700
        %v3807 = vadd.f32 %v3449, %v3705
        %v3808 = vadd.f32 %v3450, %v3710
        %v3809 = vadd.f32 %v3451, %v3715
        %v3810 = vadd.f32 %v3452, %v3720
        %v3811 = vadd.f32 %v3453, %v3725
        %v3812 = vadd.f32 %v3454, %v3730
        %v3813 = vadd.f32 %v3455, %v3735
        %v3814 = vadd.f32 %v3456, %v3740
        %v3815 = vadd.f32 %v3457, %v3745
        %v3816 = vadd.f32 %v3458, %v3750
        %v3817 = vadd.f32 %v3459, %v3755
        %v3818 = vadd.f32 %v3460, %v3760
        %v3819 = vadd.f32 %v3461, %v3765
        %v3820 = vadd.f32 %v3462, %v3770
        %v3821 = vadd.f32 %v3463, %v3775
        %v3822 = vadd.f32 %v3464, %v3780
        %v3823 = vadd.f32 %v3465, %v3785
        %v3824 = vadd.f32 %v3466, %v3790
        %3825 = vst [vmem:[#allocation2] sm:$0xff] %v3793
        %3826 = vst [vmem:[#allocation2 + $0x8] sm:$0xff] %v3794
        %3827 = vst [vmem:[#allocation2 + $0x10] sm:$0xff] %v3795
        %3828 = vst [vmem:[#allocation2 + $0x18] sm:$0xff] %v3796
        %3829 = vst [vmem:[#allocation2 + $0x20] sm:$0xff] %v3797
        %3830 = vst [vmem:[#allocation2 + $0x28] sm:$0xff] %v3798
        %3831 = vst [vmem:[#allocation2 + $0x30] sm:$0xff] %v3799
        %3832 = vst [vmem:[#allocation2 + $0x38] sm:$0xff] %v3800
        %3833 = vst [vmem:[#allocation2 + $0x40] sm:$0xff] %v3801
        %3834 = vst [vmem:[#allocation2 + $0x48] sm:$0xff] %v3802
        %3835 = vst [vmem:[#allocation2 + $0x50] sm:$0xff] %v3803
        %3836 = vst [vmem:[#allocation2 + $0x58] sm:$0xff] %v3804
        %3837 = vst [vmem:[#allocation2 + $0x60] sm:$0xff] %v3805
        %3838 = vst [vmem:[#allocation2 + $0x68] sm:$0xff] %v3806
        %3839 = vst [vmem:[#allocation2 + $0x70] sm:$0xff] %v3807
        %3840 = vst [vmem:[#allocation2 + $0x78] sm:$0xff] %v3808
        %3841 = vst [vmem:[#allocation2 + $0x80] sm:$0xff] %v3809
        %3842 = vst [vmem:[#allocation2 + $0x88] sm:$0xff] %v3810
        %3843 = vst [vmem:[#allocation2 + $0x90] sm:$0xff] %v3811
        %3844 = vst [vmem:[#allocation2 + $0x98] sm:$0xff] %v3812
        %3845 = vst [vmem:[#allocation2 + $0xa0] sm:$0xff] %v3813
        %3846 = vst [vmem:[#allocation2 + $0xa8] sm:$0xff] %v3814
        %3847 = vst [vmem:[#allocation2 + $0xb0] sm:$0xff] %v3815
        %3848 = vst [vmem:[#allocation2 + $0xb8] sm:$0xff] %v3816
        %3849 = vst [vmem:[#allocation2 + $0xc0] sm:$0xff] %v3817
        %3850 = vst [vmem:[#allocation2 + $0xc8] sm:$0xff] %v3818
        %3851 = vst [vmem:[#allocation2 + $0xd0] sm:$0xff] %v3819
        %3852 = vst [vmem:[#allocation2 + $0xd8] sm:$0xff] %v3820
        %3853 = vst [vmem:[#allocation2 + $0xe0] sm:$0xff] %v3821
        %3854 = vst [vmem:[#allocation2 + $0xe8] sm:$0xff] %v3822
        %3855 = vst [vmem:[#allocation2 + $0xf0] sm:$0xff] %v3823
        %3856 = vst [vmem:[#allocation2 + $0xf8] sm:$0xff] %v3824
        %v3857 = vld [vmem:[%s2948 + $0x2] sm:$0xff]
        %v3858 = vld [vmem:[%s2948 + $0xa] sm:$0xff]
        %v3859 = vld [vmem:[%s2948 + $0x1a] sm:$0xff]
        %v3860 = vld [vmem:[%s2948 + $0x22] sm:$0xff]
        %v3861 = vld [vmem:[%s2948 + $0x32] sm:$0xff]
        %v3862 = vld [vmem:[%s2948 + $0x3a] sm:$0xff]
        %v3863 = vld [vmem:[%s2948 + $0x4a] sm:$0xff]
        %v3864 = vld [vmem:[%s2948 + $0x52] sm:$0xff]
        %v3865 = vld [vmem:[%s2948 + $0x62] sm:$0xff]
        %v3866 = vld [vmem:[%s2948 + $0x6a] sm:$0xff]
        %v3867 = vld [vmem:[%s2948 + $0x7a] sm:$0xff]
        %v3868 = vld [vmem:[%s2948 + $0x82] sm:$0xff]
        %v3869 = vld [vmem:[%s2948 + $0x92] sm:$0xff]
        %v3870 = vld [vmem:[%s2948 + $0x9a] sm:$0xff]
        %v3871 = vld [vmem:[%s2948 + $0xaa] sm:$0xff]
        %v3872 = vld [vmem:[%s2948 + $0xb2] sm:$0xff]
        %v3873 = vld [vmem:[%s2948 + $0xc2] sm:$0xff]
        %v3874 = vld [vmem:[%s2948 + $0xca] sm:$0xff]
        %v3875 = vld [vmem:[%s2948 + $0xda] sm:$0xff]
        %v3876 = vld [vmem:[%s2948 + $0xe2] sm:$0xff]
        %v3877 = vld [vmem:[%s2948 + $0xf2] sm:$0xff]
        %v3878 = vld [vmem:[%s2948 + $0xfa] sm:$0xff]
        %v3879 = vld [vmem:[%s2948 + $0x10a] sm:$0xff]
        %v3880 = vld [vmem:[%s2948 + $0x112] sm:$0xff]
        %v3881 = vld [vmem:[%s2948 + $0x122] sm:$0xff]
        %v3882 = vld [vmem:[%s2948 + $0x12a] sm:$0xff]
        %v3883 = vld [vmem:[%s2948 + $0x13a] sm:$0xff]
        %v3884 = vld [vmem:[%s2948 + $0x142] sm:$0xff]
        %v3885 = vld [vmem:[%s2948 + $0x152] sm:$0xff]
        %v3886 = vld [vmem:[%s2948 + $0x15a] sm:$0xff]
        %v3887 = vld [vmem:[%s2948 + $0x16a] sm:$0xff]
        %v3888 = vld [vmem:[%s2948 + $0x172] sm:$0xff]
        %v3889 = vld [vmem:[#allocation2] sm:$0xff]
        %v3890 = vld [vmem:[#allocation2 + $0x8] sm:$0xff]
        %v3891 = vld [vmem:[#allocation2 + $0x10] sm:$0xff]
        %v3892 = vld [vmem:[#allocation2 + $0x18] sm:$0xff]
        %v3893 = vld [vmem:[#allocation2 + $0x20] sm:$0xff]
        %v3894 = vld [vmem:[#allocation2 + $0x28] sm:$0xff]
        %v3895 = vld [vmem:[#allocation2 + $0x30] sm:$0xff]
        %v3896 = vld [vmem:[#allocation2 + $0x38] sm:$0xff]
        %v3897 = vld [vmem:[#allocation2 + $0x40] sm:$0xff]
        %v3898 = vld [vmem:[#allocation2 + $0x48] sm:$0xff]
        %v3899 = vld [vmem:[#allocation2 + $0x50] sm:$0xff]
        %v3900 = vld [vmem:[#allocation2 + $0x58] sm:$0xff]
        %v3901 = vld [vmem:[#allocation2 + $0x60] sm:$0xff]
        %v3902 = vld [vmem:[#allocation2 + $0x68] sm:$0xff]
        %v3903 = vld [vmem:[#allocation2 + $0x70] sm:$0xff]
        %v3904 = vld [vmem:[#allocation2 + $0x78] sm:$0xff]
        %v3905 = vld [vmem:[#allocation2 + $0x80] sm:$0xff]
        %v3906 = vld [vmem:[#allocation2 + $0x88] sm:$0xff]
        %v3907 = vld [vmem:[#allocation2 + $0x90] sm:$0xff]
        %v3908 = vld [vmem:[#allocation2 + $0x98] sm:$0xff]
        %v3909 = vld [vmem:[#allocation2 + $0xa0] sm:$0xff]
        %v3910 = vld [vmem:[#allocation2 + $0xa8] sm:$0xff]
        %v3911 = vld [vmem:[#allocation2 + $0xb0] sm:$0xff]
        %v3912 = vld [vmem:[#allocation2 + $0xb8] sm:$0xff]
        %v3913 = vld [vmem:[#allocation2 + $0xc0] sm:$0xff]
        %v3914 = vld [vmem:[#allocation2 + $0xc8] sm:$0xff]
        %v3915 = vld [vmem:[#allocation2 + $0xd0] sm:$0xff]
        %v3916 = vld [vmem:[#allocation2 + $0xd8] sm:$0xff]
        %v3917 = vld [vmem:[#allocation2 + $0xe0] sm:$0xff]
        %v3918 = vld [vmem:[#allocation2 + $0xe8] sm:$0xff]
        %v3919 = vld [vmem:[#allocation2 + $0xf0] sm:$0xff]
        %v3920 = vld [vmem:[#allocation2 + $0xf8] sm:$0xff]
        %s3921 = scalar_lea.vmem %s181, 32
        %v3922 = vld [vmem:[%s3921] sm:$0xf]
        %v3924 = vsel %vm283, %v3857, 0
        %v3927 = vsel %vm283, %v3858, 0
        %v3930 = vsel %vm283, %v3859, 0
        %v3933 = vsel %vm283, %v3860, 0
        %v3936 = vsel %vm283, %v3861, 0
        %v3939 = vsel %vm283, %v3862, 0
        %v3942 = vsel %vm283, %v3863, 0
        %v3945 = vsel %vm283, %v3864, 0
        %v3948 = vsel %vm283, %v3865, 0
        %v3951 = vsel %vm283, %v3866, 0
        %v3954 = vsel %vm283, %v3867, 0
        %v3957 = vsel %vm283, %v3868, 0
        %v3960 = vsel %vm283, %v3869, 0
        %v3963 = vsel %vm283, %v3870, 0
        %v3966 = vsel %vm283, %v3871, 0
        %v3969 = vsel %vm283, %v3872, 0
        %v3972 = vsel %vm283, %v3873, 0
        %v3975 = vsel %vm283, %v3874, 0
        %v3978 = vsel %vm283, %v3875, 0
        %v3981 = vsel %vm283, %v3876, 0
        %v3984 = vsel %vm283, %v3877, 0
        %v3987 = vsel %vm283, %v3878, 0
        %v3990 = vsel %vm283, %v3879, 0
        %v3993 = vsel %vm283, %v3880, 0
        %v3996 = vsel %vm283, %v3881, 0
        %v3999 = vsel %vm283, %v3882, 0
        %v4002 = vsel %vm283, %v3883, 0
        %v4005 = vsel %vm283, %v3884, 0
        %v4008 = vsel %vm283, %v3885, 0
        %v4011 = vsel %vm283, %v3886, 0
        %v4014 = vsel %vm283, %v3887, 0
        %v4017 = vsel %vm283, %v3888, 0
        %v4020 = vsel %vm380, %v3922, 0
        %4022 = vmatprep.subr.mxu0 0.0
        %4023 = vmatpush1.msra.mxu0 %v4020
        %4024 = vmatprep.subr.mxu0 0.0
        %4025 = vmatpush1.msra.mxu0 0.0
        %4026 = vmatprep.subr.mxu0 0.0
        %4027 = vmatpush1.msra.mxu0 0.0
        %4028 = vmatprep.subr.mxu0 0.0
        %4029 = vmatpush1.msra.mxu0 0.0
        %4030 = vmatprep.subr.mxu0 0.0
        %4031 = vmatpush1.msra.mxu0 0.0
        %4032 = vmatprep.subr.mxu0 0.0
        %4033 = vmatpush1.msra.mxu0 0.0
        %4034 = vmatprep.subr.mxu0 0.0
        %4035 = vmatpush1.msra.mxu0 0.0
        %4036 = vmatprep.subr.mxu0 0.0
        %4037 = vmatpush1.msra.mxu0 0.0
        %4038 = vmatprep.subr.mxu0 0.0
        %4039 = vmatpush1.msra.mxu0 0.0
        %4040 = vmatprep.subr.mxu0 0.0
        %4041 = vmatpush1.msra.mxu0 0.0
        %4042 = vmatprep.subr.mxu0 0.0
        %4043 = vmatpush1.msra.mxu0 0.0
        %4044 = vmatprep.subr.mxu0 0.0
        %4045 = vmatpush1.msra.mxu0 0.0
        %4046 = vmatprep.subr.mxu0 0.0
        %4047 = vmatpush1.msra.mxu0 0.0
        %4048 = vmatprep.subr.mxu0 0.0
        %4049 = vmatpush1.msra.mxu0 0.0
        %4050 = vmatprep.subr.mxu0 0.0
        %4051 = vmatpush1.msra.mxu0 0.0
        %4052 = vmatprep.subr.mxu0 0.0
        %4053 = vmatpush1.msra.mxu0 0.0
        %4054 = vmatprep.subr.mxu0 0.0
        %4055 = vmatpush1.msra.mxu0 0.0
        %4056 = vmatprep.subr.mxu0 0.0
        %4057 = vmatpush1.msra.mxu0 0.0
        %4058 = vmatprep.subr.mxu0 0.0
        %4059 = vmatpush1.msra.mxu0 0.0
        %4060 = vmatprep.subr.mxu0 0.0
        %4061 = vmatpush1.msra.mxu0 0.0
        %4062 = vmatprep.subr.mxu0 0.0
        %4063 = vmatpush1.msra.mxu0 0.0
        %4064 = vmatprep.subr.mxu0 0.0
        %4065 = vmatpush1.msra.mxu0 0.0
        %4066 = vmatprep.subr.mxu0 0.0
        %4067 = vmatpush1.msra.mxu0 0.0
        %4068 = vmatprep.subr.mxu0 0.0
        %4069 = vmatpush1.msra.mxu0 0.0
        %4070 = vmatprep.subr.mxu0 0.0
        %4071 = vmatpush1.msra.mxu0 0.0
        %4072 = vmatprep.subr.mxu0 0.0
        %4073 = vmatpush1.msra.mxu0 0.0
        %4074 = vmatprep.subr.mxu0 0.0
        %4075 = vmatpush1.msra.mxu0 0.0
        %4076 = vmatprep.subr.mxu0 0.0
        %4077 = vmatpush1.msra.mxu0 0.0
        %4078 = vmatprep.subr.mxu0 0.0
        %4079 = vmatpush1.msra.mxu0 0.0
        %4080 = vmatprep.subr.mxu0 0.0
        %4081 = vmatpush1.msra.mxu0 0.0
        %4082 = vmatprep.subr.mxu0 0.0
        %4083 = vmatpush1.msra.mxu0 0.0
        %4084 = vmatprep.subr.mxu0 0.0
        %4085 = vmatpush1.msra.mxu0 0.0
        %4086 = vmatprep.mubr.f32.mxu0 0.0
        %4087 = vmatmul.mubr.f32.gmra.mrb[0].mxu0 %v3924
        %v4088 = vpop.f32.mrb[0].mxu0
        %v4089 = vadd.f32 0.0, %v4088
        %v4090 = vpop.f32.mrb[0].mxu0
        %4091 = vmatprep.mubr.f32.mxu0 0.0
        %4092 = vmatmul.mubr.f32.gmra.mrb[0].mxu0 %v3927
        %v4093 = vpop.f32.mrb[0].mxu0
        %v4094 = vadd.f32 0.0, %v4093
        %v4095 = vpop.f32.mrb[0].mxu0
        %4096 = vmatprep.mubr.f32.mxu0 0.0
        %4097 = vmatmul.mubr.f32.gmra.mrb[0].mxu0 %v3930
        %v4098 = vpop.f32.mrb[0].mxu0
        %v4099 = vadd.f32 0.0, %v4098
        %v4100 = vpop.f32.mrb[0].mxu0
        %4101 = vmatprep.mubr.f32.mxu0 0.0
        %4102 = vmatmul.mubr.f32.gmra.mrb[0].mxu0 %v3933
        %v4103 = vpop.f32.mrb[0].mxu0
        %v4104 = vadd.f32 0.0, %v4103
        %v4105 = vpop.f32.mrb[0].mxu0
        %4106 = vmatprep.mubr.f32.mxu0 0.0
        %4107 = vmatmul.mubr.f32.gmra.mrb[0].mxu0 %v3936
        %v4108 = vpop.f32.mrb[0].mxu0
        %v4109 = vadd.f32 0.0, %v4108
        %v4110 = vpop.f32.mrb[0].mxu0
        %4111 = vmatprep.mubr.f32.mxu0 0.0
        %4112 = vmatmul.mubr.f32.gmra.mrb[0].mxu0 %v3939
        %v4113 = vpop.f32.mrb[0].mxu0
        %v4114 = vadd.f32 0.0, %v4113
        %v4115 = vpop.f32.mrb[0].mxu0
        %4116 = vmatprep.mubr.f32.mxu0 0.0
        %4117 = vmatmul.mubr.f32.gmra.mrb[0].mxu0 %v3942
        %v4118 = vpop.f32.mrb[0].mxu0
        %v4119 = vadd.f32 0.0, %v4118
        %v4120 = vpop.f32.mrb[0].mxu0
        %4121 = vmatprep.mubr.f32.mxu0 0.0
        %4122 = vmatmul.mubr.f32.gmra.mrb[0].mxu0 %v3945
        %v4123 = vpop.f32.mrb[0].mxu0
        %v4124 = vadd.f32 0.0, %v4123
        %v4125 = vpop.f32.mrb[0].mxu0
        %4126 = vmatprep.mubr.f32.mxu0 0.0
        %4127 = vmatmul.mubr.f32.gmra.mrb[0].mxu0 %v3948
        %v4128 = vpop.f32.mrb[0].mxu0
        %v4129 = vadd.f32 0.0, %v4128
        %v4130 = vpop.f32.mrb[0].mxu0
        %4131 = vmatprep.mubr.f32.mxu0 0.0
        %4132 = vmatmul.mubr.f32.gmra.mrb[0].mxu0 %v3951
        %v4133 = vpop.f32.mrb[0].mxu0
        %v4134 = vadd.f32 0.0, %v4133
        %v4135 = vpop.f32.mrb[0].mxu0
        %4136 = vmatprep.mubr.f32.mxu0 0.0
        %4137 = vmatmul.mubr.f32.gmra.mrb[0].mxu0 %v3954
        %v4138 = vpop.f32.mrb[0].mxu0
        %v4139 = vadd.f32 0.0, %v4138
        %v4140 = vpop.f32.mrb[0].mxu0
        %4141 = vmatprep.mubr.f32.mxu0 0.0
        %4142 = vmatmul.mubr.f32.gmra.mrb[0].mxu0 %v3957
        %v4143 = vpop.f32.mrb[0].mxu0
        %v4144 = vadd.f32 0.0, %v4143
        %v4145 = vpop.f32.mrb[0].mxu0
        %4146 = vmatprep.mubr.f32.mxu0 0.0
        %4147 = vmatmul.mubr.f32.gmra.mrb[0].mxu0 %v3960
        %v4148 = vpop.f32.mrb[0].mxu0
        %v4149 = vadd.f32 0.0, %v4148
        %v4150 = vpop.f32.mrb[0].mxu0
        %4151 = vmatprep.mubr.f32.mxu0 0.0
        %4152 = vmatmul.mubr.f32.gmra.mrb[0].mxu0 %v3963
        %v4153 = vpop.f32.mrb[0].mxu0
        %v4154 = vadd.f32 0.0, %v4153
        %v4155 = vpop.f32.mrb[0].mxu0
        %4156 = vmatprep.mubr.f32.mxu0 0.0
        %4157 = vmatmul.mubr.f32.gmra.mrb[0].mxu0 %v3966
        %v4158 = vpop.f32.mrb[0].mxu0
        %v4159 = vadd.f32 0.0, %v4158
        %v4160 = vpop.f32.mrb[0].mxu0
        %4161 = vmatprep.mubr.f32.mxu0 0.0
        %4162 = vmatmul.mubr.f32.gmra.mrb[0].mxu0 %v3969
        %v4163 = vpop.f32.mrb[0].mxu0
        %v4164 = vadd.f32 0.0, %v4163
        %v4165 = vpop.f32.mrb[0].mxu0
        %4166 = vmatprep.mubr.f32.mxu0 0.0
        %4167 = vmatmul.mubr.f32.gmra.mrb[0].mxu0 %v3972
        %v4168 = vpop.f32.mrb[0].mxu0
        %v4169 = vadd.f32 0.0, %v4168
        %v4170 = vpop.f32.mrb[0].mxu0
        %4171 = vmatprep.mubr.f32.mxu0 0.0
        %4172 = vmatmul.mubr.f32.gmra.mrb[0].mxu0 %v3975
        %v4173 = vpop.f32.mrb[0].mxu0
        %v4174 = vadd.f32 0.0, %v4173
        %v4175 = vpop.f32.mrb[0].mxu0
        %4176 = vmatprep.mubr.f32.mxu0 0.0
        %4177 = vmatmul.mubr.f32.gmra.mrb[0].mxu0 %v3978
        %v4178 = vpop.f32.mrb[0].mxu0
        %v4179 = vadd.f32 0.0, %v4178
        %v4180 = vpop.f32.mrb[0].mxu0
        %4181 = vmatprep.mubr.f32.mxu0 0.0
        %4182 = vmatmul.mubr.f32.gmra.mrb[0].mxu0 %v3981
        %v4183 = vpop.f32.mrb[0].mxu0
        %v4184 = vadd.f32 0.0, %v4183
        %v4185 = vpop.f32.mrb[0].mxu0
        %4186 = vmatprep.mubr.f32.mxu0 0.0
        %4187 = vmatmul.mubr.f32.gmra.mrb[0].mxu0 %v3984
        %v4188 = vpop.f32.mrb[0].mxu0
        %v4189 = vadd.f32 0.0, %v4188
        %v4190 = vpop.f32.mrb[0].mxu0
        %4191 = vmatprep.mubr.f32.mxu0 0.0
        %4192 = vmatmul.mubr.f32.gmra.mrb[0].mxu0 %v3987
        %v4193 = vpop.f32.mrb[0].mxu0
        %v4194 = vadd.f32 0.0, %v4193
        %v4195 = vpop.f32.mrb[0].mxu0
        %4196 = vmatprep.mubr.f32.mxu0 0.0
        %4197 = vmatmul.mubr.f32.gmra.mrb[0].mxu0 %v3990
        %v4198 = vpop.f32.mrb[0].mxu0
        %v4199 = vadd.f32 0.0, %v4198
        %v4200 = vpop.f32.mrb[0].mxu0
        %4201 = vmatprep.mubr.f32.mxu0 0.0
        %4202 = vmatmul.mubr.f32.gmra.mrb[0].mxu0 %v3993
        %v4203 = vpop.f32.mrb[0].mxu0
        %v4204 = vadd.f32 0.0, %v4203
        %v4205 = vpop.f32.mrb[0].mxu0
        %4206 = vmatprep.mubr.f32.mxu0 0.0
        %4207 = vmatmul.mubr.f32.gmra.mrb[0].mxu0 %v3996
        %v4208 = vpop.f32.mrb[0].mxu0
        %v4209 = vadd.f32 0.0, %v4208
        %v4210 = vpop.f32.mrb[0].mxu0
        %4211 = vmatprep.mubr.f32.mxu0 0.0
        %4212 = vmatmul.mubr.f32.gmra.mrb[0].mxu0 %v3999
        %v4213 = vpop.f32.mrb[0].mxu0
        %v4214 = vadd.f32 0.0, %v4213
        %v4215 = vpop.f32.mrb[0].mxu0
        %4216 = vmatprep.mubr.f32.mxu0 0.0
        %4217 = vmatmul.mubr.f32.gmra.mrb[0].mxu0 %v4002
        %v4218 = vpop.f32.mrb[0].mxu0
        %v4219 = vadd.f32 0.0, %v4218
        %v4220 = vpop.f32.mrb[0].mxu0
        %4221 = vmatprep.mubr.f32.mxu0 0.0
        %4222 = vmatmul.mubr.f32.gmra.mrb[0].mxu0 %v4005
        %v4223 = vpop.f32.mrb[0].mxu0
        %v4224 = vadd.f32 0.0, %v4223
        %v4225 = vpop.f32.mrb[0].mxu0
        %4226 = vmatprep.mubr.f32.mxu0 0.0
        %4227 = vmatmul.mubr.f32.gmra.mrb[0].mxu0 %v4008
        %v4228 = vpop.f32.mrb[0].mxu0
        %v4229 = vadd.f32 0.0, %v4228
        %v4230 = vpop.f32.mrb[0].mxu0
        %4231 = vmatprep.mubr.f32.mxu0 0.0
        %4232 = vmatmul.mubr.f32.gmra.mrb[0].mxu0 %v4011
        %v4233 = vpop.f32.mrb[0].mxu0
        %v4234 = vadd.f32 0.0, %v4233
        %v4235 = vpop.f32.mrb[0].mxu0
        %4236 = vmatprep.mubr.f32.mxu0 0.0
        %4237 = vmatmul.mubr.f32.gmra.mrb[0].mxu0 %v4014
        %v4238 = vpop.f32.mrb[0].mxu0
        %v4239 = vadd.f32 0.0, %v4238
        %v4240 = vpop.f32.mrb[0].mxu0
        %4241 = vmatprep.mubr.f32.mxu0 0.0
        %4242 = vmatmul.mubr.f32.gmra.mrb[0].mxu0 %v4017
        %v4243 = vpop.f32.mrb[0].mxu0
        %v4244 = vadd.f32 0.0, %v4243
        %v4245 = vpop.f32.mrb[0].mxu0
        %4246 = vdwg.mxu0
        %v4247 = vadd.f32 %v3889, %v4089
        %v4248 = vadd.f32 %v3890, %v4094
        %v4249 = vadd.f32 %v3891, %v4099
        %v4250 = vadd.f32 %v3892, %v4104
        %v4251 = vadd.f32 %v3893, %v4109
        %v4252 = vadd.f32 %v3894, %v4114
        %v4253 = vadd.f32 %v3895, %v4119
        %v4254 = vadd.f32 %v3896, %v4124
        %v4255 = vadd.f32 %v3897, %v4129
        %v4256 = vadd.f32 %v3898, %v4134
        %v4257 = vadd.f32 %v3899, %v4139
        %v4258 = vadd.f32 %v3900, %v4144
        %v4259 = vadd.f32 %v3901, %v4149
        %v4260 = vadd.f32 %v3902, %v4154
        %v4261 = vadd.f32 %v3903, %v4159
        %v4262 = vadd.f32 %v3904, %v4164
        %v4263 = vadd.f32 %v3905, %v4169
        %v4264 = vadd.f32 %v3906, %v4174
        %v4265 = vadd.f32 %v3907, %v4179
        %v4266 = vadd.f32 %v3908, %v4184
        %v4267 = vadd.f32 %v3909, %v4189
        %v4268 = vadd.f32 %v3910, %v4194
        %v4269 = vadd.f32 %v3911, %v4199
        %v4270 = vadd.f32 %v3912, %v4204
        %v4271 = vadd.f32 %v3913, %v4209
        %v4272 = vadd.f32 %v3914, %v4214
        %v4273 = vadd.f32 %v3915, %v4219
        %v4274 = vadd.f32 %v3916, %v4224
        %v4275 = vadd.f32 %v3917, %v4229
        %v4276 = vadd.f32 %v3918, %v4234
        %v4277 = vadd.f32 %v3919, %v4239
        %v4278 = vadd.f32 %v3920, %v4244
        %4279 = vst [vmem:[#allocation2] sm:$0xff] %v4247
        %4280 = vst [vmem:[#allocation2 + $0x8] sm:$0xff] %v4248
        %4281 = vst [vmem:[#allocation2 + $0x10] sm:$0xff] %v4249
        %4282 = vst [vmem:[#allocation2 + $0x18] sm:$0xff] %v4250
        %4283 = vst [vmem:[#allocation2 + $0x20] sm:$0xff] %v4251
        %4284 = vst [vmem:[#allocation2 + $0x28] sm:$0xff] %v4252
        %4285 = vst [vmem:[#allocation2 + $0x30] sm:$0xff] %v4253
        %4286 = vst [vmem:[#allocation2 + $0x38] sm:$0xff] %v4254
        %4287 = vst [vmem:[#allocation2 + $0x40] sm:$0xff] %v4255
        %4288 = vst [vmem:[#allocation2 + $0x48] sm:$0xff] %v4256
        %4289 = vst [vmem:[#allocation2 + $0x50] sm:$0xff] %v4257
        %4290 = vst [vmem:[#allocation2 + $0x58] sm:$0xff] %v4258
        %4291 = vst [vmem:[#allocation2 + $0x60] sm:$0xff] %v4259
        %4292 = vst [vmem:[#allocation2 + $0x68] sm:$0xff] %v4260
        %4293 = vst [vmem:[#allocation2 + $0x70] sm:$0xff] %v4261
        %4294 = vst [vmem:[#allocation2 + $0x78] sm:$0xff] %v4262
        %4295 = vst [vmem:[#allocation2 + $0x80] sm:$0xff] %v4263
        %4296 = vst [vmem:[#allocation2 + $0x88] sm:$0xff] %v4264
        %4297 = vst [vmem:[#allocation2 + $0x90] sm:$0xff] %v4265
        %4298 = vst [vmem:[#allocation2 + $0x98] sm:$0xff] %v4266
        %4299 = vst [vmem:[#allocation2 + $0xa0] sm:$0xff] %v4267
        %4300 = vst [vmem:[#allocation2 + $0xa8] sm:$0xff] %v4268
        %4301 = vst [vmem:[#allocation2 + $0xb0] sm:$0xff] %v4269
        %4302 = vst [vmem:[#allocation2 + $0xb8] sm:$0xff] %v4270
        %4303 = vst [vmem:[#allocation2 + $0xc0] sm:$0xff] %v4271
        %4304 = vst [vmem:[#allocation2 + $0xc8] sm:$0xff] %v4272
        %4305 = vst [vmem:[#allocation2 + $0xd0] sm:$0xff] %v4273
        %4306 = vst [vmem:[#allocation2 + $0xd8] sm:$0xff] %v4274
        %4307 = vst [vmem:[#allocation2 + $0xe0] sm:$0xff] %v4275
        %4308 = vst [vmem:[#allocation2 + $0xe8] sm:$0xff] %v4276
        %4309 = vst [vmem:[#allocation2 + $0xf0] sm:$0xff] %v4277
        %4310 = vst [vmem:[#allocation2 + $0xf8] sm:$0xff] %v4278
        %v4311 = vld [vmem:[#allocation2] sm:$0xff]
        %v4312 = vld [vmem:[#allocation2 + $0x8] sm:$0xff]
        %v4313 = vld [vmem:[#allocation2 + $0x10] sm:$0xff]
        %v4314 = vld [vmem:[#allocation2 + $0x18] sm:$0xff]
        %v4315 = vld [vmem:[#allocation2 + $0x20] sm:$0xff]
        %v4316 = vld [vmem:[#allocation2 + $0x28] sm:$0xff]
        %v4317 = vld [vmem:[#allocation2 + $0x30] sm:$0xff]
        %v4318 = vld [vmem:[#allocation2 + $0x38] sm:$0xff]
        %v4319 = vld [vmem:[#allocation2 + $0x40] sm:$0xff]
        %v4320 = vld [vmem:[#allocation2 + $0x48] sm:$0xff]
        %v4321 = vld [vmem:[#allocation2 + $0x50] sm:$0xff]
        %v4322 = vld [vmem:[#allocation2 + $0x58] sm:$0xff]
        %v4323 = vld [vmem:[#allocation2 + $0x60] sm:$0xff]
        %v4324 = vld [vmem:[#allocation2 + $0x68] sm:$0xff]
        %v4325 = vld [vmem:[#allocation2 + $0x70] sm:$0xff]
        %v4326 = vld [vmem:[#allocation2 + $0x78] sm:$0xff]
        %v4327 = vld [vmem:[#allocation2 + $0x80] sm:$0xff]
        %v4328 = vld [vmem:[#allocation2 + $0x88] sm:$0xff]
        %v4329 = vld [vmem:[#allocation2 + $0x90] sm:$0xff]
        %v4330 = vld [vmem:[#allocation2 + $0x98] sm:$0xff]
        %v4331 = vld [vmem:[#allocation2 + $0xa0] sm:$0xff]
        %v4332 = vld [vmem:[#allocation2 + $0xa8] sm:$0xff]
        %v4333 = vld [vmem:[#allocation2 + $0xb0] sm:$0xff]
        %v4334 = vld [vmem:[#allocation2 + $0xb8] sm:$0xff]
        %v4335 = vld [vmem:[#allocation2 + $0xc0] sm:$0xff]
        %v4336 = vld [vmem:[#allocation2 + $0xc8] sm:$0xff]
        %v4337 = vld [vmem:[#allocation2 + $0xd0] sm:$0xff]
        %v4338 = vld [vmem:[#allocation2 + $0xd8] sm:$0xff]
        %v4339 = vld [vmem:[#allocation2 + $0xe0] sm:$0xff]
        %v4340 = vld [vmem:[#allocation2 + $0xe8] sm:$0xff]
        %v4341 = vld [vmem:[#allocation2 + $0xf0] sm:$0xff]
        %v4342 = vld [vmem:[#allocation2 + $0xf8] sm:$0xff]
        %4343 = vst [vmem:[%s172] sm:$0xff] %v4311
        %4344 = vst [vmem:[%s172 + $0x8] sm:$0xff] %v4312
        %4345 = vst [vmem:[%s172 + $0x10] sm:$0xff] %v4313
        %4346 = vst [vmem:[%s172 + $0x18] sm:$0xff] %v4314
        %4347 = vst [vmem:[%s172 + $0x20] sm:$0xff] %v4315
        %4348 = vst [vmem:[%s172 + $0x28] sm:$0xff] %v4316
        %4349 = vst [vmem:[%s172 + $0x30] sm:$0xff] %v4317
        %4350 = vst [vmem:[%s172 + $0x38] sm:$0xff] %v4318
        %4351 = vst [vmem:[%s172 + $0x40] sm:$0xff] %v4319
        %4352 = vst [vmem:[%s172 + $0x48] sm:$0xff] %v4320
        %4353 = vst [vmem:[%s172 + $0x50] sm:$0xff] %v4321
        %4354 = vst [vmem:[%s172 + $0x58] sm:$0xff] %v4322
        %4355 = vst [vmem:[%s172 + $0x60] sm:$0xff] %v4323
        %4356 = vst [vmem:[%s172 + $0x68] sm:$0xff] %v4324
        %4357 = vst [vmem:[%s172 + $0x70] sm:$0xff] %v4325
        %4358 = vst [vmem:[%s172 + $0x78] sm:$0xff] %v4326
        %4359 = vst [vmem:[%s172 + $0x80] sm:$0xff] %v4327
        %4360 = vst [vmem:[%s172 + $0x88] sm:$0xff] %v4328
        %4361 = vst [vmem:[%s172 + $0x90] sm:$0xff] %v4329
        %4362 = vst [vmem:[%s172 + $0x98] sm:$0xff] %v4330
        %4363 = vst [vmem:[%s172 + $0xa0] sm:$0xff] %v4331
        %4364 = vst [vmem:[%s172 + $0xa8] sm:$0xff] %v4332
        %4365 = vst [vmem:[%s172 + $0xb0] sm:$0xff] %v4333
        %4366 = vst [vmem:[%s172 + $0xb8] sm:$0xff] %v4334
        %4367 = vst [vmem:[%s172 + $0xc0] sm:$0xff] %v4335
        %4368 = vst [vmem:[%s172 + $0xc8] sm:$0xff] %v4336
        %4369 = vst [vmem:[%s172 + $0xd0] sm:$0xff] %v4337
        %4370 = vst [vmem:[%s172 + $0xd8] sm:$0xff] %v4338
        %4371 = vst [vmem:[%s172 + $0xe0] sm:$0xff] %v4339
        %4372 = vst [vmem:[%s172 + $0xe8] sm:$0xff] %v4340
        %4373 = vst [vmem:[%s172 + $0xf0] sm:$0xff] %v4341
        %4374 = vst [vmem:[%s172 + $0xf8] sm:$0xff] %v4342
        %s4375 = sand.u32 %s99, 1
        %s4376 = scalar_lea.sflag [#allocation4], %s4375
        %s4377 = sand.u32 %s99, 1
        %s4378 = smul.addr %s4377, 256
        %s4379 = scalar_lea.vmem [#allocation3], %s4378
        // Predicated region
        $region29: #{tpu_custom_call.1} parent=27 // pred_check
          %p4380 = pneg %p109
        $region30: #{tpu_custom_call.1} parent=27 // pred_check_branch
          %4382 = sbr.rel (%p4380) target = $region32
        $region31: #{tpu_custom_call.1} parent=27 // pred_region
          %s4383 = smul.u32 16, %s22
          %s4385 = ssub.s32 4096, 4096
          %4386 = vsyncadd %s4376, %s4385
          %s4387 = smul.addr %s4383, 2
          %s4388 = sadd.s32 %s23, %s4387
          %s4389 = smul.addr %s21, 32
          %s4390 = sadd.s32 %s4388, %s4389
          %s4391 = smul.addr %s4390, 128
          %s4392 = scalar_lea.hbm %s2, %s4391
          %s4393 = sshll.u32 %s4379, 4
          %s4394 = int_to_ptr.vmem [resolvable:$true] %s4393
          %4399 = dma.vmem_to_hbm [thread:$0]  %s4394, 4096, %s4392, %s4376, 128, 128, 8
        $region32: #{tpu_custom_call.1} parent=27 // pred_fallthru
          _
      $region28: #{tpu_custom_call.1} parent=5 // pred_fallthru
        _
      %p4400 = scmp.le.s32.totalorder 2, %s11
      // Predicated region
      $region33: #{tpu_custom_call.1} parent=5 // pred_check
        %p4401 = pneg %p4400
      $region34: #{tpu_custom_call.1} parent=5 // pred_check_branch
        %4403 = sbr.rel (%p4401) target = $region36
      $region35: #{tpu_custom_call.1} parent=5 // pred_region
        %s4404 = ssub.s32 %s11, 2
        // Predicated region
        $region37: #{tpu_custom_call.1} parent=35 // pred_check
          %p4405 = pneg %p115
        $region38: #{tpu_custom_call.1} parent=35 // pred_check_branch
          %4407 = sbr.rel (%p4405) target = $region40
        $region39: #{tpu_custom_call.1} parent=35 // pred_region
          %s4408 = sand.u32 %s100, 1
          %s4409 = scalar_lea.sflag [#allocation4], %s4408
          %s4410 = sand.u32 %s100, 1
          %s4411 = smul.addr %s4410, 256
          %s4412 = scalar_lea.vmem [#allocation3], %s4411
          %4413 = dma.done %s4409, 4096
        $region40: #{tpu_custom_call.1} parent=35 // pred_fallthru
          _
      $region36: #{tpu_custom_call.1} parent=5 // pred_fallthru
        _
    $region6: #{tpu_custom_call.1} parent=1 // loop_footer
      %s15 = sadd.s32 1, %s11
    $region7: #{tpu_custom_call.1} parent=1 // loop_footer_branch
      %10 = sbr.rel target = $region3
    $region8: #{tpu_custom_call.1} parent=1 // loop_exit
      _
    %4414 = vsyncpa [#allocation4], 1
    %s4415 = scalar_lea.sflag [#allocation4], 1
    %4416 = vsyncpa %s4415, 1

</llo_original>
